<compile_context>
chip_gen: v7x
topology: tpu7x:2x2x1
jax: 0.10.0
libtpu: 0.0.40
codegen_flags: <defaults>
</compile_context>

<pallas_src>
import math
from functools import partial

import jax
import jax.numpy as jnp
from jax import lax
from jax.experimental import pallas as pl
from jax.experimental.pallas import tpu as pltpu

BN_EPS = 1e-5
LRELU_SLOPE = 0.1


# --------------------------------------------------------------------------
# Tiling helpers
# --------------------------------------------------------------------------
def _round_up(v, m):
    return -(-v // m) * m


def _m_tile(m):
    """Pick a large row tile that divides m (avoids a row-pad copy)."""
    for t in (512, 256, 128, 64, 32, 16, 8):
        if m % t == 0:
            return t, m
    if m > 512:
        return 512, _round_up(m, 512)
    t = _round_up(m, 16)
    return t, t


def _n_tile(np_):
    for t in (512, 256, 128):
        if np_ % t == 0:
            return t
    return 128


def _k_tile(kp):
    """Largest K tile that still gives >= 3 K steps (pipeline depth for the
    short-K 1x1 convs), else the largest divisor."""
    divs = [t for t in (512, 384, 256, 128) if kp % t == 0]
    for t in divs:
        if kp // t >= 3:
            return t
    return divs[-1] if divs else 128


def _split_for_two_cores(tm, mp, tn, np_):
    """v7x shards parallel grid axes over 2 TensorCores; make sure there are
    at least 2 parallel blocks when that is cheap."""
    if (mp // tm) * (np_ // tn) >= 2:
        return tm, tn
    if np_ >= 256:
        return tm, np_ // 2
    if tm % 16 == 0 and tm >= 32:
        return tm // 2, tn
    return tm, tn


def _row_tile(mp, np_):
    limit = 512 * 1024  # elements per block (keeps bn pass << scoped VMEM)
    for t in (1024, 512, 256, 128, 64, 32, 16, 8):
        if mp % t == 0 and t * np_ <= limit:
            return t
    return mp


# --------------------------------------------------------------------------
# Pallas kernels
# --------------------------------------------------------------------------
def _gemm_stats_kernel(a_ref, b_ref, o_ref, stat_ref, acc_ref):
    """bf16 x bf16 GEMM with f32 VMEM accumulator; bf16 output stored at the
    last K step together with per-channel sum / sum-of-squares (rows 0/1 of an
    (8, tn) stats block) for fused BatchNorm statistics."""
    k = pl.program_id(2)

    @pl.when(k == 0)
    def _():
        acc_ref[...] = jnp.zeros_like(acc_ref)

    acc_ref[...] += jnp.dot(a_ref[...], b_ref[...],
                            preferred_element_type=jnp.float32)

    @pl.when(k == pl.num_programs(2) - 1)
    def _():
        y = acc_ref[...]
        o_ref[...] = y.astype(o_ref.dtype)
        s = jnp.sum(y, axis=0, keepdims=True)
        sq = jnp.sum(y * y, axis=0, keepdims=True)
        row = lax.broadcasted_iota(jnp.int32, (8, y.shape[1]), 0)
        stat_ref[...] = jnp.where(
            row == 0, jnp.broadcast_to(s, (8, y.shape[1])),
            jnp.where(row == 1, jnp.broadcast_to(sq, (8, y.shape[1])), 0.0))


def _gemm_bias_kernel(a_ref, b_ref, bias_ref, o_ref, acc_ref):
    """GEMM with f32 scratch accumulator and bias fused into the epilogue."""
    k = pl.program_id(2)

    @pl.when(k == 0)
    def _():
        acc_ref[...] = jnp.zeros_like(acc_ref)

    acc_ref[...] += jnp.dot(a_ref[...], b_ref[...],
                            preferred_element_type=jnp.float32)

    @pl.when(k == pl.num_programs(2) - 1)
    def _():
        o_ref[...] = acc_ref[...] + bias_ref[...]


def _conv3x3_kernel(x_hbm, b_ref, mask_ref, o_ref, stat_ref,
                    acc_ref, abuf_ref, sem_ref, *, tm, wp2):
    """3x3 stride-1 conv as 9 shifted K-contributions.

    Grid = (M tiles over the padded output grid, N tiles, 9 taps).  The flat,
    spatially-padded activation lives in HBM (pl.ANY); each tap's (tm, C) slab
    is manually DMA'd with row offset di*(W+2)+dj, double-buffered across the
    tap axis.  Stats are computed from the f32 accumulator with a row-validity
    mask (rows on the padded grid that are not real output pixels)."""
    i = pl.program_id(0)
    t = pl.program_id(2)

    def start(tap, slot):
        shift = jnp.where(tap >= 6, tap - 6 + 2 * wp2,
                          jnp.where(tap >= 3, tap - 3 + wp2, tap))
        row0 = i * tm + shift
        pltpu.make_async_copy(x_hbm.at[pl.ds(row0, tm), :],
                              abuf_ref.at[slot], sem_ref.at[slot]).start()

    @pl.when(t == 0)
    def _():
        acc_ref[...] = jnp.zeros_like(acc_ref)
        start(0, 0)

    slot = t & 1
    pltpu.make_async_copy(x_hbm.at[pl.ds(0, tm), :],
                          abuf_ref.at[slot], sem_ref.at[slot]).wait()

    @pl.when(t < 8)
    def _():
        start(t + 1, 1 - slot)

    a_tile = abuf_ref[slot]
    acc_ref[...] += jnp.dot(a_tile, b_ref[0],
                            preferred_element_type=jnp.float32)

    @pl.when(t == 8)
    def _():
        y = acc_ref[...]
        o_ref[...] = y.astype(o_ref.dtype)
        msk = mask_ref[...][:, :1]
        ym = y * msk
        s = jnp.sum(ym, axis=0, keepdims=True)
        sq = jnp.sum(ym * y, axis=0, keepdims=True)
        row = lax.broadcasted_iota(jnp.int32, (8, y.shape[1]), 0)
        stat_ref[...] = jnp.where(
            row == 0, jnp.broadcast_to(s, (8, y.shape[1])),
            jnp.where(row == 1, jnp.broadcast_to(sq, (8, y.shape[1])), 0.0))


def _bn_act_kernel(y_ref, s_ref, b_ref, o_ref):
    v = y_ref[...].astype(jnp.float32) * s_ref[...] + b_ref[...]
    o_ref[...] = jnp.where(v >= 0, v, LRELU_SLOPE * v).astype(o_ref.dtype)


def _bn_act_res_kernel(y_ref, s_ref, b_ref, r_ref, o_ref):
    v = y_ref[...].astype(jnp.float32) * s_ref[...] + b_ref[...]
    v = jnp.where(v >= 0, v, LRELU_SLOPE * v) + r_ref[...].astype(jnp.float32)
    o_ref[...] = v.astype(o_ref.dtype)


# --------------------------------------------------------------------------
# Pallas call wrappers
# --------------------------------------------------------------------------
def matmul_stats(a, b):
    """a:(M,Kp) bf16, b:(Kp,Np) bf16 (pre-padded) -> y:(Mp,Np) bf16 + stats."""
    m, kp = a.shape
    _, np_ = b.shape
    tm, mp = _m_tile(m)
    tn = _n_tile(np_)
    tm, tn = _split_for_two_cores(tm, mp, tn, np_)
    tk = _k_tile(kp)
    if mp > m:
        a = jnp.pad(a, ((0, mp - m), (0, 0)))
    mt, nt, kt = mp // tm, np_ // tn, kp // tk
    y, stats = pl.pallas_call(
        _gemm_stats_kernel,
        out_shape=(jax.ShapeDtypeStruct((mp, np_), jnp.bfloat16),
                   jax.ShapeDtypeStruct((mt * 8, np_), jnp.float32)),
        grid_spec=pltpu.PrefetchScalarGridSpec(
            num_scalar_prefetch=0,
            grid=(mt, nt, kt),
            in_specs=[pl.BlockSpec((tm, tk), lambda i, j, k: (i, k)),
                      pl.BlockSpec((tk, tn), lambda i, j, k: (k, j))],
            out_specs=[pl.BlockSpec((tm, tn), lambda i, j, k: (i, j)),
                       pl.BlockSpec((8, tn), lambda i, j, k: (i, j))],
            scratch_shapes=[pltpu.VMEM((tm, tn), jnp.float32)]),
        compiler_params=pltpu.CompilerParams(
            dimension_semantics=("parallel", "parallel", "arbitrary")),
    )(a, b)
    return y, stats


def matmul_bias(a, b, bias):
    """a:(M,Kp) bf16, b:(Kp,Np) bf16, bias:(Np,) -> (Mp,Np) f32 (head conv)."""
    m, kp = a.shape
    _, np_ = b.shape
    tm, mp = _m_tile(m)
    tn = _n_tile(np_)
    tm, tn = _split_for_two_cores(tm, mp, tn, np_)
    tk = _k_tile(kp)
    if mp > m:
        a = jnp.pad(a, ((0, mp - m), (0, 0)))
    bias2 = bias.reshape(1, np_).astype(jnp.float32)
    return pl.pallas_call(
        _gemm_bias_kernel,
        out_shape=jax.ShapeDtypeStruct((mp, np_), jnp.float32),
        grid_spec=pltpu.PrefetchScalarGridSpec(
            num_scalar_prefetch=0,
            grid=(mp // tm, np_ // tn, kp // tk),
            in_specs=[pl.BlockSpec((tm, tk), lambda i, j, k: (i, k)),
                      pl.BlockSpec((tk, tn), lambda i, j, k: (k, j)),
                      pl.BlockSpec((1, tn), lambda i, j, k: (0, j))],
            out_specs=pl.BlockSpec((tm, tn), lambda i, j, k: (i, j)),
            scratch_shapes=[pltpu.VMEM((tm, tn), jnp.float32)]),
        compiler_params=pltpu.CompilerParams(
            dimension_semantics=("parallel", "parallel", "arbitrary")),
    )(a, b, bias2)


def bn_lrelu(y, scale, bias, res=None, out_dtype=jnp.bfloat16):
    """Per-channel affine + LeakyReLU(0.1) (+ fused residual add), row-tiled."""
    mp, np_ = y.shape
    tm = _row_tile(mp, np_)
    row_spec = pl.BlockSpec((tm, np_), lambda i: (i, 0))
    vec_spec = pl.BlockSpec((1, np_), lambda i: (0, 0))
    scale = scale.reshape(1, np_).astype(jnp.float32)
    bias = bias.reshape(1, np_).astype(jnp.float32)
    if res is None:
        kernel, ops = _bn_act_kernel, (y, scale, bias)
        in_specs = [row_spec, vec_spec, vec_spec]
    else:
        kernel, ops = _bn_act_res_kernel, (y, scale, bias, res)
        in_specs = [row_spec, vec_spec, vec_spec, row_spec]
    return pl.pallas_call(
        kernel,
        out_shape=jax.ShapeDtypeStruct((mp, np_), out_dtype),
        grid_spec=pltpu.PrefetchScalarGridSpec(
            num_scalar_prefetch=0,
            grid=(mp // tm,),
            in_specs=in_specs,
            out_specs=pl.BlockSpec((tm, np_), lambda i: (i, 0))),
        compiler_params=pltpu.CompilerParams(
            dimension_semantics=("parallel",)),
    )(*ops)


# --------------------------------------------------------------------------
# Convolution layers (jit-cached per unique shape/config)
# --------------------------------------------------------------------------
def _bn_scale_bias(stats, np_, cout, count, gamma, beta):
    mt = stats.shape[0] // 8
    st = stats.reshape(mt, 8, np_)
    csum = jnp.sum(st[:, 0, :], axis=0)[:cout]
    csq = jnp.sum(st[:, 1, :], axis=0)[:cout]
    mean = csum / count
    var = jnp.maximum(csq / count - mean * mean, 0.0)
    scale = gamma / jnp.sqrt(var + BN_EPS)
    bias = beta - mean * scale
    return jnp.pad(scale, (0, np_ - cout)), jnp.pad(bias, (0, np_ - cout))


def _im2col(x, k, stride, pad, kp):
    """x:(N,H,W,C) NHWC bf16 -> (M, Kp) patches, K-padding folded into the
    single concat so the patches matrix is materialized exactly once."""
    n, h, w, c = x.shape
    ho = (h + 2 * pad - k) // stride + 1
    wo = (w + 2 * pad - k) // stride + 1
    if k == 1 and stride == 1 and pad == 0:
        a = x.reshape(n * h * w, c)
        if kp > c:
            a = jnp.pad(a, ((0, 0), (0, kp - c)))
        return a, (n, h, w)
    xp = jnp.pad(x, ((0, 0), (pad, pad), (pad, pad), (0, 0)))
    cols = [xp[:, di:di + stride * ho:stride, dj:dj + stride * wo:stride, :]
            for di in range(k) for dj in range(k)]
    if kp > k * k * c:
        cols.append(jnp.zeros((n, ho, wo, kp - k * k * c), x.dtype))
    patches = jnp.concatenate(cols, axis=-1)
    return patches.reshape(n * ho * wo, kp), (n, ho, wo)


@partial(jax.jit, static_argnames=("k", "stride", "pad"))
def conv_bn_lrelu(x, w, gamma, beta, res, *, k, stride, pad):
    """Conv2d(bias=False) + BatchNorm2d(batch stats) + LeakyReLU(0.1) [+ skip]
    via an im2col GEMM.  Used for small-channel and stride-2 layers.
    # TODO(synk): the remaining im2col layers (cin < 128 or stride 2) could
    # also use the in-kernel shifted-slab path with a strided/padded variant.
    """
    cout = gamma.shape[0]
    kp, np_ = w.shape
    patches, (n, ho, wo) = _im2col(x, k, stride, pad, kp)
    m = patches.shape[0]
    y, stats = matmul_stats(patches, w)
    mp = y.shape[0]
    scale, bias = _bn_scale_bias(stats, np_, cout, m, gamma, beta)

    res_p = None
    if res is not None:
        res_p = res.reshape(m, -1).astype(jnp.bfloat16)
        pr, pc = mp - m, np_ - res_p.shape[1]
        if pr or pc:
            res_p = jnp.pad(res_p, ((0, pr), (0, pc)))

    out = bn_lrelu(y, scale, bias, res_p)
    return out[:m, :cout].reshape(n, ho, wo, cout)


@jax.jit
def conv3x3_bn_lrelu(x, w3, gamma, beta, res=None):
    """3x3 stride-1 pad-1 Conv + BN + LeakyReLU [+ skip] via the shifted-slab
    kernel (no materialized im2col).  Requires C % 128 == 0.
    x: (N,H,W,C) bf16, w3: (9, C, Np) bf16 (Cout zero-padded to Np)."""
    n, h, w, c = x.shape
    _, _, np_ = w3.shape
    cout = gamma.shape[0]
    wp2 = w + 2
    area = (h + 2) * wp2
    mfull = n * area

    tm = min(512, _round_up(mfull, 16))
    mp = _round_up(mfull, tm)
    tn = _n_tile(np_)
    tm, tn = _split_for_two_cores(tm, mp, tn, np_)
    mt, nt = mp // tm, np_ // tn

    maxshift = 2 * wp2 + 2
    rows_total = mp + maxshift
    xp = jnp.pad(x, ((0, 0), (1, 1), (1, 1), (0, 0)))
    xflat = jnp.pad(xp.reshape(mfull, c), ((0, rows_total - mfull), (0, 0)))

    # Row validity on the padded output grid (for masked BN statistics).
    r = jnp.arange(mp, dtype=jnp.int32)
    q = r % area
    ii = q // wp2
    jj = q % wp2
    valid = (r < mfull) & (ii < h) & (jj < w)
    mask = jnp.broadcast_to(valid.astype(jnp.float32)[:, None], (mp, 128))

    kernel = partial(_conv3x3_kernel, tm=tm, wp2=wp2)
    y, stats = pl.pallas_call(
        kernel,
        out_shape=(jax.ShapeDtypeStruct((mp, np_), jnp.bfloat16),
                   jax.ShapeDtypeStruct((mt * 8, np_), jnp.float32)),
        grid_spec=pltpu.PrefetchScalarGridSpec(
            num_scalar_prefetch=0,
            grid=(mt, nt, 9),
            in_specs=[pl.BlockSpec(memory_space=pl.ANY),
                      pl.BlockSpec((1, c, tn), lambda i, j, t: (t, 0, j)),
                      pl.BlockSpec((tm, 128), lambda i, j, t: (i, 0))],
            out_specs=[pl.BlockSpec((tm, tn), lambda i, j, t: (i, j)),
                       pl.BlockSpec((8, tn), lambda i, j, t: (i, j))],
            scratch_shapes=[pltpu.VMEM((tm, tn), jnp.float32),
                            pltpu.VMEM((2, tm, c), jnp.bfloat16),
                            pltpu.SemaphoreType.DMA((2,))]),
        compiler_params=pltpu.CompilerParams(
            dimension_semantics=("parallel", "parallel", "arbitrary")),
    )(xflat, w3, mask)

    m_valid = n * h * w
    scale, bias = _bn_scale_bias(stats, np_, cout, m_valid, gamma, beta)

    res_p = None
    if res is not None:
        res_p = jnp.pad(res.astype(jnp.bfloat16),
                        ((0, 0), (1, 1), (1, 1), (0, np_ - res.shape[-1])))
        res_p = res_p.reshape(mfull, np_)
        if mp > mfull:
            res_p = jnp.pad(res_p, ((0, mp - mfull), (0, 0)))

    out = bn_lrelu(y, scale, bias, res_p)
    out = out[:mfull, :cout].reshape(n, h + 2, w + 2, cout)[:, :h, :w, :]
    return out


@partial(jax.jit, static_argnames=("cout",))
def conv_bias_1x1(x, w, b, cout):
    """Plain Conv2d(cin, cout, 1, 1, 0) with bias (detection head output)."""
    n, h, wd, cin = x.shape
    m = n * h * wd
    a = x.reshape(m, cin).astype(jnp.bfloat16)
    kp = w.shape[0]
    if kp > cin:
        a = jnp.pad(a, ((0, 0), (0, kp - cin)))
    y = matmul_bias(a, w, b)
    return y[:m, :cout].reshape(n, h, wd, cout)


# --------------------------------------------------------------------------
# Deterministic parameter generation + network builders
# --------------------------------------------------------------------------
class KeyGen:
    def __init__(self, key):
        self._key = key

    def __call__(self):
        self._key, sub = jax.random.split(self._key)
        return sub


def conv_layer(x, kg, cin, cout, k, stride, pad, res=None):
    np_ = _round_up(cout, 128)
    fan_in = k * k * cin
    std = math.sqrt(2.0 / fan_in)
    gamma = jnp.ones((cout,), jnp.float32)
    beta = jnp.zeros((cout,), jnp.float32)
    if k == 3 and stride == 1 and cin % 128 == 0:
        # weights pre-padded / pre-cast once, per-tap layout for the shift path
        w = jax.random.normal(kg(), (9, cin, cout), jnp.float32) * std
        w = jnp.pad(w, ((0, 0), (0, 0), (0, np_ - cout))).astype(jnp.bfloat16)
        return conv3x3_bn_lrelu(x, w, gamma, beta, res)
    kp = _round_up(fan_in, 128)
    w = jax.random.normal(kg(), (fan_in, cout), jnp.float32) * std
    w = jnp.pad(w, ((0, kp - fan_in), (0, np_ - cout))).astype(jnp.bfloat16)
    return conv_bn_lrelu(x, w, gamma, beta, res, k=k, stride=stride, pad=pad)


def conv_head_layer(x, kg, cin, cout):
    kp = _round_up(cin, 128)
    np_ = _round_up(cout, 128)
    w = jax.random.normal(kg(), (cin, cout), jnp.float32) * math.sqrt(1.0 / cin)
    w = jnp.pad(w, ((0, kp - cin), (0, np_ - cout))).astype(jnp.bfloat16)
    b = 0.1 * jax.random.normal(kg(), (cout,), jnp.float32)
    b = jnp.pad(b, (0, np_ - cout))
    return conv_bias_1x1(x, w, b, cout)


def downsample(x, kg, cin, cout):
    return conv_layer(x, kg, cin, cout, 3, 2, 1)


def residual(x, kg, ch):
    y = conv_layer(x, kg, ch, ch // 2, 1, 1, 0)
    # skip-add fused into the second conv's BN+LeakyReLU epilogue kernel
    return conv_layer(y, kg, ch // 2, ch, 3, 1, 1, res=x)


def conv_set(x, kg, cin, cout):
    x = conv_layer(x, kg, cin, cout, 1, 1, 0)
    x = conv_layer(x, kg, cout, cin, 3, 1, 1)
    x = conv_layer(x, kg, cin, cout, 1, 1, 0)
    x = conv_layer(x, kg, cout, cin, 3, 1, 1)
    x = conv_layer(x, kg, cin, cout, 1, 1, 0)
    return x


def upsample_nearest_x2(x):
    return jnp.repeat(jnp.repeat(x, 2, axis=1), 2, axis=2)


# --------------------------------------------------------------------------
# MainNet forward
# --------------------------------------------------------------------------
def mainnet_forward(x_nchw, param_key):
    kg = KeyGen(param_key)
    x = jnp.transpose(x_nchw, (0, 2, 3, 1)).astype(jnp.bfloat16)  # NCHW -> NHWC

    # trunk_52
    h = conv_layer(x, kg, 3, 32, 3, 1, 1)
    h = downsample(h, kg, 32, 64)
    h = residual(h, kg, 64)
    h = downsample(h, kg, 64, 128)
    for _ in range(2):
        h = residual(h, kg, 128)
    h = downsample(h, kg, 128, 256)
    for _ in range(8):
        h = residual(h, kg, 256)
    h_52 = h

    # trunk_26
    h = downsample(h_52, kg, 256, 512)
    for _ in range(8):
        h = residual(h, kg, 512)
    h_26 = h

    # trunk_13
    h = downsample(h_26, kg, 512, 1024)
    for _ in range(4):
        h = residual(h, kg, 1024)
    h_13 = h

    # 13-scale head
    convset_out_13 = conv_set(h_13, kg, 1024, 512)
    d13 = conv_layer(convset_out_13, kg, 512, 1024, 3, 1, 1)
    d13 = conv_head_layer(d13, kg, 1024, 27)

    # 26-scale head
    up_26 = conv_layer(convset_out_13, kg, 512, 256, 1, 1, 0)
    up_26 = upsample_nearest_x2(up_26)
    route_26 = jnp.concatenate([up_26, h_26], axis=-1)        # 256 + 512 = 768
    convset_out_26 = conv_set(route_26, kg, 768, 256)
    d26 = conv_layer(convset_out_26, kg, 256, 512, 3, 1, 1)
    d26 = conv_head_layer(d26, kg, 512, 27)

    # 52-scale head
    up_52 = conv_layer(convset_out_26, kg, 256, 128, 1, 1, 0)
    up_52 = upsample_nearest_x2(up_52)
    route_52 = jnp.concatenate([up_52, h_52], axis=-1)        # 128 + 256 = 384
    convset_out_52 = conv_set(route_52, kg, 384, 128)
    d52 = conv_layer(convset_out_52, kg, 128, 256, 3, 1, 1)
    d52 = conv_head_layer(d52, kg, 256, 27)

    to_nchw = lambda t: jnp.transpose(t, (0, 3, 1, 2)).astype(jnp.float32)
    return to_nchw(d13), to_nchw(d26), to_nchw(d52)


if __name__ == "__main__":
    key = jax.random.PRNGKey(0)
    k_in, k_params = jax.random.split(key)
    # small input; spatial must be divisible by 32 (5 stride-2 downsamples)
    x = jax.random.normal(k_in, (2, 3, 32, 32), jnp.float32)

    d13, d26, d52 = mainnet_forward(x, k_params)
    jax.block_until_ready((d13, d26, d52))

    assert d13.shape == (2, 27, 1, 1), d13.shape
    assert d26.shape == (2, 27, 2, 2), d26.shape
    assert d52.shape == (2, 27, 4, 4), d52.shape
    assert bool(jnp.all(jnp.isfinite(d13)))
    assert bool(jnp.all(jnp.isfinite(d26)))
    assert bool(jnp.all(jnp.isfinite(d52)))
    print("KERNEL_OK")
</pallas_src>

<mosaic_0001>
module attributes {stable_mosaic.version = 11 : i64} {
  func.func @_gemm_stats_kernel(%arg0: i32, %arg1: i32, %arg2: i32, %arg3: memref<512x128xbf16, #tpu.memory_space<vmem>>, %arg4: memref<128x128xbf16, #tpu.memory_space<vmem>>, %arg5: memref<512x128xbf16, #tpu.memory_space<vmem>>, %arg6: memref<8x128xf32, #tpu.memory_space<vmem>>, %arg7: memref<512x128xf32, #tpu.memory_space<vmem>>) attributes {dimension_semantics = [#tpu.dimension_semantics<parallel>, #tpu.dimension_semantics<parallel>, #tpu.dimension_semantics<arbitrary>], iteration_bounds = array<i64: 4, 1, 1>, scalar_prefetch = 0 : i64, scratch_operands = 1 : i64, tpu.core_type = #tpu.core_type<tc>, window_params = [{transform_indices = @transform_0, window_bounds = array<i64: 512, 128>}, {transform_indices = @transform_1, window_bounds = array<i64: 128, 128>}, {transform_indices = @transform_2, window_bounds = array<i64: 512, 128>}, {transform_indices = @transform_3, window_bounds = array<i64: 8, 128>}]} {
    %c0_i32 = arith.constant 0 : i32
    %0 = arith.cmpi eq, %arg2, %c0_i32 : i32
    %1 = arith.extui %0 : i1 to i32
    %c0_i32_0 = arith.constant 0 : i32
    %2 = arith.cmpi ne, %1, %c0_i32_0 : i32
    scf.if %2 {
      %cst_10 = arith.constant 0.000000e+00 : f32
      %12 = vector.broadcast %cst_10 : f32 to vector<512x128xf32>
      %c0_11 = arith.constant 0 : index
      %c0_12 = arith.constant 0 : index
      %13 = vector.load %arg7[%c0_11, %c0_12] : memref<512x128xf32, #tpu.memory_space<vmem>>, vector<512x128xf32>
      tpu.vector_store %arg7[%c0_11, %c0_12], %12 {strides = array<i32>} : memref<512x128xf32, #tpu.memory_space<vmem>>, vector<512x128xf32>,
    } else {
    }
    %c0 = arith.constant 0 : index
    %c0_1 = arith.constant 0 : index
    %3 = vector.load %arg7[%c0, %c0_1] : memref<512x128xf32, #tpu.memory_space<vmem>>, vector<512x128xf32>
    %c0_2 = arith.constant 0 : index
    %c0_3 = arith.constant 0 : index
    %4 = vector.load %arg3[%c0_2, %c0_3] : memref<512x128xbf16, #tpu.memory_space<vmem>>, vector<512x128xbf16>
    %c0_4 = arith.constant 0 : index
    %c0_5 = arith.constant 0 : index
    %5 = vector.load %arg4[%c0_4, %c0_5] : memref<128x128xbf16, #tpu.memory_space<vmem>>, vector<128x128xbf16>
    %cst = arith.constant dense<0.000000e+00> : vector<512x128xf32>
    %6 = tpu.matmul %4, %5, %cst {dimension_numbers = #tpu.dot_dimension_numbers<[1], [0], [0], [1], [0, 0, 1, 1], [], []>} : vector<512x128xbf16>, vector<128x128xbf16>, vector<512x128xf32> -> vector<512x128xf32>
    %7 = arith.addf %3, %6 : vector<512x128xf32>
    %c0_6 = arith.constant 0 : index
    %c0_7 = arith.constant 0 : index
    %8 = vector.load %arg7[%c0_6, %c0_7] : memref<512x128xf32, #tpu.memory_space<vmem>>, vector<512x128xf32>
    tpu.vector_store %arg7[%c0_6, %c0_7], %7 {strides = array<i32>} : memref<512x128xf32, #tpu.memory_space<vmem>>, vector<512x128xf32>,
    %c0_i32_8 = arith.constant 0 : i32
    %9 = arith.cmpi eq, %arg2, %c0_i32_8 : i32
    %10 = arith.extui %9 : i1 to i32
    %c0_i32_9 = arith.constant 0 : i32
    %11 = arith.cmpi ne, %10, %c0_i32_9 : i32
    scf.if %11 {
      %c0_10 = arith.constant 0 : index
      %c0_11 = arith.constant 0 : index
      %12 = vector.load %arg7[%c0_10, %c0_11] : memref<512x128xf32, #tpu.memory_space<vmem>>, vector<512x128xf32>
      %13 = arith.truncf %12 : vector<512x128xf32> to vector<512x128xbf16>
      %c0_12 = arith.constant 0 : index
      %c0_13 = arith.constant 0 : index
      %14 = vector.load %arg5[%c0_12, %c0_13] : memref<512x128xbf16, #tpu.memory_space<vmem>>, vector<512x128xbf16>
      tpu.vector_store %arg5[%c0_12, %c0_13], %13 {strides = array<i32>} : memref<512x128xbf16, #tpu.memory_space<vmem>>, vector<512x128xbf16>,
      %cst_14 = arith.constant dense<0.000000e+00> : vector<128xf32>
      %15 = vector.multi_reduction <add>, %12, %cst_14 [0] : vector<512x128xf32> to vector<128xf32>
      %16 = vector.shape_cast %15 : vector<128xf32> to vector<1x128xf32>
      %17 = arith.mulf %12, %12 : vector<512x128xf32>
      %cst_15 = arith.constant dense<0.000000e+00> : vector<128xf32>
      %18 = vector.multi_reduction <add>, %17, %cst_15 [0] : vector<512x128xf32> to vector<128xf32>
      %19 = vector.shape_cast %18 : vector<128xf32> to vector<1x128xf32>
      %20 = tpu.iota {dimensions = array<i32: 0>} : vector<8x128xi32>
      %c0_i32_16 = arith.constant 0 : i32
      %21 = vector.broadcast %c0_i32_16 : i32 to vector<8x128xi32>
      %22 = arith.cmpi eq, %20, %21 : vector<8x128xi32>
      %23 = vector.shape_cast %16 : vector<1x128xf32> to vector<1x128xf32>
      %24 = vector.broadcast %23 : vector<1x128xf32> to vector<8x128xf32>
      %c1_i32 = arith.constant 1 : i32
      %25 = vector.broadcast %c1_i32 : i32 to vector<8x128xi32>
      %26 = arith.cmpi eq, %20, %25 : vector<8x128xi32>
      %27 = vector.shape_cast %19 : vector<1x128xf32> to vector<1x128xf32>
      %28 = vector.broadcast %27 : vector<1x128xf32> to vector<8x128xf32>
      %cst_17 = arith.constant 0.000000e+00 : f32
      %29 = vector.broadcast %cst_17 : f32 to vector<8x128xf32>
      %30 = arith.select %26, %28, %29 : vector<8x128xi1>, vector<8x128xf32>
      %31 = arith.select %22, %24, %30 : vector<8x128xi1>, vector<8x128xf32>
      %c0_18 = arith.constant 0 : index
      %c0_19 = arith.constant 0 : index
      %32 = vector.load %arg6[%c0_18, %c0_19] : memref<8x128xf32, #tpu.memory_space<vmem>>, vector<8x128xf32>
      tpu.vector_store %arg6[%c0_18, %c0_19], %31 {strides = array<i32>} : memref<8x128xf32, #tpu.memory_space<vmem>>, vector<8x128xf32>,
    } else {
    }
    return
  }
  func.func @transform_0(%arg0: i32, %arg1: i32, %arg2: i32) -> (i32, i32) {
    %c0_i32 = arith.constant 0 : i32
    return %arg0, %arg2 : i32, i32
  }
  func.func @transform_1(%arg0: i32, %arg1: i32, %arg2: i32) -> (i32, i32) {
    %c0_i32 = arith.constant 0 : i32
    return %arg2, %arg1 : i32, i32
  }
  func.func @transform_2(%arg0: i32, %arg1: i32, %arg2: i32) -> (i32, i32) {
    %c0_i32 = arith.constant 0 : i32
    return %arg0, %arg1 : i32, i32
  }
  func.func @transform_3(%arg0: i32, %arg1: i32, %arg2: i32) -> (i32, i32) {
    %c0_i32 = arith.constant 0 : i32
    return %arg0, %arg1 : i32, i32
  }
}

module attributes {stable_mosaic.version = 11 : i64} {
  func.func @_bn_act_kernel(%arg0: i32, %arg1: memref<1024x128xbf16, #tpu.memory_space<vmem>>, %arg2: memref<1x128xf32, #tpu.memory_space<vmem>>, %arg3: memref<1x128xf32, #tpu.memory_space<vmem>>, %arg4: memref<1024x128xbf16, #tpu.memory_space<vmem>>) attributes {dimension_semantics = [#tpu.dimension_semantics<parallel>], iteration_bounds = array<i64: 2>, scalar_prefetch = 0 : i64, scratch_operands = 0 : i64, tpu.core_type = #tpu.core_type<tc>, window_params = [{transform_indices = @transform_0, window_bounds = array<i64: 1024, 128>}, {pipeline_mode = #tpu.pipeline_mode<synchronous>, transform_indices = @transform_1, window_bounds = array<i64: 1, 128>}, {pipeline_mode = #tpu.pipeline_mode<synchronous>, transform_indices = @transform_2, window_bounds = array<i64: 1, 128>}, {transform_indices = @transform_3, window_bounds = array<i64: 1024, 128>}]} {
    %c0 = arith.constant 0 : index
    %c0_0 = arith.constant 0 : index
    %0 = vector.load %arg1[%c0, %c0_0] : memref<1024x128xbf16, #tpu.memory_space<vmem>>, vector<1024x128xbf16>
    %1 = arith.extf %0 : vector<1024x128xbf16> to vector<1024x128xf32>
    %c0_1 = arith.constant 0 : index
    %c0_2 = arith.constant 0 : index
    %2 = vector.load %arg2[%c0_1, %c0_2] : memref<1x128xf32, #tpu.memory_space<vmem>>, vector<1x128xf32>
    %3 = vector.broadcast %2 : vector<1x128xf32> to vector<1024x128xf32>
    %4 = arith.mulf %1, %3 : vector<1024x128xf32>
    %c0_3 = arith.constant 0 : index
    %c0_4 = arith.constant 0 : index
    %5 = vector.load %arg3[%c0_3, %c0_4] : memref<1x128xf32, #tpu.memory_space<vmem>>, vector<1x128xf32>
    %6 = vector.broadcast %5 : vector<1x128xf32> to vector<1024x128xf32>
    %7 = arith.addf %4, %6 : vector<1024x128xf32>
    %cst = arith.constant 0.000000e+00 : f32
    %8 = vector.broadcast %cst : f32 to vector<1024x128xf32>
    %9 = arith.cmpf oge, %7, %8 : vector<1024x128xf32>
    %cst_5 = arith.constant 1.000000e-01 : f32
    %10 = vector.broadcast %cst_5 : f32 to vector<1024x128xf32>
    %11 = arith.mulf %10, %7 : vector<1024x128xf32>
    %12 = arith.select %9, %7, %11 : vector<1024x128xi1>, vector<1024x128xf32>
    %13 = arith.truncf %12 : vector<1024x128xf32> to vector<1024x128xbf16>
    %c0_6 = arith.constant 0 : index
    %c0_7 = arith.constant 0 : index
    %14 = vector.load %arg4[%c0_6, %c0_7] : memref<1024x128xbf16, #tpu.memory_space<vmem>>, vector<1024x128xbf16>
    tpu.vector_store %arg4[%c0_6, %c0_7], %13 {strides = array<i32>} : memref<1024x128xbf16, #tpu.memory_space<vmem>>, vector<1024x128xbf16>,
    return
  }
  func.func @transform_0(%arg0: i32) -> (i32, i32) {
    %c0_i32 = arith.constant 0 : i32
    %c0_i32_0 = arith.constant 0 : i32
    return %arg0, %c0_i32 : i32, i32
  }
  func.func @transform_1(%arg0: i32) -> (i32, i32) {
    %c0_i32 = arith.constant 0 : i32
    %c0_i32_0 = arith.constant 0 : i32
    %c0_i32_1 = arith.constant 0 : i32
    return %c0_i32, %c0_i32_0 : i32, i32
  }
  func.func @transform_2(%arg0: i32) -> (i32, i32) {
    %c0_i32 = arith.constant 0 : i32
    %c0_i32_0 = arith.constant 0 : i32
    %c0_i32_1 = arith.constant 0 : i32
    return %c0_i32, %c0_i32_0 : i32, i32
  }
  func.func @transform_3(%arg0: i32) -> (i32, i32) {
    %c0_i32 = arith.constant 0 : i32
    %c0_i32_0 = arith.constant 0 : i32
    return %arg0, %c0_i32 : i32, i32
  }
}

</mosaic_0001>

<llo_original>
// kernel: conv_bn_lrelu.2
$region0: #{conv_bn_lrelu.2}
  #allocation0 [shape = 'u32[]', space=smem, size = 0x4, offset = 0x4, fixed_abs, tag = 'smem constant byte address 0x4 - core index']
  #allocation1 [shape = 'u32[144,128]{1,0:T(1,128)}', space=vmem, size = 0x12000, scoped, tag = 'internal scratch']
  #allocation2 [shape = 'f32[512,128]{1,0:T(8,128)}', space=vmem, size = 0x40000, scoped, tag = 'scratch operand']
  %s0 = inlined_call_operand.vmem [shape: bf16[2048,128], index: 0, kind: input, shape index: {}]
  %s1 = inlined_call_operand.vmem [shape: bf16[128,128], index: 1, kind: input, shape index: {}]
  %s2 = inlined_call_operand.vmem [shape: bf16[2048,128], index: 2, kind: output, shape index: {0}]
  %s3 = inlined_call_operand.vmem [shape: f32[32,128], index: 3, kind: output, shape index: {1}]
  %4 = xla_tuple %s2, %s3
  %s5 = sld [smem:[#allocation0]]
  $region57: #{conv_bn_lrelu.2} parent=0
    _
  %s7 = ssub.s32 1, %s5
  %s8 = scalar_select 0, %s7, %s5
  loop: start=0, step=1, limit=6
  $region2: #{conv_bn_lrelu.2} parent=0 // loop_pre_header
    _
  $region3: #{conv_bn_lrelu.2} parent=0 // loop_header
    %s10 = sphi 0, %s14
    %p11 = scmp.ge.s32.totalorder %s10, 6
    %s17 = sphi 0, %s36
    %s18 = sphi 0, %s32
    %s19 = sphi 0, %s28
    %s20 = sphi 0, %s17
    %s21 = sphi 0, %s18
    %s22 = sphi 0, %s19
    %s23 = sphi 0, %s20
    %s24 = sphi 0, %s21
    %s25 = sphi 0, %s22
    %s41 = sphi 0, %s43
    %s44 = sphi 0, %s41
    %s45 = sphi 0, %s44
    %s61 = sphi 0, %s45
    %s69 = sphi 0, %s71
    %s72 = sphi 0, %s69
    %s73 = sphi 0, %s72
    %s89 = sphi 0, %s73
    %s97 = sphi 0, %s99
    %s100 = sphi 0, %s97
    %s101 = sphi 0, %s100
    %s117 = sphi 0, %s101
    %s125 = sphi 0, %s127
    %s128 = sphi 0, %s125
    %s129 = sphi 0, %s128
    %s145 = sphi 0, %s129
  $region4: #{conv_bn_lrelu.2} parent=0 // loop_header_branch
    %13 = sbr.rel (%p11) target = $region8
  $region5: #{conv_bn_lrelu.2} parent=0 // loop_body
    %s15 = ssub.s32 %s10, 1
    %s16 = ssub.s32 %s10, 2
    %s26 = sadd.s32 1, %s19
    %p27 = scmp.ge.s32.totalorder %s26, 1
    %s28 = scalar_select %p27, 0, %s26
    %s29 = sadd.s32 1, %s18
    %s30 = scalar_select %p27, %s29, %s18
    %p31 = scmp.ge.s32.totalorder %s30, 1
    %s32 = scalar_select %p31, 0, %s30
    %s33 = sadd.s32 1, %s17
    %s34 = scalar_select %p31, %s33, %s17
    %p35 = scmp.ge.s32.totalorder %s34, 4
    %s36 = scalar_select %p35, 0, %s34
    %s37 = ssub.s32 %s17, %s36
    %s38 = ssub.s32 %s19, %s28
    %s39 = sor.u32 %s37, %s38
    %p40 = scmp.eq.s32.totalorder %s39, 0
    %s42 = sadd.s32 %s41, 1
    %s43 = scalar_select %p40, %s41, %s42
    %p46 = pneg %p40
    %p47 = scmp.eq.s32.totalorder %s10, 3
    %p48 = por %p46, %p47
    %p49 = scmp.ne.s32.totalorder %s41, %s44
    %p50 = scmp.eq.s32.totalorder %s10, 0
    %p51 = por %p49, %p50
    %p52 = scmp.ne.s32.totalorder %s41, %s44
    %p53 = scmp.eq.s32.totalorder %s15, 3
    %p54 = por %p52, %p53
    %p55 = scmp.ne.s32.totalorder %s44, %s45
    %p56 = scmp.eq.s32.totalorder %s15, 0
    %p57 = por %p55, %p56
    %p58 = scmp.ne.s32.totalorder %s44, %s45
    %p59 = scmp.eq.s32.totalorder %s16, 3
    %p60 = por %p58, %p59
    %p62 = scmp.ne.s32.totalorder %s45, %s61
    %p63 = scmp.eq.s32.totalorder %s16, 0
    %p64 = por %p62, %p63
    %s65 = ssub.s32 %s19, %s28
    %s66 = ssub.s32 %s18, %s32
    %s67 = sor.u32 %s65, %s66
    %p68 = scmp.eq.s32.totalorder %s67, 0
    %s70 = sadd.s32 %s69, 1
    %s71 = scalar_select %p68, %s69, %s70
    %p74 = pneg %p68
    %p75 = scmp.eq.s32.totalorder %s10, 3
    %p76 = por %p74, %p75
    %p77 = scmp.ne.s32.totalorder %s69, %s72
    %p78 = scmp.eq.s32.totalorder %s10, 0
    %p79 = por %p77, %p78
    %p80 = scmp.ne.s32.totalorder %s69, %s72
    %p81 = scmp.eq.s32.totalorder %s15, 3
    %p82 = por %p80, %p81
    %p83 = scmp.ne.s32.totalorder %s72, %s73
    %p84 = scmp.eq.s32.totalorder %s15, 0
    %p85 = por %p83, %p84
    %p86 = scmp.ne.s32.totalorder %s72, %s73
    %p87 = scmp.eq.s32.totalorder %s16, 3
    %p88 = por %p86, %p87
    %p90 = scmp.ne.s32.totalorder %s73, %s89
    %p91 = scmp.eq.s32.totalorder %s16, 0
    %p92 = por %p90, %p91
    %s93 = ssub.s32 %s17, %s36
    %s94 = ssub.s32 %s18, %s32
    %s95 = sor.u32 %s93, %s94
    %p96 = scmp.eq.s32.totalorder %s95, 0
    %s98 = sadd.s32 %s97, 1
    %s99 = scalar_select %p96, %s97, %s98
    %p102 = pneg %p96
    %p103 = scmp.eq.s32.totalorder %s10, 3
    %p104 = por %p102, %p103
    %p105 = scmp.ne.s32.totalorder %s97, %s100
    %p106 = scmp.eq.s32.totalorder %s10, 0
    %p107 = por %p105, %p106
    %p108 = scmp.ne.s32.totalorder %s97, %s100
    %p109 = scmp.eq.s32.totalorder %s15, 3
    %p110 = por %p108, %p109
    %p111 = scmp.ne.s32.totalorder %s100, %s101
    %p112 = scmp.eq.s32.totalorder %s15, 0
    %p113 = por %p111, %p112
    %p114 = scmp.ne.s32.totalorder %s100, %s101
    %p115 = scmp.eq.s32.totalorder %s16, 3
    %p116 = por %p114, %p115
    %p118 = scmp.ne.s32.totalorder %s101, %s117
    %p119 = scmp.eq.s32.totalorder %s16, 0
    %p120 = por %p118, %p119
    %s121 = ssub.s32 %s17, %s36
    %s122 = ssub.s32 %s18, %s32
    %s123 = sor.u32 %s121, %s122
    %p124 = scmp.eq.s32.totalorder %s123, 0
    %s126 = sadd.s32 %s125, 1
    %s127 = scalar_select %p124, %s125, %s126
    %p130 = pneg %p124
    %p131 = scmp.eq.s32.totalorder %s10, 3
    %p132 = por %p130, %p131
    %p133 = scmp.ne.s32.totalorder %s125, %s128
    %p134 = scmp.eq.s32.totalorder %s10, 0
    %p135 = por %p133, %p134
    %p136 = scmp.ne.s32.totalorder %s125, %s128
    %p137 = scmp.eq.s32.totalorder %s15, 3
    %p138 = por %p136, %p137
    %p139 = scmp.ne.s32.totalorder %s128, %s129
    %p140 = scmp.eq.s32.totalorder %s15, 0
    %p141 = por %p139, %p140
    %p142 = scmp.ne.s32.totalorder %s128, %s129
    %p143 = scmp.eq.s32.totalorder %s16, 3
    %p144 = por %p142, %p143
    %p146 = scmp.ne.s32.totalorder %s129, %s145
    %p147 = scmp.eq.s32.totalorder %s16, 0
    %p148 = por %p146, %p147
    %p149 = scmp.le.s32.totalorder 1, %s10
    %p150 = scmp.lt.s32.totalorder %s10, 5
    %p151 = pnand %p149, %p150
    %p152 = pneg %p151
    // Predicated region
    $region9: #{conv_bn_lrelu.2} parent=5 // pred_check
      _
    $region10: #{conv_bn_lrelu.2} parent=5 // pred_check_branch
      %154 = sbr.rel (%p151) target = $region12
    $region11: #{conv_bn_lrelu.2} parent=5 // pred_region
      %s155 = ssub.s32 %s10, 1
      // Predicated region
      $region13: #{conv_bn_lrelu.2} parent=11 // pred_check
        %p156 = pneg %p85
      $region14: #{conv_bn_lrelu.2} parent=11 // pred_check_branch
        %158 = sbr.rel (%p156) target = $region16
      $region15: #{conv_bn_lrelu.2} parent=11 // pred_region
        %s159 = smul.u32 16, %s22
        %p160 = scmp.lt.s32.totalorder %s159, 15
        %s161 = scalar_select %p160, %s159, 15
        %p162 = scmp.lt.s32.totalorder %s21, 0
        %s163 = scalar_select %p162, %s21, 0
        %s164 = sadd.s32 %s163, %s161
        %s165 = smul.addr %s164, 4
        %s166 = scalar_lea.vmem %s1, %s165
        %s167 = smul.u32 16, %s22
      $region16: #{conv_bn_lrelu.2} parent=11 // pred_fallthru
        _
    $region12: #{conv_bn_lrelu.2} parent=5 // pred_fallthru
      _
    %p168 = scmp.lt.s32.totalorder %s10, 4
    // Predicated region
    $region17: #{conv_bn_lrelu.2} parent=5 // pred_check
      %p169 = pneg %p168
    $region18: #{conv_bn_lrelu.2} parent=5 // pred_check_branch
      %171 = sbr.rel (%p169) target = $region20
    $region19: #{conv_bn_lrelu.2} parent=5 // pred_region
      // Predicated region
      $region21: #{conv_bn_lrelu.2} parent=19 // pred_check
        %p172 = pneg %p51
      $region22: #{conv_bn_lrelu.2} parent=19 // pred_check_branch
        %174 = sbr.rel (%p172) target = $region24
      $region23: #{conv_bn_lrelu.2} parent=19 // pred_region
        %s175 = smul.u32 64, %s17
        %p176 = scmp.lt.s32.totalorder %s175, 255
        %s177 = scalar_select %p176, %s175, 255
        %p178 = scmp.lt.s32.totalorder %s19, 0
        %s179 = scalar_select %p178, %s19, 0
        %s180 = sadd.s32 %s179, %s177
        %s181 = smul.addr %s180, 4
        %s182 = scalar_lea.vmem %s0, %s181
        %s183 = smul.u32 64, %s17
      $region24: #{conv_bn_lrelu.2} parent=19 // pred_fallthru
        _
    $region20: #{conv_bn_lrelu.2} parent=5 // pred_fallthru
      _
    %p184 = scmp.le.s32.totalorder 1, %s10
    %p185 = scmp.lt.s32.totalorder %s10, 5
    %p186 = pnand %p184, %p185
    %p187 = pneg %p186
    // Predicated region
    $region25: #{conv_bn_lrelu.2} parent=5 // pred_check
      _
    $region26: #{conv_bn_lrelu.2} parent=5 // pred_check_branch
      %189 = sbr.rel (%p186) target = $region28
    $region27: #{conv_bn_lrelu.2} parent=5 // pred_region
      %s190 = ssub.s32 %s10, 1
      %s191 = smul.u32 64, %s20
      %p192 = scmp.lt.s32.totalorder %s191, 255
      %s193 = scalar_select %p192, %s191, 255
      %p194 = scmp.lt.s32.totalorder %s22, 0
      %s195 = scalar_select %p194, %s22, 0
      %s196 = sadd.s32 %s195, %s193
      %s197 = smul.addr %s196, 4
      %s198 = scalar_lea.vmem %s0, %s197
      %p199 = pneg %p57
      %p200 = pneg %p54
      %s201 = smul.u32 16, %s22
      %p202 = scmp.lt.s32.totalorder %s201, 15
      %s203 = scalar_select %p202, %s201, 15
      %p204 = scmp.lt.s32.totalorder %s21, 0
      %s205 = scalar_select %p204, %s21, 0
      %s206 = sadd.s32 %s205, %s203
      %s207 = smul.addr %s206, 4
      %s208 = scalar_lea.vmem %s1, %s207
      %p209 = pneg %p85
      %p210 = pneg %p82
      %p211 = pneg %p113
      %p212 = pneg %p110
      %s213 = smul.u32 64, %s20
      %p214 = scmp.lt.s32.totalorder %s213, 255
      %s215 = scalar_select %p214, %s213, 255
      %p216 = scmp.lt.s32.totalorder %s21, 0
      %s217 = scalar_select %p216, %s21, 0
      %s218 = sadd.s32 %s217, %s215
      %s219 = smul.addr %s218, 4
      %s220 = scalar_lea.vmem %s2, %s219
      %p221 = pneg %p141
      %p222 = pneg %p138
      %p223 = scmp.lt.s32.totalorder %s20, 3
      %s224 = scalar_select %p223, %s20, 3
      %p225 = scmp.lt.s32.totalorder %s21, 0
      %s226 = scalar_select %p225, %s21, 0
      %s227 = sadd.s32 %s226, %s224
      %s228 = smul.addr %s227, 8
      %s229 = scalar_lea.vmem %s3, %s228
      %s230 = smul.u32 64, %s20
      %p231 = scmp.lt.s32.totalorder %s230, 255
      %s232 = scalar_select %p231, %s230, 255
      %p233 = scmp.lt.s32.totalorder %s22, 0
      %s234 = scalar_select %p233, %s22, 0
      %s235 = sadd.s32 %s234, %s232
      %s236 = smul.addr %s235, 4
      %s237 = scalar_lea.vmem %s0, %s236
      %s238 = smul.u32 64, %s20
      %s239 = smul.u32 16, %s22
      %p240 = scmp.lt.s32.totalorder %s239, 15
      %s241 = scalar_select %p240, %s239, 15
      %p242 = scmp.lt.s32.totalorder %s21, 0
      %s243 = scalar_select %p242, %s21, 0
      %s244 = sadd.s32 %s243, %s241
      %s245 = smul.addr %s244, 4
      %s246 = scalar_lea.vmem %s1, %s245
      %s247 = smul.u32 16, %s22
      %s248 = smul.u32 64, %s20
      %p249 = scmp.lt.s32.totalorder %s248, 255
      %s250 = scalar_select %p249, %s248, 255
      %p251 = scmp.lt.s32.totalorder %s21, 0
      %s252 = scalar_select %p251, %s21, 0
      %s253 = sadd.s32 %s252, %s250
      %s254 = smul.addr %s253, 4
      %s255 = scalar_lea.vmem %s2, %s254
      %s256 = smul.u32 64, %s20
      %p257 = scmp.lt.s32.totalorder %s20, 3
      %s258 = scalar_select %p257, %s20, 3
      %p259 = scmp.lt.s32.totalorder %s21, 0
      %s260 = scalar_select %p259, %s21, 0
      %s261 = sadd.s32 %s260, %s258
      %s262 = smul.addr %s261, 8
      %s263 = scalar_lea.vmem %s3, %s262
      %p265 = scmp.eq.s32.totalorder %s22, 0
      // Predicated region
      $region29: #{conv_bn_lrelu.2} parent=27 // pred_check
        %p266 = pneg %p265
      $region30: #{conv_bn_lrelu.2} parent=27 // pred_check_branch
        %268 = sbr.rel (%p266) target = $region32
      $region31: #{conv_bn_lrelu.2} parent=27 // pred_region
        %269 = vst [vmem:[#allocation2] sm:$0xff] 0.0
        %270 = vst [vmem:[#allocation2 + $0x8] sm:$0xff] 0.0
        %271 = vst [vmem:[#allocation2 + $0x10] sm:$0xff] 0.0
        %272 = vst [vmem:[#allocation2 + $0x18] sm:$0xff] 0.0
        %273 = vst [vmem:[#allocation2 + $0x20] sm:$0xff] 0.0
        %274 = vst [vmem:[#allocation2 + $0x28] sm:$0xff] 0.0
        %275 = vst [vmem:[#allocation2 + $0x30] sm:$0xff] 0.0
        %276 = vst [vmem:[#allocation2 + $0x38] sm:$0xff] 0.0
        %277 = vst [vmem:[#allocation2 + $0x40] sm:$0xff] 0.0
        %278 = vst [vmem:[#allocation2 + $0x48] sm:$0xff] 0.0
        %279 = vst [vmem:[#allocation2 + $0x50] sm:$0xff] 0.0
        %280 = vst [vmem:[#allocation2 + $0x58] sm:$0xff] 0.0
        %281 = vst [vmem:[#allocation2 + $0x60] sm:$0xff] 0.0
        %282 = vst [vmem:[#allocation2 + $0x68] sm:$0xff] 0.0
        %283 = vst [vmem:[#allocation2 + $0x70] sm:$0xff] 0.0
        %284 = vst [vmem:[#allocation2 + $0x78] sm:$0xff] 0.0
        %285 = vst [vmem:[#allocation2 + $0x80] sm:$0xff] 0.0
        %286 = vst [vmem:[#allocation2 + $0x88] sm:$0xff] 0.0
        %287 = vst [vmem:[#allocation2 + $0x90] sm:$0xff] 0.0
        %288 = vst [vmem:[#allocation2 + $0x98] sm:$0xff] 0.0
        %289 = vst [vmem:[#allocation2 + $0xa0] sm:$0xff] 0.0
        %290 = vst [vmem:[#allocation2 + $0xa8] sm:$0xff] 0.0
        %291 = vst [vmem:[#allocation2 + $0xb0] sm:$0xff] 0.0
        %292 = vst [vmem:[#allocation2 + $0xb8] sm:$0xff] 0.0
        %293 = vst [vmem:[#allocation2 + $0xc0] sm:$0xff] 0.0
        %294 = vst [vmem:[#allocation2 + $0xc8] sm:$0xff] 0.0
        %295 = vst [vmem:[#allocation2 + $0xd0] sm:$0xff] 0.0
        %296 = vst [vmem:[#allocation2 + $0xd8] sm:$0xff] 0.0
        %297 = vst [vmem:[#allocation2 + $0xe0] sm:$0xff] 0.0
        %298 = vst [vmem:[#allocation2 + $0xe8] sm:$0xff] 0.0
        %299 = vst [vmem:[#allocation2 + $0xf0] sm:$0xff] 0.0
        %300 = vst [vmem:[#allocation2 + $0xf8] sm:$0xff] 0.0
        %301 = vst [vmem:[#allocation2 + $0x100] sm:$0xff] 0.0
        %302 = vst [vmem:[#allocation2 + $0x108] sm:$0xff] 0.0
        %303 = vst [vmem:[#allocation2 + $0x110] sm:$0xff] 0.0
        %304 = vst [vmem:[#allocation2 + $0x118] sm:$0xff] 0.0
        %305 = vst [vmem:[#allocation2 + $0x120] sm:$0xff] 0.0
        %306 = vst [vmem:[#allocation2 + $0x128] sm:$0xff] 0.0
        %307 = vst [vmem:[#allocation2 + $0x130] sm:$0xff] 0.0
        %308 = vst [vmem:[#allocation2 + $0x138] sm:$0xff] 0.0
        %309 = vst [vmem:[#allocation2 + $0x140] sm:$0xff] 0.0
        %310 = vst [vmem:[#allocation2 + $0x148] sm:$0xff] 0.0
        %311 = vst [vmem:[#allocation2 + $0x150] sm:$0xff] 0.0
        %312 = vst [vmem:[#allocation2 + $0x158] sm:$0xff] 0.0
        %313 = vst [vmem:[#allocation2 + $0x160] sm:$0xff] 0.0
        %314 = vst [vmem:[#allocation2 + $0x168] sm:$0xff] 0.0
        %315 = vst [vmem:[#allocation2 + $0x170] sm:$0xff] 0.0
        %316 = vst [vmem:[#allocation2 + $0x178] sm:$0xff] 0.0
        %317 = vst [vmem:[#allocation2 + $0x180] sm:$0xff] 0.0
        %318 = vst [vmem:[#allocation2 + $0x188] sm:$0xff] 0.0
        %319 = vst [vmem:[#allocation2 + $0x190] sm:$0xff] 0.0
        %320 = vst [vmem:[#allocation2 + $0x198] sm:$0xff] 0.0
        %321 = vst [vmem:[#allocation2 + $0x1a0] sm:$0xff] 0.0
        %322 = vst [vmem:[#allocation2 + $0x1a8] sm:$0xff] 0.0
        %323 = vst [vmem:[#allocation2 + $0x1b0] sm:$0xff] 0.0
        %324 = vst [vmem:[#allocation2 + $0x1b8] sm:$0xff] 0.0
        %325 = vst [vmem:[#allocation2 + $0x1c0] sm:$0xff] 0.0
        %326 = vst [vmem:[#allocation2 + $0x1c8] sm:$0xff] 0.0
        %327 = vst [vmem:[#allocation2 + $0x1d0] sm:$0xff] 0.0
        %328 = vst [vmem:[#allocation2 + $0x1d8] sm:$0xff] 0.0
        %329 = vst [vmem:[#allocation2 + $0x1e0] sm:$0xff] 0.0
        %330 = vst [vmem:[#allocation2 + $0x1e8] sm:$0xff] 0.0
        %331 = vst [vmem:[#allocation2 + $0x1f0] sm:$0xff] 0.0
        %332 = vst [vmem:[#allocation2 + $0x1f8] sm:$0xff] 0.0
      $region32: #{conv_bn_lrelu.2} parent=27 // pred_fallthru
        _
      %v333 = vld [vmem:[#allocation2] sm:$0xff]
      %v334 = vld [vmem:[#allocation2 + $0x8] sm:$0xff]
      %v335 = vld [vmem:[#allocation2 + $0x10] sm:$0xff]
      %v336 = vld [vmem:[#allocation2 + $0x18] sm:$0xff]
      %v337 = vld [vmem:[#allocation2 + $0x20] sm:$0xff]
      %v338 = vld [vmem:[#allocation2 + $0x28] sm:$0xff]
      %v339 = vld [vmem:[#allocation2 + $0x30] sm:$0xff]
      %v340 = vld [vmem:[#allocation2 + $0x38] sm:$0xff]
      %v341 = vld [vmem:[#allocation2 + $0x40] sm:$0xff]
      %v342 = vld [vmem:[#allocation2 + $0x48] sm:$0xff]
      %v343 = vld [vmem:[#allocation2 + $0x50] sm:$0xff]
      %v344 = vld [vmem:[#allocation2 + $0x58] sm:$0xff]
      %v345 = vld [vmem:[#allocation2 + $0x60] sm:$0xff]
      %v346 = vld [vmem:[#allocation2 + $0x68] sm:$0xff]
      %v347 = vld [vmem:[#allocation2 + $0x70] sm:$0xff]
      %v348 = vld [vmem:[#allocation2 + $0x78] sm:$0xff]
      %v349 = vld [vmem:[#allocation2 + $0x80] sm:$0xff]
      %v350 = vld [vmem:[#allocation2 + $0x88] sm:$0xff]
      %v351 = vld [vmem:[#allocation2 + $0x90] sm:$0xff]
      %v352 = vld [vmem:[#allocation2 + $0x98] sm:$0xff]
      %v353 = vld [vmem:[#allocation2 + $0xa0] sm:$0xff]
      %v354 = vld [vmem:[#allocation2 + $0xa8] sm:$0xff]
      %v355 = vld [vmem:[#allocation2 + $0xb0] sm:$0xff]
      %v356 = vld [vmem:[#allocation2 + $0xb8] sm:$0xff]
      %v357 = vld [vmem:[#allocation2 + $0xc0] sm:$0xff]
      %v358 = vld [vmem:[#allocation2 + $0xc8] sm:$0xff]
      %v359 = vld [vmem:[#allocation2 + $0xd0] sm:$0xff]
      %v360 = vld [vmem:[#allocation2 + $0xd8] sm:$0xff]
      %v361 = vld [vmem:[#allocation2 + $0xe0] sm:$0xff]
      %v362 = vld [vmem:[#allocation2 + $0xe8] sm:$0xff]
      %v363 = vld [vmem:[#allocation2 + $0xf0] sm:$0xff]
      %v364 = vld [vmem:[#allocation2 + $0xf8] sm:$0xff]
      %v365 = vld [vmem:[#allocation2 + $0x100] sm:$0xff]
      %v366 = vld [vmem:[#allocation2 + $0x108] sm:$0xff]
      %v367 = vld [vmem:[#allocation2 + $0x110] sm:$0xff]
      %v368 = vld [vmem:[#allocation2 + $0x118] sm:$0xff]
      %v369 = vld [vmem:[#allocation2 + $0x120] sm:$0xff]
      %v370 = vld [vmem:[#allocation2 + $0x128] sm:$0xff]
      %v371 = vld [vmem:[#allocation2 + $0x130] sm:$0xff]
      %v372 = vld [vmem:[#allocation2 + $0x138] sm:$0xff]
      %v373 = vld [vmem:[#allocation2 + $0x140] sm:$0xff]
      %v374 = vld [vmem:[#allocation2 + $0x148] sm:$0xff]
      %v375 = vld [vmem:[#allocation2 + $0x150] sm:$0xff]
      %v376 = vld [vmem:[#allocation2 + $0x158] sm:$0xff]
      %v377 = vld [vmem:[#allocation2 + $0x160] sm:$0xff]
      %v378 = vld [vmem:[#allocation2 + $0x168] sm:$0xff]
      %v379 = vld [vmem:[#allocation2 + $0x170] sm:$0xff]
      %v380 = vld [vmem:[#allocation2 + $0x178] sm:$0xff]
      %v381 = vld [vmem:[#allocation2 + $0x180] sm:$0xff]
      %v382 = vld [vmem:[#allocation2 + $0x188] sm:$0xff]
      %v383 = vld [vmem:[#allocation2 + $0x190] sm:$0xff]
      %v384 = vld [vmem:[#allocation2 + $0x198] sm:$0xff]
      %v385 = vld [vmem:[#allocation2 + $0x1a0] sm:$0xff]
      %v386 = vld [vmem:[#allocation2 + $0x1a8] sm:$0xff]
      %v387 = vld [vmem:[#allocation2 + $0x1b0] sm:$0xff]
      %v388 = vld [vmem:[#allocation2 + $0x1b8] sm:$0xff]
      %v389 = vld [vmem:[#allocation2 + $0x1c0] sm:$0xff]
      %v390 = vld [vmem:[#allocation2 + $0x1c8] sm:$0xff]
      %v391 = vld [vmem:[#allocation2 + $0x1d0] sm:$0xff]
      %v392 = vld [vmem:[#allocation2 + $0x1d8] sm:$0xff]
      %v393 = vld [vmem:[#allocation2 + $0x1e0] sm:$0xff]
      %v394 = vld [vmem:[#allocation2 + $0x1e8] sm:$0xff]
      %v395 = vld [vmem:[#allocation2 + $0x1f0] sm:$0xff]
      %v396 = vld [vmem:[#allocation2 + $0x1f8] sm:$0xff]
      %v397 = vld [vmem:[%s237] sm:$0xf]
      %v398 = vld [vmem:[%s237 + $0x4] sm:$0xf]
      %v399 = vld [vmem:[%s237 + $0x8] sm:$0xf]
      %v400 = vld [vmem:[%s237 + $0xc] sm:$0xf]
      %v401 = vld [vmem:[%s237 + $0x10] sm:$0xf]
      %v402 = vld [vmem:[%s237 + $0x14] sm:$0xf]
      %v403 = vld [vmem:[%s237 + $0x18] sm:$0xf]
      %v404 = vld [vmem:[%s237 + $0x1c] sm:$0xf]
      %v405 = vld [vmem:[%s237 + $0x20] sm:$0xf]
      %v406 = vld [vmem:[%s237 + $0x24] sm:$0xf]
      %v407 = vld [vmem:[%s237 + $0x28] sm:$0xf]
      %v408 = vld [vmem:[%s237 + $0x2c] sm:$0xf]
      %v409 = vld [vmem:[%s237 + $0x30] sm:$0xf]
      %v410 = vld [vmem:[%s237 + $0x34] sm:$0xf]
      %v411 = vld [vmem:[%s237 + $0x38] sm:$0xf]
      %v412 = vld [vmem:[%s237 + $0x3c] sm:$0xf]
      %v413 = vld [vmem:[%s237 + $0x40] sm:$0xf]
      %v414 = vld [vmem:[%s237 + $0x44] sm:$0xf]
      %v415 = vld [vmem:[%s237 + $0x48] sm:$0xf]
      %v416 = vld [vmem:[%s237 + $0x4c] sm:$0xf]
      %v417 = vld [vmem:[%s237 + $0x50] sm:$0xf]
      %v418 = vld [vmem:[%s237 + $0x54] sm:$0xf]
      %v419 = vld [vmem:[%s237 + $0x58] sm:$0xf]
      %v420 = vld [vmem:[%s237 + $0x5c] sm:$0xf]
      %v421 = vld [vmem:[%s237 + $0x60] sm:$0xf]
      %v422 = vld [vmem:[%s237 + $0x64] sm:$0xf]
      %v423 = vld [vmem:[%s237 + $0x68] sm:$0xf]
      %v424 = vld [vmem:[%s237 + $0x6c] sm:$0xf]
      %v425 = vld [vmem:[%s237 + $0x70] sm:$0xf]
      %v426 = vld [vmem:[%s237 + $0x74] sm:$0xf]
      %v427 = vld [vmem:[%s237 + $0x78] sm:$0xf]
      %v428 = vld [vmem:[%s237 + $0x7c] sm:$0xf]
      %v429 = vld [vmem:[%s237 + $0x80] sm:$0xf]
      %v430 = vld [vmem:[%s237 + $0x84] sm:$0xf]
      %v431 = vld [vmem:[%s237 + $0x88] sm:$0xf]
      %v432 = vld [vmem:[%s237 + $0x8c] sm:$0xf]
      %v433 = vld [vmem:[%s237 + $0x90] sm:$0xf]
      %v434 = vld [vmem:[%s237 + $0x94] sm:$0xf]
      %v435 = vld [vmem:[%s237 + $0x98] sm:$0xf]
      %v436 = vld [vmem:[%s237 + $0x9c] sm:$0xf]
      %v437 = vld [vmem:[%s237 + $0xa0] sm:$0xf]
      %v438 = vld [vmem:[%s237 + $0xa4] sm:$0xf]
      %v439 = vld [vmem:[%s237 + $0xa8] sm:$0xf]
      %v440 = vld [vmem:[%s237 + $0xac] sm:$0xf]
      %v441 = vld [vmem:[%s237 + $0xb0] sm:$0xf]
      %v442 = vld [vmem:[%s237 + $0xb4] sm:$0xf]
      %v443 = vld [vmem:[%s237 + $0xb8] sm:$0xf]
      %v444 = vld [vmem:[%s237 + $0xbc] sm:$0xf]
      %v445 = vld [vmem:[%s237 + $0xc0] sm:$0xf]
      %v446 = vld [vmem:[%s237 + $0xc4] sm:$0xf]
      %v447 = vld [vmem:[%s237 + $0xc8] sm:$0xf]
      %v448 = vld [vmem:[%s237 + $0xcc] sm:$0xf]
      %v449 = vld [vmem:[%s237 + $0xd0] sm:$0xf]
      %v450 = vld [vmem:[%s237 + $0xd4] sm:$0xf]
      %v451 = vld [vmem:[%s237 + $0xd8] sm:$0xf]
      %v452 = vld [vmem:[%s237 + $0xdc] sm:$0xf]
      %v453 = vld [vmem:[%s237 + $0xe0] sm:$0xf]
      %v454 = vld [vmem:[%s237 + $0xe4] sm:$0xf]
      %v455 = vld [vmem:[%s237 + $0xe8] sm:$0xf]
      %v456 = vld [vmem:[%s237 + $0xec] sm:$0xf]
      %v457 = vld [vmem:[%s237 + $0xf0] sm:$0xf]
      %v458 = vld [vmem:[%s237 + $0xf4] sm:$0xf]
      %v459 = vld [vmem:[%s237 + $0xf8] sm:$0xf]
      %v460 = vld [vmem:[%s237 + $0xfc] sm:$0xf]
      %v461 = vld [vmem:[%s246] sm:$0xf]
      %v462 = vld [vmem:[%s246 + $0x4] sm:$0xf]
      %v463 = vld [vmem:[%s246 + $0x8] sm:$0xf]
      %v464 = vld [vmem:[%s246 + $0xc] sm:$0xf]
      %v465 = vld [vmem:[%s246 + $0x10] sm:$0xf]
      %v466 = vld [vmem:[%s246 + $0x14] sm:$0xf]
      %v467 = vld [vmem:[%s246 + $0x18] sm:$0xf]
      %v468 = vld [vmem:[%s246 + $0x1c] sm:$0xf]
      %v469 = vld [vmem:[%s246 + $0x20] sm:$0xf]
      %v470 = vld [vmem:[%s246 + $0x24] sm:$0xf]
      %v471 = vld [vmem:[%s246 + $0x28] sm:$0xf]
      %v472 = vld [vmem:[%s246 + $0x2c] sm:$0xf]
      %v473 = vld [vmem:[%s246 + $0x30] sm:$0xf]
      %v474 = vld [vmem:[%s246 + $0x34] sm:$0xf]
      %v475 = vld [vmem:[%s246 + $0x38] sm:$0xf]
      %v476 = vld [vmem:[%s246 + $0x3c] sm:$0xf]
      %v541 = vunpack.c.l.b16 %v397
      %v542 = vunpack.c.l.b16 %v398
      %v543 = vunpack.c.l.b16 %v399
      %v544 = vunpack.c.l.b16 %v400
      %v545 = vunpack.c.l.b16 %v401
      %v546 = vunpack.c.l.b16 %v402
      %v547 = vunpack.c.l.b16 %v403
      %v548 = vunpack.c.l.b16 %v404
      %v549 = vunpack.c.l.b16 %v405
      %v550 = vunpack.c.l.b16 %v406
      %v551 = vunpack.c.l.b16 %v407
      %v552 = vunpack.c.l.b16 %v408
      %v553 = vunpack.c.l.b16 %v409
      %v554 = vunpack.c.l.b16 %v410
      %v555 = vunpack.c.l.b16 %v411
      %v556 = vunpack.c.l.b16 %v412
      %v557 = vunpack.c.l.b16 %v413
      %v558 = vunpack.c.l.b16 %v414
      %v559 = vunpack.c.l.b16 %v415
      %v560 = vunpack.c.l.b16 %v416
      %v561 = vunpack.c.l.b16 %v417
      %v562 = vunpack.c.l.b16 %v418
      %v563 = vunpack.c.l.b16 %v419
      %v564 = vunpack.c.l.b16 %v420
      %v565 = vunpack.c.l.b16 %v421
      %v566 = vunpack.c.l.b16 %v422
      %v567 = vunpack.c.l.b16 %v423
      %v568 = vunpack.c.l.b16 %v424
      %v569 = vunpack.c.l.b16 %v425
      %v570 = vunpack.c.l.b16 %v426
      %v571 = vunpack.c.l.b16 %v427
      %v572 = vunpack.c.l.b16 %v428
      %v573 = vunpack.c.l.b16 %v429
      %v574 = vunpack.c.l.b16 %v430
      %v575 = vunpack.c.l.b16 %v431
      %v576 = vunpack.c.l.b16 %v432
      %v577 = vunpack.c.l.b16 %v433
      %v578 = vunpack.c.l.b16 %v434
      %v579 = vunpack.c.l.b16 %v435
      %v580 = vunpack.c.l.b16 %v436
      %v581 = vunpack.c.l.b16 %v437
      %v582 = vunpack.c.l.b16 %v438
      %v583 = vunpack.c.l.b16 %v439
      %v584 = vunpack.c.l.b16 %v440
      %v585 = vunpack.c.l.b16 %v441
      %v586 = vunpack.c.l.b16 %v442
      %v587 = vunpack.c.l.b16 %v443
      %v588 = vunpack.c.l.b16 %v444
      %v589 = vunpack.c.l.b16 %v445
      %v590 = vunpack.c.l.b16 %v446
      %v591 = vunpack.c.l.b16 %v447
      %v592 = vunpack.c.l.b16 %v448
      %v593 = vunpack.c.l.b16 %v449
      %v594 = vunpack.c.l.b16 %v450
      %v595 = vunpack.c.l.b16 %v451
      %v596 = vunpack.c.l.b16 %v452
      %v597 = vunpack.c.l.b16 %v453
      %v598 = vunpack.c.l.b16 %v454
      %v599 = vunpack.c.l.b16 %v455
      %v600 = vunpack.c.l.b16 %v456
      %v601 = vunpack.c.l.b16 %v457
      %v602 = vunpack.c.l.b16 %v458
      %v603 = vunpack.c.l.b16 %v459
      %v604 = vunpack.c.l.b16 %v460
      %v605 = vpack.c.b16 %v542, %v541
      %v606 = vpack.c.b16 %v544, %v543
      %v607 = vpack.c.b16 %v546, %v545
      %v608 = vpack.c.b16 %v548, %v547
      %v609 = vpack.c.b16 %v550, %v549
      %v610 = vpack.c.b16 %v552, %v551
      %v611 = vpack.c.b16 %v554, %v553
      %v612 = vpack.c.b16 %v556, %v555
      %v613 = vpack.c.b16 %v558, %v557
      %v614 = vpack.c.b16 %v560, %v559
      %v615 = vpack.c.b16 %v562, %v561
      %v616 = vpack.c.b16 %v564, %v563
      %v617 = vpack.c.b16 %v566, %v565
      %v618 = vpack.c.b16 %v568, %v567
      %v619 = vpack.c.b16 %v570, %v569
      %v620 = vpack.c.b16 %v572, %v571
      %v621 = vpack.c.b16 %v574, %v573
      %v622 = vpack.c.b16 %v576, %v575
      %v623 = vpack.c.b16 %v578, %v577
      %v624 = vpack.c.b16 %v580, %v579
      %v625 = vpack.c.b16 %v582, %v581
      %v626 = vpack.c.b16 %v584, %v583
      %v627 = vpack.c.b16 %v586, %v585
      %v628 = vpack.c.b16 %v588, %v587
      %v629 = vpack.c.b16 %v590, %v589
      %v630 = vpack.c.b16 %v592, %v591
      %v631 = vpack.c.b16 %v594, %v593
      %v632 = vpack.c.b16 %v596, %v595
      %v633 = vpack.c.b16 %v598, %v597
      %v634 = vpack.c.b16 %v600, %v599
      %v635 = vpack.c.b16 %v602, %v601
      %v636 = vpack.c.b16 %v604, %v603
      %v685 = vunpack.c.l.b16 %v461
      %v686 = vunpack.c.l.b16 %v462
      %v687 = vunpack.c.l.b16 %v463
      %v688 = vunpack.c.l.b16 %v464
      %v689 = vunpack.c.l.b16 %v465
      %v690 = vunpack.c.l.b16 %v466
      %v691 = vunpack.c.l.b16 %v467
      %v692 = vunpack.c.l.b16 %v468
      %v693 = vunpack.c.l.b16 %v469
      %v694 = vunpack.c.l.b16 %v470
      %v695 = vunpack.c.l.b16 %v471
      %v696 = vunpack.c.l.b16 %v472
      %v697 = vunpack.c.l.b16 %v473
      %v698 = vunpack.c.l.b16 %v474
      %v699 = vunpack.c.l.b16 %v475
      %v700 = vunpack.c.l.b16 %v476
      %v701 = vpack.c.b16 %v686, %v685
      %v702 = vpack.c.b16 %v688, %v687
      %v703 = vpack.c.b16 %v690, %v689
      %v704 = vpack.c.b16 %v692, %v691
      %v705 = vpack.c.b16 %v694, %v693
      %v706 = vpack.c.b16 %v696, %v695
      %v707 = vpack.c.b16 %v698, %v697
      %v708 = vpack.c.b16 %v700, %v699
      %717 = vmatprep.subr.bf16.mxu0 0
      %718 = vmatpush1.bf16.msra.mxu0 %v701
      %719 = vmatprep.subr.bf16.mxu0 0
      %720 = vmatpush1.bf16.msra.mxu0 %v702
      %721 = vmatprep.subr.bf16.mxu0 0
      %722 = vmatpush1.bf16.msra.mxu0 %v703
      %723 = vmatprep.subr.bf16.mxu0 0
      %724 = vmatpush1.bf16.msra.mxu0 %v704
      %725 = vmatprep.subr.bf16.mxu0 0
      %726 = vmatpush1.bf16.msra.mxu0 %v705
      %727 = vmatprep.subr.bf16.mxu0 0
      %728 = vmatpush1.bf16.msra.mxu0 %v706
      %729 = vmatprep.subr.bf16.mxu0 0
      %730 = vmatpush1.bf16.msra.mxu0 %v707
      %731 = vmatprep.subr.bf16.mxu0 0
      %732 = vmatpush1.bf16.msra.mxu0 %v708
      %733 = vmatprep.subr.bf16.mxu0 0
      %734 = vmatpush1.bf16.msra.mxu0 0
      %735 = vmatprep.subr.bf16.mxu0 0
      %736 = vmatpush1.bf16.msra.mxu0 0
      %737 = vmatprep.subr.bf16.mxu0 0
      %738 = vmatpush1.bf16.msra.mxu0 0
      %739 = vmatprep.subr.bf16.mxu0 0
      %740 = vmatpush1.bf16.msra.mxu0 0
      %741 = vmatprep.subr.bf16.mxu0 0
      %742 = vmatpush1.bf16.msra.mxu0 0
      %743 = vmatprep.subr.bf16.mxu0 0
      %744 = vmatpush1.bf16.msra.mxu0 0
      %745 = vmatprep.subr.bf16.mxu0 0
      %746 = vmatpush1.bf16.msra.mxu0 0
      %747 = vmatprep.subr.bf16.mxu0 0
      %748 = vmatpush1.bf16.msra.mxu0 0
      %749 = vmatprep.mubr.bf16.mxu0 0
      %750 = vmatmul.mubr.bf16.gmra.mrb[0].mxu0 %v605
      %v751 = vpop.f32.mrb[0].mxu0
      %v752 = vadd.f32 0.0, %v751
      %v753 = vpop.f32.mrb[0].mxu0
      %v754 = vpop.f32.mrb[0].mxu0
      %v755 = vadd.f32 0.0, %v754
      %v756 = vpop.f32.mrb[0].mxu0
      %757 = vmatprep.mubr.bf16.mxu0 0
      %758 = vmatmul.mubr.bf16.gmra.mrb[0].mxu0 %v606
      %v759 = vpop.f32.mrb[0].mxu0
      %v760 = vadd.f32 0.0, %v759
      %v761 = vpop.f32.mrb[0].mxu0
      %v762 = vpop.f32.mrb[0].mxu0
      %v763 = vadd.f32 0.0, %v762
      %v764 = vpop.f32.mrb[0].mxu0
      %765 = vmatprep.mubr.bf16.mxu0 0
      %766 = vmatmul.mubr.bf16.gmra.mrb[0].mxu0 %v607
      %v767 = vpop.f32.mrb[0].mxu0
      %v768 = vadd.f32 0.0, %v767
      %v769 = vpop.f32.mrb[0].mxu0
      %v770 = vpop.f32.mrb[0].mxu0
      %v771 = vadd.f32 0.0, %v770
      %v772 = vpop.f32.mrb[0].mxu0
      %773 = vmatprep.mubr.bf16.mxu0 0
      %774 = vmatmul.mubr.bf16.gmra.mrb[0].mxu0 %v608
      %v775 = vpop.f32.mrb[0].mxu0
      %v776 = vadd.f32 0.0, %v775
      %v777 = vpop.f32.mrb[0].mxu0
      %v778 = vpop.f32.mrb[0].mxu0
      %v779 = vadd.f32 0.0, %v778
      %v780 = vpop.f32.mrb[0].mxu0
      %781 = vmatprep.mubr.bf16.mxu0 0
      %782 = vmatmul.mubr.bf16.gmra.mrb[0].mxu0 %v609
      %v783 = vpop.f32.mrb[0].mxu0
      %v784 = vadd.f32 0.0, %v783
      %v785 = vpop.f32.mrb[0].mxu0
      %v786 = vpop.f32.mrb[0].mxu0
      %v787 = vadd.f32 0.0, %v786
      %v788 = vpop.f32.mrb[0].mxu0
      %789 = vmatprep.mubr.bf16.mxu0 0
      %790 = vmatmul.mubr.bf16.gmra.mrb[0].mxu0 %v610
      %v791 = vpop.f32.mrb[0].mxu0
      %v792 = vadd.f32 0.0, %v791
      %v793 = vpop.f32.mrb[0].mxu0
      %v794 = vpop.f32.mrb[0].mxu0
      %v795 = vadd.f32 0.0, %v794
      %v796 = vpop.f32.mrb[0].mxu0
      %797 = vmatprep.mubr.bf16.mxu0 0
      %798 = vmatmul.mubr.bf16.gmra.mrb[0].mxu0 %v611
      %v799 = vpop.f32.mrb[0].mxu0
      %v800 = vadd.f32 0.0, %v799
      %v801 = vpop.f32.mrb[0].mxu0
      %v802 = vpop.f32.mrb[0].mxu0
      %v803 = vadd.f32 0.0, %v802
      %v804 = vpop.f32.mrb[0].mxu0
      %805 = vmatprep.mubr.bf16.mxu0 0
      %806 = vmatmul.mubr.bf16.gmra.mrb[0].mxu0 %v612
      %v807 = vpop.f32.mrb[0].mxu0
      %v808 = vadd.f32 0.0, %v807
      %v809 = vpop.f32.mrb[0].mxu0
      %v810 = vpop.f32.mrb[0].mxu0
      %v811 = vadd.f32 0.0, %v810
      %v812 = vpop.f32.mrb[0].mxu0
      %813 = vmatprep.mubr.bf16.mxu0 0
      %814 = vmatmul.mubr.bf16.gmra.mrb[0].mxu0 %v613
      %v815 = vpop.f32.mrb[0].mxu0
      %v816 = vadd.f32 0.0, %v815
      %v817 = vpop.f32.mrb[0].mxu0
      %v818 = vpop.f32.mrb[0].mxu0
      %v819 = vadd.f32 0.0, %v818
      %v820 = vpop.f32.mrb[0].mxu0
      %821 = vmatprep.mubr.bf16.mxu0 0
      %822 = vmatmul.mubr.bf16.gmra.mrb[0].mxu0 %v614
      %v823 = vpop.f32.mrb[0].mxu0
      %v824 = vadd.f32 0.0, %v823
      %v825 = vpop.f32.mrb[0].mxu0
      %v826 = vpop.f32.mrb[0].mxu0
      %v827 = vadd.f32 0.0, %v826
      %v828 = vpop.f32.mrb[0].mxu0
      %829 = vmatprep.mubr.bf16.mxu0 0
      %830 = vmatmul.mubr.bf16.gmra.mrb[0].mxu0 %v615
      %v831 = vpop.f32.mrb[0].mxu0
      %v832 = vadd.f32 0.0, %v831
      %v833 = vpop.f32.mrb[0].mxu0
      %v834 = vpop.f32.mrb[0].mxu0
      %v835 = vadd.f32 0.0, %v834
      %v836 = vpop.f32.mrb[0].mxu0
      %837 = vmatprep.mubr.bf16.mxu0 0
      %838 = vmatmul.mubr.bf16.gmra.mrb[0].mxu0 %v616
      %v839 = vpop.f32.mrb[0].mxu0
      %v840 = vadd.f32 0.0, %v839
      %v841 = vpop.f32.mrb[0].mxu0
      %v842 = vpop.f32.mrb[0].mxu0
      %v843 = vadd.f32 0.0, %v842
      %v844 = vpop.f32.mrb[0].mxu0
      %845 = vmatprep.mubr.bf16.mxu0 0
      %846 = vmatmul.mubr.bf16.gmra.mrb[0].mxu0 %v617
      %v847 = vpop.f32.mrb[0].mxu0
      %v848 = vadd.f32 0.0, %v847
      %v849 = vpop.f32.mrb[0].mxu0
      %v850 = vpop.f32.mrb[0].mxu0
      %v851 = vadd.f32 0.0, %v850
      %v852 = vpop.f32.mrb[0].mxu0
      %853 = vmatprep.mubr.bf16.mxu0 0
      %854 = vmatmul.mubr.bf16.gmra.mrb[0].mxu0 %v618
      %v855 = vpop.f32.mrb[0].mxu0
      %v856 = vadd.f32 0.0, %v855
      %v857 = vpop.f32.mrb[0].mxu0
      %v858 = vpop.f32.mrb[0].mxu0
      %v859 = vadd.f32 0.0, %v858
      %v860 = vpop.f32.mrb[0].mxu0
      %861 = vmatprep.mubr.bf16.mxu0 0
      %862 = vmatmul.mubr.bf16.gmra.mrb[0].mxu0 %v619
      %v863 = vpop.f32.mrb[0].mxu0
      %v864 = vadd.f32 0.0, %v863
      %v865 = vpop.f32.mrb[0].mxu0
      %v866 = vpop.f32.mrb[0].mxu0
      %v867 = vadd.f32 0.0, %v866
      %v868 = vpop.f32.mrb[0].mxu0
      %869 = vmatprep.mubr.bf16.mxu0 0
      %870 = vmatmul.mubr.bf16.gmra.mrb[0].mxu0 %v620
      %v871 = vpop.f32.mrb[0].mxu0
      %v872 = vadd.f32 0.0, %v871
      %v873 = vpop.f32.mrb[0].mxu0
      %v874 = vpop.f32.mrb[0].mxu0
      %v875 = vadd.f32 0.0, %v874
      %v876 = vpop.f32.mrb[0].mxu0
      %877 = vmatprep.mubr.bf16.mxu0 0
      %878 = vmatmul.mubr.bf16.gmra.mrb[0].mxu0 %v621
      %v879 = vpop.f32.mrb[0].mxu0
      %v880 = vadd.f32 0.0, %v879
      %v881 = vpop.f32.mrb[0].mxu0
      %v882 = vpop.f32.mrb[0].mxu0
      %v883 = vadd.f32 0.0, %v882
      %v884 = vpop.f32.mrb[0].mxu0
      %885 = vmatprep.mubr.bf16.mxu0 0
      %886 = vmatmul.mubr.bf16.gmra.mrb[0].mxu0 %v622
      %v887 = vpop.f32.mrb[0].mxu0
      %v888 = vadd.f32 0.0, %v887
      %v889 = vpop.f32.mrb[0].mxu0
      %v890 = vpop.f32.mrb[0].mxu0
      %v891 = vadd.f32 0.0, %v890
      %v892 = vpop.f32.mrb[0].mxu0
      %893 = vmatprep.mubr.bf16.mxu0 0
      %894 = vmatmul.mubr.bf16.gmra.mrb[0].mxu0 %v623
      %v895 = vpop.f32.mrb[0].mxu0
      %v896 = vadd.f32 0.0, %v895
      %v897 = vpop.f32.mrb[0].mxu0
      %v898 = vpop.f32.mrb[0].mxu0
      %v899 = vadd.f32 0.0, %v898
      %v900 = vpop.f32.mrb[0].mxu0
      %901 = vmatprep.mubr.bf16.mxu0 0
      %902 = vmatmul.mubr.bf16.gmra.mrb[0].mxu0 %v624
      %v903 = vpop.f32.mrb[0].mxu0
      %v904 = vadd.f32 0.0, %v903
      %v905 = vpop.f32.mrb[0].mxu0
      %v906 = vpop.f32.mrb[0].mxu0
      %v907 = vadd.f32 0.0, %v906
      %v908 = vpop.f32.mrb[0].mxu0
      %909 = vmatprep.mubr.bf16.mxu0 0
      %910 = vmatmul.mubr.bf16.gmra.mrb[0].mxu0 %v625
      %v911 = vpop.f32.mrb[0].mxu0
      %v912 = vadd.f32 0.0, %v911
      %v913 = vpop.f32.mrb[0].mxu0
      %v914 = vpop.f32.mrb[0].mxu0
      %v915 = vadd.f32 0.0, %v914
      %v916 = vpop.f32.mrb[0].mxu0
      %917 = vmatprep.mubr.bf16.mxu0 0
      %918 = vmatmul.mubr.bf16.gmra.mrb[0].mxu0 %v626
      %v919 = vpop.f32.mrb[0].mxu0
      %v920 = vadd.f32 0.0, %v919
      %v921 = vpop.f32.mrb[0].mxu0
      %v922 = vpop.f32.mrb[0].mxu0
      %v923 = vadd.f32 0.0, %v922
      %v924 = vpop.f32.mrb[0].mxu0
      %925 = vmatprep.mubr.bf16.mxu0 0
      %926 = vmatmul.mubr.bf16.gmra.mrb[0].mxu0 %v627
      %v927 = vpop.f32.mrb[0].mxu0
      %v928 = vadd.f32 0.0, %v927
      %v929 = vpop.f32.mrb[0].mxu0
      %v930 = vpop.f32.mrb[0].mxu0
      %v931 = vadd.f32 0.0, %v930
      %v932 = vpop.f32.mrb[0].mxu0
      %933 = vmatprep.mubr.bf16.mxu0 0
      %934 = vmatmul.mubr.bf16.gmra.mrb[0].mxu0 %v628
      %v935 = vpop.f32.mrb[0].mxu0
      %v936 = vadd.f32 0.0, %v935
      %v937 = vpop.f32.mrb[0].mxu0
      %v938 = vpop.f32.mrb[0].mxu0
      %v939 = vadd.f32 0.0, %v938
      %v940 = vpop.f32.mrb[0].mxu0
      %941 = vmatprep.mubr.bf16.mxu0 0
      %942 = vmatmul.mubr.bf16.gmra.mrb[0].mxu0 %v629
      %v943 = vpop.f32.mrb[0].mxu0
      %v944 = vadd.f32 0.0, %v943
      %v945 = vpop.f32.mrb[0].mxu0
      %v946 = vpop.f32.mrb[0].mxu0
      %v947 = vadd.f32 0.0, %v946
      %v948 = vpop.f32.mrb[0].mxu0
      %949 = vmatprep.mubr.bf16.mxu0 0
      %950 = vmatmul.mubr.bf16.gmra.mrb[0].mxu0 %v630
      %v951 = vpop.f32.mrb[0].mxu0
      %v952 = vadd.f32 0.0, %v951
      %v953 = vpop.f32.mrb[0].mxu0
      %v954 = vpop.f32.mrb[0].mxu0
      %v955 = vadd.f32 0.0, %v954
      %v956 = vpop.f32.mrb[0].mxu0
      %957 = vmatprep.mubr.bf16.mxu0 0
      %958 = vmatmul.mubr.bf16.gmra.mrb[0].mxu0 %v631
      %v959 = vpop.f32.mrb[0].mxu0
      %v960 = vadd.f32 0.0, %v959
      %v961 = vpop.f32.mrb[0].mxu0
      %v962 = vpop.f32.mrb[0].mxu0
      %v963 = vadd.f32 0.0, %v962
      %v964 = vpop.f32.mrb[0].mxu0
      %965 = vmatprep.mubr.bf16.mxu0 0
      %966 = vmatmul.mubr.bf16.gmra.mrb[0].mxu0 %v632
      %v967 = vpop.f32.mrb[0].mxu0
      %v968 = vadd.f32 0.0, %v967
      %v969 = vpop.f32.mrb[0].mxu0
      %v970 = vpop.f32.mrb[0].mxu0
      %v971 = vadd.f32 0.0, %v970
      %v972 = vpop.f32.mrb[0].mxu0
      %973 = vmatprep.mubr.bf16.mxu0 0
      %974 = vmatmul.mubr.bf16.gmra.mrb[0].mxu0 %v633
      %v975 = vpop.f32.mrb[0].mxu0
      %v976 = vadd.f32 0.0, %v975
      %v977 = vpop.f32.mrb[0].mxu0
      %v978 = vpop.f32.mrb[0].mxu0
      %v979 = vadd.f32 0.0, %v978
      %v980 = vpop.f32.mrb[0].mxu0
      %981 = vmatprep.mubr.bf16.mxu0 0
      %982 = vmatmul.mubr.bf16.gmra.mrb[0].mxu0 %v634
      %v983 = vpop.f32.mrb[0].mxu0
      %v984 = vadd.f32 0.0, %v983
      %v985 = vpop.f32.mrb[0].mxu0
      %v986 = vpop.f32.mrb[0].mxu0
      %v987 = vadd.f32 0.0, %v986
      %v988 = vpop.f32.mrb[0].mxu0
      %989 = vmatprep.mubr.bf16.mxu0 0
      %990 = vmatmul.mubr.bf16.gmra.mrb[0].mxu0 %v635
      %v991 = vpop.f32.mrb[0].mxu0
      %v992 = vadd.f32 0.0, %v991
      %v993 = vpop.f32.mrb[0].mxu0
      %v994 = vpop.f32.mrb[0].mxu0
      %v995 = vadd.f32 0.0, %v994
      %v996 = vpop.f32.mrb[0].mxu0
      %997 = vmatprep.mubr.bf16.mxu0 0
      %998 = vmatmul.mubr.bf16.gmra.mrb[0].mxu0 %v636
      %v999 = vpop.f32.mrb[0].mxu0
      %v1000 = vadd.f32 0.0, %v999
      %v1001 = vpop.f32.mrb[0].mxu0
      %v1002 = vpop.f32.mrb[0].mxu0
      %v1003 = vadd.f32 0.0, %v1002
      %v1004 = vpop.f32.mrb[0].mxu0
      %1005 = vdwg.mxu0
      %v1006 = vadd.f32 %v333, %v752
      %v1007 = vadd.f32 %v334, %v755
      %v1008 = vadd.f32 %v335, %v760
      %v1009 = vadd.f32 %v336, %v763
      %v1010 = vadd.f32 %v337, %v768
      %v1011 = vadd.f32 %v338, %v771
      %v1012 = vadd.f32 %v339, %v776
      %v1013 = vadd.f32 %v340, %v779
      %v1014 = vadd.f32 %v341, %v784
      %v1015 = vadd.f32 %v342, %v787
      %v1016 = vadd.f32 %v343, %v792
      %v1017 = vadd.f32 %v344, %v795
      %v1018 = vadd.f32 %v345, %v800
      %v1019 = vadd.f32 %v346, %v803
      %v1020 = vadd.f32 %v347, %v808
      %v1021 = vadd.f32 %v348, %v811
      %v1022 = vadd.f32 %v349, %v816
      %v1023 = vadd.f32 %v350, %v819
      %v1024 = vadd.f32 %v351, %v824
      %v1025 = vadd.f32 %v352, %v827
      %v1026 = vadd.f32 %v353, %v832
      %v1027 = vadd.f32 %v354, %v835
      %v1028 = vadd.f32 %v355, %v840
      %v1029 = vadd.f32 %v356, %v843
      %v1030 = vadd.f32 %v357, %v848
      %v1031 = vadd.f32 %v358, %v851
      %v1032 = vadd.f32 %v359, %v856
      %v1033 = vadd.f32 %v360, %v859
      %v1034 = vadd.f32 %v361, %v864
      %v1035 = vadd.f32 %v362, %v867
      %v1036 = vadd.f32 %v363, %v872
      %v1037 = vadd.f32 %v364, %v875
      %v1038 = vadd.f32 %v365, %v880
      %v1039 = vadd.f32 %v366, %v883
      %v1040 = vadd.f32 %v367, %v888
      %v1041 = vadd.f32 %v368, %v891
      %v1042 = vadd.f32 %v369, %v896
      %v1043 = vadd.f32 %v370, %v899
      %v1044 = vadd.f32 %v371, %v904
      %v1045 = vadd.f32 %v372, %v907
      %v1046 = vadd.f32 %v373, %v912
      %v1047 = vadd.f32 %v374, %v915
      %v1048 = vadd.f32 %v375, %v920
      %v1049 = vadd.f32 %v376, %v923
      %v1050 = vadd.f32 %v377, %v928
      %v1051 = vadd.f32 %v378, %v931
      %v1052 = vadd.f32 %v379, %v936
      %v1053 = vadd.f32 %v380, %v939
      %v1054 = vadd.f32 %v381, %v944
      %v1055 = vadd.f32 %v382, %v947
      %v1056 = vadd.f32 %v383, %v952
      %v1057 = vadd.f32 %v384, %v955
      %v1058 = vadd.f32 %v385, %v960
      %v1059 = vadd.f32 %v386, %v963
      %v1060 = vadd.f32 %v387, %v968
      %v1061 = vadd.f32 %v388, %v971
      %v1062 = vadd.f32 %v389, %v976
      %v1063 = vadd.f32 %v390, %v979
      %v1064 = vadd.f32 %v391, %v984
      %v1065 = vadd.f32 %v392, %v987
      %v1066 = vadd.f32 %v393, %v992
      %v1067 = vadd.f32 %v394, %v995
      %v1068 = vadd.f32 %v395, %v1000
      %v1069 = vadd.f32 %v396, %v1003
      %1070 = vst [vmem:[#allocation2] sm:$0xff] %v1006
      %1071 = vst [vmem:[#allocation2 + $0x8] sm:$0xff] %v1007
      %1072 = vst [vmem:[#allocation2 + $0x10] sm:$0xff] %v1008
      %1073 = vst [vmem:[#allocation2 + $0x18] sm:$0xff] %v1009
      %1074 = vst [vmem:[#allocation2 + $0x20] sm:$0xff] %v1010
      %1075 = vst [vmem:[#allocation2 + $0x28] sm:$0xff] %v1011
      %1076 = vst [vmem:[#allocation2 + $0x30] sm:$0xff] %v1012
      %1077 = vst [vmem:[#allocation2 + $0x38] sm:$0xff] %v1013
      %1078 = vst [vmem:[#allocation2 + $0x40] sm:$0xff] %v1014
      %1079 = vst [vmem:[#allocation2 + $0x48] sm:$0xff] %v1015
      %1080 = vst [vmem:[#allocation2 + $0x50] sm:$0xff] %v1016
      %1081 = vst [vmem:[#allocation2 + $0x58] sm:$0xff] %v1017
      %1082 = vst [vmem:[#allocation2 + $0x60] sm:$0xff] %v1018
      %1083 = vst [vmem:[#allocation2 + $0x68] sm:$0xff] %v1019
      %1084 = vst [vmem:[#allocation2 + $0x70] sm:$0xff] %v1020
      %1085 = vst [vmem:[#allocation2 + $0x78] sm:$0xff] %v1021
      %1086 = vst [vmem:[#allocation2 + $0x80] sm:$0xff] %v1022
      %1087 = vst [vmem:[#allocation2 + $0x88] sm:$0xff] %v1023
      %1088 = vst [vmem:[#allocation2 + $0x90] sm:$0xff] %v1024
      %1089 = vst [vmem:[#allocation2 + $0x98] sm:$0xff] %v1025
      %1090 = vst [vmem:[#allocation2 + $0xa0] sm:$0xff] %v1026
      %1091 = vst [vmem:[#allocation2 + $0xa8] sm:$0xff] %v1027
      %1092 = vst [vmem:[#allocation2 + $0xb0] sm:$0xff] %v1028
      %1093 = vst [vmem:[#allocation2 + $0xb8] sm:$0xff] %v1029
      %1094 = vst [vmem:[#allocation2 + $0xc0] sm:$0xff] %v1030
      %1095 = vst [vmem:[#allocation2 + $0xc8] sm:$0xff] %v1031
      %1096 = vst [vmem:[#allocation2 + $0xd0] sm:$0xff] %v1032
      %1097 = vst [vmem:[#allocation2 + $0xd8] sm:$0xff] %v1033
      %1098 = vst [vmem:[#allocation2 + $0xe0] sm:$0xff] %v1034
      %1099 = vst [vmem:[#allocation2 + $0xe8] sm:$0xff] %v1035
      %1100 = vst [vmem:[#allocation2 + $0xf0] sm:$0xff] %v1036
      %1101 = vst [vmem:[#allocation2 + $0xf8] sm:$0xff] %v1037
      %1102 = vst [vmem:[#allocation2 + $0x100] sm:$0xff] %v1038
      %1103 = vst [vmem:[#allocation2 + $0x108] sm:$0xff] %v1039
      %1104 = vst [vmem:[#allocation2 + $0x110] sm:$0xff] %v1040
      %1105 = vst [vmem:[#allocation2 + $0x118] sm:$0xff] %v1041
      %1106 = vst [vmem:[#allocation2 + $0x120] sm:$0xff] %v1042
      %1107 = vst [vmem:[#allocation2 + $0x128] sm:$0xff] %v1043
      %1108 = vst [vmem:[#allocation2 + $0x130] sm:$0xff] %v1044
      %1109 = vst [vmem:[#allocation2 + $0x138] sm:$0xff] %v1045
      %1110 = vst [vmem:[#allocation2 + $0x140] sm:$0xff] %v1046
      %1111 = vst [vmem:[#allocation2 + $0x148] sm:$0xff] %v1047
      %1112 = vst [vmem:[#allocation2 + $0x150] sm:$0xff] %v1048
      %1113 = vst [vmem:[#allocation2 + $0x158] sm:$0xff] %v1049
      %1114 = vst [vmem:[#allocation2 + $0x160] sm:$0xff] %v1050
      %1115 = vst [vmem:[#allocation2 + $0x168] sm:$0xff] %v1051
      %1116 = vst [vmem:[#allocation2 + $0x170] sm:$0xff] %v1052
      %1117 = vst [vmem:[#allocation2 + $0x178] sm:$0xff] %v1053
      %1118 = vst [vmem:[#allocation2 + $0x180] sm:$0xff] %v1054
      %1119 = vst [vmem:[#allocation2 + $0x188] sm:$0xff] %v1055
      %1120 = vst [vmem:[#allocation2 + $0x190] sm:$0xff] %v1056
      %1121 = vst [vmem:[#allocation2 + $0x198] sm:$0xff] %v1057
      %1122 = vst [vmem:[#allocation2 + $0x1a0] sm:$0xff] %v1058
      %1123 = vst [vmem:[#allocation2 + $0x1a8] sm:$0xff] %v1059
      %1124 = vst [vmem:[#allocation2 + $0x1b0] sm:$0xff] %v1060
      %1125 = vst [vmem:[#allocation2 + $0x1b8] sm:$0xff] %v1061
      %1126 = vst [vmem:[#allocation2 + $0x1c0] sm:$0xff] %v1062
      %1127 = vst [vmem:[#allocation2 + $0x1c8] sm:$0xff] %v1063
      %1128 = vst [vmem:[#allocation2 + $0x1d0] sm:$0xff] %v1064
      %1129 = vst [vmem:[#allocation2 + $0x1d8] sm:$0xff] %v1065
      %1130 = vst [vmem:[#allocation2 + $0x1e0] sm:$0xff] %v1066
      %1131 = vst [vmem:[#allocation2 + $0x1e8] sm:$0xff] %v1067
      %1132 = vst [vmem:[#allocation2 + $0x1f0] sm:$0xff] %v1068
      %1133 = vst [vmem:[#allocation2 + $0x1f8] sm:$0xff] %v1069
      // Predicated region
      $region33: #{conv_bn_lrelu.2} parent=27 // pred_check
        %p1134 = pneg %p265
      $region34: #{conv_bn_lrelu.2} parent=27 // pred_check_branch
        %1136 = sbr.rel (%p1134) target = $region36
      $region35: #{conv_bn_lrelu.2} parent=27 // pred_region
        %v1137 = vld [vmem:[#allocation2] sm:$0xff]
        %v1138 = vld [vmem:[#allocation2 + $0x8] sm:$0xff]
        %v1139 = vld [vmem:[#allocation2 + $0x10] sm:$0xff]
        %v1140 = vld [vmem:[#allocation2 + $0x18] sm:$0xff]
        %v1141 = vld [vmem:[#allocation2 + $0x20] sm:$0xff]
        %v1142 = vld [vmem:[#allocation2 + $0x28] sm:$0xff]
        %v1143 = vld [vmem:[#allocation2 + $0x30] sm:$0xff]
        %v1144 = vld [vmem:[#allocation2 + $0x38] sm:$0xff]
        %v1145 = vld [vmem:[#allocation2 + $0x40] sm:$0xff]
        %v1146 = vld [vmem:[#allocation2 + $0x48] sm:$0xff]
        %v1147 = vld [vmem:[#allocation2 + $0x50] sm:$0xff]
        %v1148 = vld [vmem:[#allocation2 + $0x58] sm:$0xff]
        %v1149 = vld [vmem:[#allocation2 + $0x60] sm:$0xff]
        %v1150 = vld [vmem:[#allocation2 + $0x68] sm:$0xff]
        %v1151 = vld [vmem:[#allocation2 + $0x70] sm:$0xff]
        %v1152 = vld [vmem:[#allocation2 + $0x78] sm:$0xff]
        %v1153 = vld [vmem:[#allocation2 + $0x80] sm:$0xff]
        %v1154 = vld [vmem:[#allocation2 + $0x88] sm:$0xff]
        %v1155 = vld [vmem:[#allocation2 + $0x90] sm:$0xff]
        %v1156 = vld [vmem:[#allocation2 + $0x98] sm:$0xff]
        %v1157 = vld [vmem:[#allocation2 + $0xa0] sm:$0xff]
        %v1158 = vld [vmem:[#allocation2 + $0xa8] sm:$0xff]
        %v1159 = vld [vmem:[#allocation2 + $0xb0] sm:$0xff]
        %v1160 = vld [vmem:[#allocation2 + $0xb8] sm:$0xff]
        %v1161 = vld [vmem:[#allocation2 + $0xc0] sm:$0xff]
        %v1162 = vld [vmem:[#allocation2 + $0xc8] sm:$0xff]
        %v1163 = vld [vmem:[#allocation2 + $0xd0] sm:$0xff]
        %v1164 = vld [vmem:[#allocation2 + $0xd8] sm:$0xff]
        %v1165 = vld [vmem:[#allocation2 + $0xe0] sm:$0xff]
        %v1166 = vld [vmem:[#allocation2 + $0xe8] sm:$0xff]
        %v1167 = vld [vmem:[#allocation2 + $0xf0] sm:$0xff]
        %v1168 = vld [vmem:[#allocation2 + $0xf8] sm:$0xff]
        %v1169 = vld [vmem:[#allocation2 + $0x100] sm:$0xff]
        %v1170 = vld [vmem:[#allocation2 + $0x108] sm:$0xff]
        %v1171 = vld [vmem:[#allocation2 + $0x110] sm:$0xff]
        %v1172 = vld [vmem:[#allocation2 + $0x118] sm:$0xff]
        %v1173 = vld [vmem:[#allocation2 + $0x120] sm:$0xff]
        %v1174 = vld [vmem:[#allocation2 + $0x128] sm:$0xff]
        %v1175 = vld [vmem:[#allocation2 + $0x130] sm:$0xff]
        %v1176 = vld [vmem:[#allocation2 + $0x138] sm:$0xff]
        %v1177 = vld [vmem:[#allocation2 + $0x140] sm:$0xff]
        %v1178 = vld [vmem:[#allocation2 + $0x148] sm:$0xff]
        %v1179 = vld [vmem:[#allocation2 + $0x150] sm:$0xff]
        %v1180 = vld [vmem:[#allocation2 + $0x158] sm:$0xff]
        %v1181 = vld [vmem:[#allocation2 + $0x160] sm:$0xff]
        %v1182 = vld [vmem:[#allocation2 + $0x168] sm:$0xff]
        %v1183 = vld [vmem:[#allocation2 + $0x170] sm:$0xff]
        %v1184 = vld [vmem:[#allocation2 + $0x178] sm:$0xff]
        %v1185 = vld [vmem:[#allocation2 + $0x180] sm:$0xff]
        %v1186 = vld [vmem:[#allocation2 + $0x188] sm:$0xff]
        %v1187 = vld [vmem:[#allocation2 + $0x190] sm:$0xff]
        %v1188 = vld [vmem:[#allocation2 + $0x198] sm:$0xff]
        %v1189 = vld [vmem:[#allocation2 + $0x1a0] sm:$0xff]
        %v1190 = vld [vmem:[#allocation2 + $0x1a8] sm:$0xff]
        %v1191 = vld [vmem:[#allocation2 + $0x1b0] sm:$0xff]
        %v1192 = vld [vmem:[#allocation2 + $0x1b8] sm:$0xff]
        %v1193 = vld [vmem:[#allocation2 + $0x1c0] sm:$0xff]
        %v1194 = vld [vmem:[#allocation2 + $0x1c8] sm:$0xff]
        %v1195 = vld [vmem:[#allocation2 + $0x1d0] sm:$0xff]
        %v1196 = vld [vmem:[#allocation2 + $0x1d8] sm:$0xff]
        %v1197 = vld [vmem:[#allocation2 + $0x1e0] sm:$0xff]
        %v1198 = vld [vmem:[#allocation2 + $0x1e8] sm:$0xff]
        %v1199 = vld [vmem:[#allocation2 + $0x1f0] sm:$0xff]
        %v1200 = vld [vmem:[#allocation2 + $0x1f8] sm:$0xff]
        %v1201 = vpack.c.bf16 %v1138, %v1137
        %v1202 = vpack.c.bf16 %v1140, %v1139
        %v1203 = vpack.c.bf16 %v1142, %v1141
        %v1204 = vpack.c.bf16 %v1144, %v1143
        %v1205 = vpack.c.bf16 %v1146, %v1145
        %v1206 = vpack.c.bf16 %v1148, %v1147
        %v1207 = vpack.c.bf16 %v1150, %v1149
        %v1208 = vpack.c.bf16 %v1152, %v1151
        %v1209 = vpack.c.bf16 %v1154, %v1153
        %v1210 = vpack.c.bf16 %v1156, %v1155
        %v1211 = vpack.c.bf16 %v1158, %v1157
        %v1212 = vpack.c.bf16 %v1160, %v1159
        %v1213 = vpack.c.bf16 %v1162, %v1161
        %v1214 = vpack.c.bf16 %v1164, %v1163
        %v1215 = vpack.c.bf16 %v1166, %v1165
        %v1216 = vpack.c.bf16 %v1168, %v1167
        %v1217 = vpack.c.bf16 %v1170, %v1169
        %v1218 = vpack.c.bf16 %v1172, %v1171
        %v1219 = vpack.c.bf16 %v1174, %v1173
        %v1220 = vpack.c.bf16 %v1176, %v1175
        %v1221 = vpack.c.bf16 %v1178, %v1177
        %v1222 = vpack.c.bf16 %v1180, %v1179
        %v1223 = vpack.c.bf16 %v1182, %v1181
        %v1224 = vpack.c.bf16 %v1184, %v1183
        %v1225 = vpack.c.bf16 %v1186, %v1185
        %v1226 = vpack.c.bf16 %v1188, %v1187
        %v1227 = vpack.c.bf16 %v1190, %v1189
        %v1228 = vpack.c.bf16 %v1192, %v1191
        %v1229 = vpack.c.bf16 %v1194, %v1193
        %v1230 = vpack.c.bf16 %v1196, %v1195
        %v1231 = vpack.c.bf16 %v1198, %v1197
        %v1232 = vpack.c.bf16 %v1200, %v1199
        %v1265 = vunpack.c.l.b16 %v1201
        %v1266 = vunpack.c.h.b16 %v1201
        %v1267 = vunpack.c.l.b16 %v1202
        %v1268 = vunpack.c.h.b16 %v1202
        %v1269 = vunpack.c.l.b16 %v1203
        %v1270 = vunpack.c.h.b16 %v1203
        %v1271 = vunpack.c.l.b16 %v1204
        %v1272 = vunpack.c.h.b16 %v1204
        %v1273 = vunpack.c.l.b16 %v1205
        %v1274 = vunpack.c.h.b16 %v1205
        %v1275 = vunpack.c.l.b16 %v1206
        %v1276 = vunpack.c.h.b16 %v1206
        %v1277 = vunpack.c.l.b16 %v1207
        %v1278 = vunpack.c.h.b16 %v1207
        %v1279 = vunpack.c.l.b16 %v1208
        %v1280 = vunpack.c.h.b16 %v1208
        %v1281 = vunpack.c.l.b16 %v1209
        %v1282 = vunpack.c.h.b16 %v1209
        %v1283 = vunpack.c.l.b16 %v1210
        %v1284 = vunpack.c.h.b16 %v1210
        %v1285 = vunpack.c.l.b16 %v1211
        %v1286 = vunpack.c.h.b16 %v1211
        %v1287 = vunpack.c.l.b16 %v1212
        %v1288 = vunpack.c.h.b16 %v1212
        %v1289 = vunpack.c.l.b16 %v1213
        %v1290 = vunpack.c.h.b16 %v1213
        %v1291 = vunpack.c.l.b16 %v1214
        %v1292 = vunpack.c.h.b16 %v1214
        %v1293 = vunpack.c.l.b16 %v1215
        %v1294 = vunpack.c.h.b16 %v1215
        %v1295 = vunpack.c.l.b16 %v1216
        %v1296 = vunpack.c.h.b16 %v1216
        %v1297 = vunpack.c.l.b16 %v1217
        %v1298 = vunpack.c.h.b16 %v1217
        %v1299 = vunpack.c.l.b16 %v1218
        %v1300 = vunpack.c.h.b16 %v1218
        %v1301 = vunpack.c.l.b16 %v1219
        %v1302 = vunpack.c.h.b16 %v1219
        %v1303 = vunpack.c.l.b16 %v1220
        %v1304 = vunpack.c.h.b16 %v1220
        %v1305 = vunpack.c.l.b16 %v1221
        %v1306 = vunpack.c.h.b16 %v1221
        %v1307 = vunpack.c.l.b16 %v1222
        %v1308 = vunpack.c.h.b16 %v1222
        %v1309 = vunpack.c.l.b16 %v1223
        %v1310 = vunpack.c.h.b16 %v1223
        %v1311 = vunpack.c.l.b16 %v1224
        %v1312 = vunpack.c.h.b16 %v1224
        %v1313 = vunpack.c.l.b16 %v1225
        %v1314 = vunpack.c.h.b16 %v1225
        %v1315 = vunpack.c.l.b16 %v1226
        %v1316 = vunpack.c.h.b16 %v1226
        %v1317 = vunpack.c.l.b16 %v1227
        %v1318 = vunpack.c.h.b16 %v1227
        %v1319 = vunpack.c.l.b16 %v1228
        %v1320 = vunpack.c.h.b16 %v1228
        %v1321 = vunpack.c.l.b16 %v1229
        %v1322 = vunpack.c.h.b16 %v1229
        %v1323 = vunpack.c.l.b16 %v1230
        %v1324 = vunpack.c.h.b16 %v1230
        %v1325 = vunpack.c.l.b16 %v1231
        %v1326 = vunpack.c.h.b16 %v1231
        %v1327 = vunpack.c.l.b16 %v1232
        %v1328 = vunpack.c.h.b16 %v1232
        %v1329 = vpack.c.b16 %v1265, %v1265
        %v1330 = vpack.c.b16 %v1266, %v1266
        %v1331 = vpack.c.b16 %v1267, %v1267
        %v1332 = vpack.c.b16 %v1268, %v1268
        %v1333 = vpack.c.b16 %v1269, %v1269
        %v1334 = vpack.c.b16 %v1270, %v1270
        %v1335 = vpack.c.b16 %v1271, %v1271
        %v1336 = vpack.c.b16 %v1272, %v1272
        %v1337 = vpack.c.b16 %v1273, %v1273
        %v1338 = vpack.c.b16 %v1274, %v1274
        %v1339 = vpack.c.b16 %v1275, %v1275
        %v1340 = vpack.c.b16 %v1276, %v1276
        %v1341 = vpack.c.b16 %v1277, %v1277
        %v1342 = vpack.c.b16 %v1278, %v1278
        %v1343 = vpack.c.b16 %v1279, %v1279
        %v1344 = vpack.c.b16 %v1280, %v1280
        %v1345 = vpack.c.b16 %v1281, %v1281
        %v1346 = vpack.c.b16 %v1282, %v1282
        %v1347 = vpack.c.b16 %v1283, %v1283
        %v1348 = vpack.c.b16 %v1284, %v1284
        %v1349 = vpack.c.b16 %v1285, %v1285
        %v1350 = vpack.c.b16 %v1286, %v1286
        %v1351 = vpack.c.b16 %v1287, %v1287
        %v1352 = vpack.c.b16 %v1288, %v1288
        %v1353 = vpack.c.b16 %v1289, %v1289
        %v1354 = vpack.c.b16 %v1290, %v1290
        %v1355 = vpack.c.b16 %v1291, %v1291
        %v1356 = vpack.c.b16 %v1292, %v1292
        %v1357 = vpack.c.b16 %v1293, %v1293
        %v1358 = vpack.c.b16 %v1294, %v1294
        %v1359 = vpack.c.b16 %v1295, %v1295
        %v1360 = vpack.c.b16 %v1296, %v1296
        %v1361 = vpack.c.b16 %v1297, %v1297
        %v1362 = vpack.c.b16 %v1298, %v1298
        %v1363 = vpack.c.b16 %v1299, %v1299
        %v1364 = vpack.c.b16 %v1300, %v1300
        %v1365 = vpack.c.b16 %v1301, %v1301
        %v1366 = vpack.c.b16 %v1302, %v1302
        %v1367 = vpack.c.b16 %v1303, %v1303
        %v1368 = vpack.c.b16 %v1304, %v1304
        %v1369 = vpack.c.b16 %v1305, %v1305
        %v1370 = vpack.c.b16 %v1306, %v1306
        %v1371 = vpack.c.b16 %v1307, %v1307
        %v1372 = vpack.c.b16 %v1308, %v1308
        %v1373 = vpack.c.b16 %v1309, %v1309
        %v1374 = vpack.c.b16 %v1310, %v1310
        %v1375 = vpack.c.b16 %v1311, %v1311
        %v1376 = vpack.c.b16 %v1312, %v1312
        %v1377 = vpack.c.b16 %v1313, %v1313
        %v1378 = vpack.c.b16 %v1314, %v1314
        %v1379 = vpack.c.b16 %v1315, %v1315
        %v1380 = vpack.c.b16 %v1316, %v1316
        %v1381 = vpack.c.b16 %v1317, %v1317
        %v1382 = vpack.c.b16 %v1318, %v1318
        %v1383 = vpack.c.b16 %v1319, %v1319
        %v1384 = vpack.c.b16 %v1320, %v1320
        %v1385 = vpack.c.b16 %v1321, %v1321
        %v1386 = vpack.c.b16 %v1322, %v1322
        %v1387 = vpack.c.b16 %v1323, %v1323
        %v1388 = vpack.c.b16 %v1324, %v1324
        %v1389 = vpack.c.b16 %v1325, %v1325
        %v1390 = vpack.c.b16 %v1326, %v1326
        %v1391 = vpack.c.b16 %v1327, %v1327
        %v1392 = vpack.c.b16 %v1328, %v1328
        %1457 = vst [vmem:[%s255] sm:$0xf] %v1329
        %1458 = vst [vmem:[%s255 + $0x4] sm:$0xf] %v1330
        %1459 = vst [vmem:[%s255 + $0x8] sm:$0xf] %v1331
        %1460 = vst [vmem:[%s255 + $0xc] sm:$0xf] %v1332
        %1461 = vst [vmem:[%s255 + $0x10] sm:$0xf] %v1333
        %1462 = vst [vmem:[%s255 + $0x14] sm:$0xf] %v1334
        %1463 = vst [vmem:[%s255 + $0x18] sm:$0xf] %v1335
        %1464 = vst [vmem:[%s255 + $0x1c] sm:$0xf] %v1336
        %1465 = vst [vmem:[%s255 + $0x20] sm:$0xf] %v1337
        %1466 = vst [vmem:[%s255 + $0x24] sm:$0xf] %v1338
        %1467 = vst [vmem:[%s255 + $0x28] sm:$0xf] %v1339
        %1468 = vst [vmem:[%s255 + $0x2c] sm:$0xf] %v1340
        %1469 = vst [vmem:[%s255 + $0x30] sm:$0xf] %v1341
        %1470 = vst [vmem:[%s255 + $0x34] sm:$0xf] %v1342
        %1471 = vst [vmem:[%s255 + $0x38] sm:$0xf] %v1343
        %1472 = vst [vmem:[%s255 + $0x3c] sm:$0xf] %v1344
        %1473 = vst [vmem:[%s255 + $0x40] sm:$0xf] %v1345
        %1474 = vst [vmem:[%s255 + $0x44] sm:$0xf] %v1346
        %1475 = vst [vmem:[%s255 + $0x48] sm:$0xf] %v1347
        %1476 = vst [vmem:[%s255 + $0x4c] sm:$0xf] %v1348
        %1477 = vst [vmem:[%s255 + $0x50] sm:$0xf] %v1349
        %1478 = vst [vmem:[%s255 + $0x54] sm:$0xf] %v1350
        %1479 = vst [vmem:[%s255 + $0x58] sm:$0xf] %v1351
        %1480 = vst [vmem:[%s255 + $0x5c] sm:$0xf] %v1352
        %1481 = vst [vmem:[%s255 + $0x60] sm:$0xf] %v1353
        %1482 = vst [vmem:[%s255 + $0x64] sm:$0xf] %v1354
        %1483 = vst [vmem:[%s255 + $0x68] sm:$0xf] %v1355
        %1484 = vst [vmem:[%s255 + $0x6c] sm:$0xf] %v1356
        %1485 = vst [vmem:[%s255 + $0x70] sm:$0xf] %v1357
        %1486 = vst [vmem:[%s255 + $0x74] sm:$0xf] %v1358
        %1487 = vst [vmem:[%s255 + $0x78] sm:$0xf] %v1359
        %1488 = vst [vmem:[%s255 + $0x7c] sm:$0xf] %v1360
        %1489 = vst [vmem:[%s255 + $0x80] sm:$0xf] %v1361
        %1490 = vst [vmem:[%s255 + $0x84] sm:$0xf] %v1362
        %1491 = vst [vmem:[%s255 + $0x88] sm:$0xf] %v1363
        %1492 = vst [vmem:[%s255 + $0x8c] sm:$0xf] %v1364
        %1493 = vst [vmem:[%s255 + $0x90] sm:$0xf] %v1365
        %1494 = vst [vmem:[%s255 + $0x94] sm:$0xf] %v1366
        %1495 = vst [vmem:[%s255 + $0x98] sm:$0xf] %v1367
        %1496 = vst [vmem:[%s255 + $0x9c] sm:$0xf] %v1368
        %1497 = vst [vmem:[%s255 + $0xa0] sm:$0xf] %v1369
        %1498 = vst [vmem:[%s255 + $0xa4] sm:$0xf] %v1370
        %1499 = vst [vmem:[%s255 + $0xa8] sm:$0xf] %v1371
        %1500 = vst [vmem:[%s255 + $0xac] sm:$0xf] %v1372
        %1501 = vst [vmem:[%s255 + $0xb0] sm:$0xf] %v1373
        %1502 = vst [vmem:[%s255 + $0xb4] sm:$0xf] %v1374
        %1503 = vst [vmem:[%s255 + $0xb8] sm:$0xf] %v1375
        %1504 = vst [vmem:[%s255 + $0xbc] sm:$0xf] %v1376
        %1505 = vst [vmem:[%s255 + $0xc0] sm:$0xf] %v1377
        %1506 = vst [vmem:[%s255 + $0xc4] sm:$0xf] %v1378
        %1507 = vst [vmem:[%s255 + $0xc8] sm:$0xf] %v1379
        %1508 = vst [vmem:[%s255 + $0xcc] sm:$0xf] %v1380
        %1509 = vst [vmem:[%s255 + $0xd0] sm:$0xf] %v1381
        %1510 = vst [vmem:[%s255 + $0xd4] sm:$0xf] %v1382
        %1511 = vst [vmem:[%s255 + $0xd8] sm:$0xf] %v1383
        %1512 = vst [vmem:[%s255 + $0xdc] sm:$0xf] %v1384
        %1513 = vst [vmem:[%s255 + $0xe0] sm:$0xf] %v1385
        %1514 = vst [vmem:[%s255 + $0xe4] sm:$0xf] %v1386
        %1515 = vst [vmem:[%s255 + $0xe8] sm:$0xf] %v1387
        %1516 = vst [vmem:[%s255 + $0xec] sm:$0xf] %v1388
        %1517 = vst [vmem:[%s255 + $0xf0] sm:$0xf] %v1389
        %1518 = vst [vmem:[%s255 + $0xf4] sm:$0xf] %v1390
        %1519 = vst [vmem:[%s255 + $0xf8] sm:$0xf] %v1391
        %1520 = vst [vmem:[%s255 + $0xfc] sm:$0xf] %v1392
        %v1521 = vadd.f32 %v1137, %v1138
        %v1522 = vadd.f32 %v1521, %v1139
        %v1523 = vadd.f32 %v1522, %v1140
        %v1524 = vadd.f32 %v1523, %v1141
        %v1525 = vadd.f32 %v1524, %v1142
        %v1526 = vadd.f32 %v1525, %v1143
        %v1527 = vadd.f32 %v1526, %v1144
        %v1528 = vadd.f32 %v1527, %v1145
        %v1529 = vadd.f32 %v1528, %v1146
        %v1530 = vadd.f32 %v1529, %v1147
        %v1531 = vadd.f32 %v1530, %v1148
        %v1532 = vadd.f32 %v1531, %v1149
        %v1533 = vadd.f32 %v1532, %v1150
        %v1534 = vadd.f32 %v1533, %v1151
        %v1535 = vadd.f32 %v1534, %v1152
        %v1536 = vadd.f32 %v1535, %v1153
        %v1537 = vadd.f32 %v1536, %v1154
        %v1538 = vadd.f32 %v1537, %v1155
        %v1539 = vadd.f32 %v1538, %v1156
        %v1540 = vadd.f32 %v1539, %v1157
        %v1541 = vadd.f32 %v1540, %v1158
        %v1542 = vadd.f32 %v1541, %v1159
        %v1543 = vadd.f32 %v1542, %v1160
        %v1544 = vadd.f32 %v1543, %v1161
        %v1545 = vadd.f32 %v1544, %v1162
        %v1546 = vadd.f32 %v1545, %v1163
        %v1547 = vadd.f32 %v1546, %v1164
        %v1548 = vadd.f32 %v1547, %v1165
        %v1549 = vadd.f32 %v1548, %v1166
        %v1550 = vadd.f32 %v1549, %v1167
        %v1551 = vadd.f32 %v1550, %v1168
        %v1552 = vadd.f32 %v1551, %v1169
        %v1553 = vadd.f32 %v1552, %v1170
        %v1554 = vadd.f32 %v1553, %v1171
        %v1555 = vadd.f32 %v1554, %v1172
        %v1556 = vadd.f32 %v1555, %v1173
        %v1557 = vadd.f32 %v1556, %v1174
        %v1558 = vadd.f32 %v1557, %v1175
        %v1559 = vadd.f32 %v1558, %v1176
        %v1560 = vadd.f32 %v1559, %v1177
        %v1561 = vadd.f32 %v1560, %v1178
        %v1562 = vadd.f32 %v1561, %v1179
        %v1563 = vadd.f32 %v1562, %v1180
        %v1564 = vadd.f32 %v1563, %v1181
        %v1565 = vadd.f32 %v1564, %v1182
        %v1566 = vadd.f32 %v1565, %v1183
        %v1567 = vadd.f32 %v1566, %v1184
        %v1568 = vadd.f32 %v1567, %v1185
        %v1569 = vadd.f32 %v1568, %v1186
        %v1570 = vadd.f32 %v1569, %v1187
        %v1571 = vadd.f32 %v1570, %v1188
        %v1572 = vadd.f32 %v1571, %v1189
        %v1573 = vadd.f32 %v1572, %v1190
        %v1574 = vadd.f32 %v1573, %v1191
        %v1575 = vadd.f32 %v1574, %v1192
        %v1576 = vadd.f32 %v1575, %v1193
        %v1577 = vadd.f32 %v1576, %v1194
        %v1578 = vadd.f32 %v1577, %v1195
        %v1579 = vadd.f32 %v1578, %v1196
        %v1580 = vadd.f32 %v1579, %v1197
        %v1581 = vadd.f32 %v1580, %v1198
        %v1582 = vadd.f32 %v1581, %v1199
        %v1583 = vadd.f32 %v1582, %v1200
        %v1584 = vrot.slane %v1583, 4
        %v1585 = vadd.f32 %v1583, %v1584
        %v1586 = vrot.slane %v1585, 2
        %v1587 = vadd.f32 %v1585, %v1586
        %v1588 = vrot.slane %v1587, 1
        %v1589 = vadd.f32 %v1587, %v1588
        %v1590 = vmul.f32 %v1137, %v1137
        %v1591 = vmul.f32 %v1138, %v1138
        %v1592 = vmul.f32 %v1139, %v1139
        %v1593 = vmul.f32 %v1140, %v1140
        %v1594 = vmul.f32 %v1141, %v1141
        %v1595 = vmul.f32 %v1142, %v1142
        %v1596 = vmul.f32 %v1143, %v1143
        %v1597 = vmul.f32 %v1144, %v1144
        %v1598 = vmul.f32 %v1145, %v1145
        %v1599 = vmul.f32 %v1146, %v1146
        %v1600 = vmul.f32 %v1147, %v1147
        %v1601 = vmul.f32 %v1148, %v1148
        %v1602 = vmul.f32 %v1149, %v1149
        %v1603 = vmul.f32 %v1150, %v1150
        %v1604 = vmul.f32 %v1151, %v1151
        %v1605 = vmul.f32 %v1152, %v1152
        %v1606 = vmul.f32 %v1153, %v1153
        %v1607 = vmul.f32 %v1154, %v1154
        %v1608 = vmul.f32 %v1155, %v1155
        %v1609 = vmul.f32 %v1156, %v1156
        %v1610 = vmul.f32 %v1157, %v1157
        %v1611 = vmul.f32 %v1158, %v1158
        %v1612 = vmul.f32 %v1159, %v1159
        %v1613 = vmul.f32 %v1160, %v1160
        %v1614 = vmul.f32 %v1161, %v1161
        %v1615 = vmul.f32 %v1162, %v1162
        %v1616 = vmul.f32 %v1163, %v1163
        %v1617 = vmul.f32 %v1164, %v1164
        %v1618 = vmul.f32 %v1165, %v1165
        %v1619 = vmul.f32 %v1166, %v1166
        %v1620 = vmul.f32 %v1167, %v1167
        %v1621 = vmul.f32 %v1168, %v1168
        %v1622 = vmul.f32 %v1169, %v1169
        %v1623 = vmul.f32 %v1170, %v1170
        %v1624 = vmul.f32 %v1171, %v1171
        %v1625 = vmul.f32 %v1172, %v1172
        %v1626 = vmul.f32 %v1173, %v1173
        %v1627 = vmul.f32 %v1174, %v1174
        %v1628 = vmul.f32 %v1175, %v1175
        %v1629 = vmul.f32 %v1176, %v1176
        %v1630 = vmul.f32 %v1177, %v1177
        %v1631 = vmul.f32 %v1178, %v1178
        %v1632 = vmul.f32 %v1179, %v1179
        %v1633 = vmul.f32 %v1180, %v1180
        %v1634 = vmul.f32 %v1181, %v1181
        %v1635 = vmul.f32 %v1182, %v1182
        %v1636 = vmul.f32 %v1183, %v1183
        %v1637 = vmul.f32 %v1184, %v1184
        %v1638 = vmul.f32 %v1185, %v1185
        %v1639 = vmul.f32 %v1186, %v1186
        %v1640 = vmul.f32 %v1187, %v1187
        %v1641 = vmul.f32 %v1188, %v1188
        %v1642 = vmul.f32 %v1189, %v1189
        %v1643 = vmul.f32 %v1190, %v1190
        %v1644 = vmul.f32 %v1191, %v1191
        %v1645 = vmul.f32 %v1192, %v1192
        %v1646 = vmul.f32 %v1193, %v1193
        %v1647 = vmul.f32 %v1194, %v1194
        %v1648 = vmul.f32 %v1195, %v1195
        %v1649 = vmul.f32 %v1196, %v1196
        %v1650 = vmul.f32 %v1197, %v1197
        %v1651 = vmul.f32 %v1198, %v1198
        %v1652 = vmul.f32 %v1199, %v1199
        %v1653 = vmul.f32 %v1200, %v1200
        %v1654 = vadd.f32 %v1590, %v1591
        %v1655 = vadd.f32 %v1654, %v1592
        %v1656 = vadd.f32 %v1655, %v1593
        %v1657 = vadd.f32 %v1656, %v1594
        %v1658 = vadd.f32 %v1657, %v1595
        %v1659 = vadd.f32 %v1658, %v1596
        %v1660 = vadd.f32 %v1659, %v1597
        %v1661 = vadd.f32 %v1660, %v1598
        %v1662 = vadd.f32 %v1661, %v1599
        %v1663 = vadd.f32 %v1662, %v1600
        %v1664 = vadd.f32 %v1663, %v1601
        %v1665 = vadd.f32 %v1664, %v1602
        %v1666 = vadd.f32 %v1665, %v1603
        %v1667 = vadd.f32 %v1666, %v1604
        %v1668 = vadd.f32 %v1667, %v1605
        %v1669 = vadd.f32 %v1668, %v1606
        %v1670 = vadd.f32 %v1669, %v1607
        %v1671 = vadd.f32 %v1670, %v1608
        %v1672 = vadd.f32 %v1671, %v1609
        %v1673 = vadd.f32 %v1672, %v1610
        %v1674 = vadd.f32 %v1673, %v1611
        %v1675 = vadd.f32 %v1674, %v1612
        %v1676 = vadd.f32 %v1675, %v1613
        %v1677 = vadd.f32 %v1676, %v1614
        %v1678 = vadd.f32 %v1677, %v1615
        %v1679 = vadd.f32 %v1678, %v1616
        %v1680 = vadd.f32 %v1679, %v1617
        %v1681 = vadd.f32 %v1680, %v1618
        %v1682 = vadd.f32 %v1681, %v1619
        %v1683 = vadd.f32 %v1682, %v1620
        %v1684 = vadd.f32 %v1683, %v1621
        %v1685 = vadd.f32 %v1684, %v1622
        %v1686 = vadd.f32 %v1685, %v1623
        %v1687 = vadd.f32 %v1686, %v1624
        %v1688 = vadd.f32 %v1687, %v1625
        %v1689 = vadd.f32 %v1688, %v1626
        %v1690 = vadd.f32 %v1689, %v1627
        %v1691 = vadd.f32 %v1690, %v1628
        %v1692 = vadd.f32 %v1691, %v1629
        %v1693 = vadd.f32 %v1692, %v1630
        %v1694 = vadd.f32 %v1693, %v1631
        %v1695 = vadd.f32 %v1694, %v1632
        %v1696 = vadd.f32 %v1695, %v1633
        %v1697 = vadd.f32 %v1696, %v1634
        %v1698 = vadd.f32 %v1697, %v1635
        %v1699 = vadd.f32 %v1698, %v1636
        %v1700 = vadd.f32 %v1699, %v1637
        %v1701 = vadd.f32 %v1700, %v1638
        %v1702 = vadd.f32 %v1701, %v1639
        %v1703 = vadd.f32 %v1702, %v1640
        %v1704 = vadd.f32 %v1703, %v1641
        %v1705 = vadd.f32 %v1704, %v1642
        %v1706 = vadd.f32 %v1705, %v1643
        %v1707 = vadd.f32 %v1706, %v1644
        %v1708 = vadd.f32 %v1707, %v1645
        %v1709 = vadd.f32 %v1708, %v1646
        %v1710 = vadd.f32 %v1709, %v1647
        %v1711 = vadd.f32 %v1710, %v1648
        %v1712 = vadd.f32 %v1711, %v1649
        %v1713 = vadd.f32 %v1712, %v1650
        %v1714 = vadd.f32 %v1713, %v1651
        %v1715 = vadd.f32 %v1714, %v1652
        %v1716 = vadd.f32 %v1715, %v1653
        %v1717 = vrot.slane %v1716, 4
        %v1718 = vadd.f32 %v1716, %v1717
        %v1719 = vrot.slane %v1718, 2
        %v1720 = vadd.f32 %v1718, %v1719
        %v1721 = vrot.slane %v1720, 1
        %v1722 = vadd.f32 %v1720, %v1721
        %v1723 = vlaneseq
        %v1724 = vshrl.u32 %v1723, 7
        %vm1725 = vcmp.eq.s32.totalorder %v1724, 0
        %vm1726 = vcmp.eq.s32.totalorder %v1724, 1
        %v1727 = vsel %vm1726, %v1722, 0.0
        %v1728 = vsel %vm1725, %v1589, %v1727
        %1729 = vst [vmem:[%s263] sm:$0xff] %v1728
      $region36: #{conv_bn_lrelu.2} parent=27 // pred_fallthru
        _
      %s1730 = smul.u32 64, %s20
      %p1731 = scmp.lt.s32.totalorder %s1730, 255
      %s1732 = scalar_select %p1731, %s1730, 255
      %p1733 = scmp.lt.s32.totalorder %s21, 0
      %s1734 = scalar_select %p1733, %s21, 0
      %s1735 = sadd.s32 %s1734, %s1732
      %s1736 = smul.addr %s1735, 4
      %s1737 = scalar_lea.vmem %s2, %s1736
      %p1738 = scmp.lt.s32.totalorder %s20, 3
      %s1739 = scalar_select %p1738, %s20, 3
      %p1740 = scmp.lt.s32.totalorder %s21, 0
      %s1741 = scalar_select %p1740, %s21, 0
      %s1742 = sadd.s32 %s1741, %s1739
      %s1743 = smul.addr %s1742, 8
      %s1744 = scalar_lea.vmem %s3, %s1743
      // Predicated region
      $region37: #{conv_bn_lrelu.2} parent=27 // pred_check
        %p1745 = pneg %p110
      $region38: #{conv_bn_lrelu.2} parent=27 // pred_check_branch
        %1747 = sbr.rel (%p1745) target = $region40
      $region39: #{conv_bn_lrelu.2} parent=27 // pred_region
        %s1748 = smul.u32 64, %s20
      $region40: #{conv_bn_lrelu.2} parent=27 // pred_fallthru
        _
      // Predicated region
      $region41: #{conv_bn_lrelu.2} parent=27 // pred_check
        %p1749 = pneg %p138
      $region42: #{conv_bn_lrelu.2} parent=27 // pred_check_branch
        %1751 = sbr.rel (%p1749) target = $region44
      $region43: #{conv_bn_lrelu.2} parent=27 // pred_region
        _
      $region44: #{conv_bn_lrelu.2} parent=27 // pred_fallthru
        _
    $region28: #{conv_bn_lrelu.2} parent=5 // pred_fallthru
      _
    %p1752 = scmp.le.s32.totalorder 2, %s10
    // Predicated region
    $region45: #{conv_bn_lrelu.2} parent=5 // pred_check
      %p1753 = pneg %p1752
    $region46: #{conv_bn_lrelu.2} parent=5 // pred_check_branch
      %1755 = sbr.rel (%p1753) target = $region48
    $region47: #{conv_bn_lrelu.2} parent=5 // pred_region
      %s1756 = ssub.s32 %s10, 2
      // Predicated region
      $region49: #{conv_bn_lrelu.2} parent=47 // pred_check
        %p1757 = pneg %p116
      $region50: #{conv_bn_lrelu.2} parent=47 // pred_check_branch
        %1759 = sbr.rel (%p1757) target = $region52
      $region51: #{conv_bn_lrelu.2} parent=47 // pred_region
        %s1760 = smul.u32 64, %s23
        %p1761 = scmp.lt.s32.totalorder %s1760, 255
        %s1762 = scalar_select %p1761, %s1760, 255
        %p1763 = scmp.lt.s32.totalorder %s24, 0
        %s1764 = scalar_select %p1763, %s24, 0
        %s1765 = sadd.s32 %s1764, %s1762
        %s1766 = smul.addr %s1765, 4
        %s1767 = scalar_lea.vmem %s2, %s1766
      $region52: #{conv_bn_lrelu.2} parent=47 // pred_fallthru
        _
      // Predicated region
      $region53: #{conv_bn_lrelu.2} parent=47 // pred_check
        %p1768 = pneg %p144
      $region54: #{conv_bn_lrelu.2} parent=47 // pred_check_branch
        %1770 = sbr.rel (%p1768) target = $region56
      $region55: #{conv_bn_lrelu.2} parent=47 // pred_region
        %p1771 = scmp.lt.s32.totalorder %s23, 3
        %s1772 = scalar_select %p1771, %s23, 3
        %p1773 = scmp.lt.s32.totalorder %s24, 0
        %s1774 = scalar_select %p1773, %s24, 0
        %s1775 = sadd.s32 %s1774, %s1772
        %s1776 = smul.addr %s1775, 8
        %s1777 = scalar_lea.vmem %s3, %s1776
      $region56: #{conv_bn_lrelu.2} parent=47 // pred_fallthru
        _
    $region48: #{conv_bn_lrelu.2} parent=5 // pred_fallthru
      _
  $region6: #{conv_bn_lrelu.2} parent=0 // loop_footer
    %s14 = sadd.s32 1, %s10
  $region7: #{conv_bn_lrelu.2} parent=0 // loop_footer_branch
    %9 = sbr.rel target = $region3
  $region8: #{conv_bn_lrelu.2} parent=0 // loop_exit
    _

// kernel: conv_bn_lrelu.3
$region0: #{conv_bn_lrelu.3}
  #allocation0 [shape = 'u32[]', space=smem, size = 0x4, offset = 0x4, fixed_abs, tag = 'smem constant byte address 0x4 - core index']
  #allocation1 [shape = 'u32[144,128]{1,0:T(1,128)}', space=vmem, size = 0x12000, scoped, tag = 'internal scratch']
  %s0 = inlined_call_operand.vmem [shape: bf16[2048,128], index: 0, kind: input, shape index: {}]
  %s1 = inlined_call_operand.vmem [shape: f32[1,128], index: 1, kind: input, shape index: {}]
  %s2 = inlined_call_operand.vmem [shape: f32[1,128], index: 2, kind: input, shape index: {}]
  %s3 = inlined_call_operand.hbm [shape: bf16[2048,128], index: 3, kind: output, shape index: {}]
  %s4 = sld [smem:[#allocation0]]
  $region45: #{conv_bn_lrelu.3} parent=0
    _
  %s6 = ssub.s32 1, %s4
  %s7 = scalar_select 0, %s6, %s4
  $region1: #{conv_bn_lrelu.3} parent=0
    #allocation2 [shape = 'u8[524288]{0}', space=vmem, size = 0x80000, scoped, tag = 'output window, operand 0']
    #allocation3 [shape = 's32[2]{0}', space=sflag, size = 0x8, scoped, tag = 'scoped memory for conv_bn_lrelu.3']
    %8 = vsyncpa [#allocation3], 0
    %s9 = scalar_lea.sflag [#allocation3], 1
    %10 = vsyncpa %s9, 0
    loop: start=0, step=1, limit=4
    $region2: #{conv_bn_lrelu.3} parent=1 // loop_pre_header
      _
    $region3: #{conv_bn_lrelu.3} parent=1 // loop_header
      %s12 = sphi 0, %s16
      %p13 = scmp.ge.s32.totalorder %s12, 4
      %s22 = sphi 0, %s24
      %s25 = sphi 0, %s22
      %s26 = sphi 0, %s25
      %s42 = sphi 0, %s26
      %s46 = sphi 0, %s46
      %s48 = sphi 0, %s46
      %s49 = sphi 0, %s48
      %s63 = sphi 0, %s49
      %s67 = sphi 0, %s67
      %s69 = sphi 0, %s67
      %s70 = sphi 0, %s69
      %s84 = sphi 0, %s70
      %s90 = sphi 0, %s92
      %s93 = sphi 0, %s90
      %s94 = sphi 0, %s93
      %s110 = sphi 0, %s94
    $region4: #{conv_bn_lrelu.3} parent=1 // loop_header_branch
      %15 = sbr.rel (%p13) target = $region8
    $region5: #{conv_bn_lrelu.3} parent=1 // loop_body
      %s17 = ssub.s32 %s12, 1
      %s18 = ssub.s32 %s12, 2
      %s19 = sadd.s32 %s12, 1
      %s20 = ssub.s32 %s12, %s19
      %p21 = scmp.eq.s32.totalorder %s20, 0
      %s23 = sadd.s32 %s22, 1
      %s24 = scalar_select %p21, %s22, %s23
      %p27 = pneg %p21
      %p28 = scmp.eq.s32.totalorder %s12, 1
      %p29 = por %p27, %p28
      %p30 = scmp.ne.s32.totalorder %s22, %s25
      %p31 = scmp.eq.s32.totalorder %s12, 0
      %p32 = por %p30, %p31
      %p33 = scmp.ne.s32.totalorder %s22, %s25
      %p34 = scmp.eq.s32.totalorder %s17, 1
      %p35 = por %p33, %p34
      %p36 = scmp.ne.s32.totalorder %s25, %s26
      %p37 = scmp.eq.s32.totalorder %s17, 0
      %p38 = por %p36, %p37
      %p39 = scmp.ne.s32.totalorder %s25, %s26
      %p40 = scmp.eq.s32.totalorder %s18, 1
      %p41 = por %p39, %p40
      %p43 = scmp.ne.s32.totalorder %s26, %s42
      %p44 = scmp.eq.s32.totalorder %s18, 0
      %p45 = por %p43, %p44
      %s47 = sadd.s32 %s46, 1
      %p50 = scmp.eq.s32.totalorder %s12, 1
      %p51 = scmp.ne.s32.totalorder %s46, %s48
      %p52 = scmp.eq.s32.totalorder %s12, 0
      %p53 = por %p51, %p52
      %p54 = scmp.ne.s32.totalorder %s46, %s48
      %p55 = scmp.eq.s32.totalorder %s17, 1
      %p56 = por %p54, %p55
      %p57 = scmp.ne.s32.totalorder %s48, %s49
      %p58 = scmp.eq.s32.totalorder %s17, 0
      %p59 = por %p57, %p58
      %p60 = scmp.ne.s32.totalorder %s48, %s49
      %p61 = scmp.eq.s32.totalorder %s18, 1
      %p62 = por %p60, %p61
      %p64 = scmp.ne.s32.totalorder %s49, %s63
      %p65 = scmp.eq.s32.totalorder %s18, 0
      %p66 = por %p64, %p65
      %s68 = sadd.s32 %s67, 1
      %p71 = scmp.eq.s32.totalorder %s12, 1
      %p72 = scmp.ne.s32.totalorder %s67, %s69
      %p73 = scmp.eq.s32.totalorder %s12, 0
      %p74 = por %p72, %p73
      %p75 = scmp.ne.s32.totalorder %s67, %s69
      %p76 = scmp.eq.s32.totalorder %s17, 1
      %p77 = por %p75, %p76
      %p78 = scmp.ne.s32.totalorder %s69, %s70
      %p79 = scmp.eq.s32.totalorder %s17, 0
      %p80 = por %p78, %p79
      %p81 = scmp.ne.s32.totalorder %s69, %s70
      %p82 = scmp.eq.s32.totalorder %s18, 1
      %p83 = por %p81, %p82
      %p85 = scmp.ne.s32.totalorder %s70, %s84
      %p86 = scmp.eq.s32.totalorder %s18, 0
      %p87 = por %p85, %p86
      %s88 = ssub.s32 %s12, %s19
      %p89 = scmp.eq.s32.totalorder %s88, 0
      %s91 = sadd.s32 %s90, 1
      %s92 = scalar_select %p89, %s90, %s91
      %p95 = pneg %p89
      %p96 = scmp.eq.s32.totalorder %s12, 1
      %p97 = por %p95, %p96
      %p98 = scmp.ne.s32.totalorder %s90, %s93
      %p99 = scmp.eq.s32.totalorder %s12, 0
      %p100 = por %p98, %p99
      %p101 = scmp.ne.s32.totalorder %s90, %s93
      %p102 = scmp.eq.s32.totalorder %s17, 1
      %p103 = por %p101, %p102
      %p104 = scmp.ne.s32.totalorder %s93, %s94
      %p105 = scmp.eq.s32.totalorder %s17, 0
      %p106 = por %p104, %p105
      %p107 = scmp.ne.s32.totalorder %s93, %s94
      %p108 = scmp.eq.s32.totalorder %s18, 1
      %p109 = por %p107, %p108
      %p111 = scmp.ne.s32.totalorder %s94, %s110
      %p112 = scmp.eq.s32.totalorder %s18, 0
      %p113 = por %p111, %p112
      %p114 = scmp.le.s32.totalorder 1, %s12
      %p115 = scmp.lt.s32.totalorder %s12, 3
      %p116 = pnand %p114, %p115
      %p117 = pneg %p116
      // Predicated region
      $region9: #{conv_bn_lrelu.3} parent=5 // pred_check
        _
      $region10: #{conv_bn_lrelu.3} parent=5 // pred_check_branch
        %119 = sbr.rel (%p116) target = $region12
      $region11: #{conv_bn_lrelu.3} parent=5 // pred_region
        %s120 = ssub.s32 %s12, 1
        // Predicated region
        $region13: #{conv_bn_lrelu.3} parent=11 // pred_check
          %p121 = pneg %p59
        $region14: #{conv_bn_lrelu.3} parent=11 // pred_check_branch
          %123 = sbr.rel (%p121) target = $region16
        $region15: #{conv_bn_lrelu.3} parent=11 // pred_region
          _
        $region16: #{conv_bn_lrelu.3} parent=11 // pred_fallthru
          _
        // Predicated region
        $region17: #{conv_bn_lrelu.3} parent=11 // pred_check
          %p124 = pneg %p80
        $region18: #{conv_bn_lrelu.3} parent=11 // pred_check_branch
          %126 = sbr.rel (%p124) target = $region20
        $region19: #{conv_bn_lrelu.3} parent=11 // pred_region
          _
        $region20: #{conv_bn_lrelu.3} parent=11 // pred_fallthru
          _
      $region12: #{conv_bn_lrelu.3} parent=5 // pred_fallthru
        _
      %p127 = scmp.lt.s32.totalorder %s12, 2
      // Predicated region
      $region21: #{conv_bn_lrelu.3} parent=5 // pred_check
        %p128 = pneg %p127
      $region22: #{conv_bn_lrelu.3} parent=5 // pred_check_branch
        %130 = sbr.rel (%p128) target = $region24
      $region23: #{conv_bn_lrelu.3} parent=5 // pred_region
        // Predicated region
        $region25: #{conv_bn_lrelu.3} parent=23 // pred_check
          %p131 = pneg %p32
        $region26: #{conv_bn_lrelu.3} parent=23 // pred_check_branch
          %133 = sbr.rel (%p131) target = $region28
        $region27: #{conv_bn_lrelu.3} parent=23 // pred_region
          %s134 = smul.u32 128, %s12
          %p135 = scmp.lt.s32.totalorder %s134, 255
          %s136 = scalar_select %p135, %s134, 255
          %s137 = smul.addr %s136, 4
          %s138 = scalar_lea.vmem %s0, %s137
          %s139 = smul.u32 128, %s12
        $region28: #{conv_bn_lrelu.3} parent=23 // pred_fallthru
          _
      $region24: #{conv_bn_lrelu.3} parent=5 // pred_fallthru
        _
      %p140 = scmp.le.s32.totalorder 1, %s12
      %p141 = scmp.lt.s32.totalorder %s12, 3
      %p142 = pnand %p140, %p141
      %p143 = pneg %p142
      // Predicated region
      $region29: #{conv_bn_lrelu.3} parent=5 // pred_check
        _
      $region30: #{conv_bn_lrelu.3} parent=5 // pred_check_branch
        %145 = sbr.rel (%p142) target = $region32
      $region31: #{conv_bn_lrelu.3} parent=5 // pred_region
        %s146 = ssub.s32 %s12, 1
        %s147 = smul.u32 128, %s17
        %p148 = scmp.lt.s32.totalorder %s147, 255
        %s149 = scalar_select %p148, %s147, 255
        %s150 = smul.addr %s149, 4
        %s151 = scalar_lea.vmem %s0, %s150
        %p152 = pneg %p38
        %p153 = pneg %p35
        %p154 = pneg %p59
        %p155 = pneg %p56
        %p156 = pneg %p80
        %p157 = pneg %p77
        %p158 = pneg %p106
        %p159 = pneg %p103
        %s160 = sand.u32 %s93, 1
        %s161 = scalar_lea.sflag [#allocation3], %s160
        %s162 = sand.u32 %s93, 1
        %s163 = smul.addr %s162, 512
        %s164 = scalar_lea.vmem [#allocation2], %s163
        %s165 = smul.u32 128, %s17
        %p166 = scmp.lt.s32.totalorder %s165, 255
        %s167 = scalar_select %p166, %s165, 255
        %s168 = smul.addr %s167, 4
        %s169 = scalar_lea.vmem %s0, %s168
        %s170 = smul.u32 128, %s17
        %s171 = smul.u32 128, %s17
        %v172 = vld [vmem:[%s169] sm:$0xf]
        %v173 = vld [vmem:[%s169 + $0x4] sm:$0xf]
        %v174 = vld [vmem:[%s169 + $0x8] sm:$0xf]
        %v175 = vld [vmem:[%s169 + $0xc] sm:$0xf]
        %v176 = vld [vmem:[%s169 + $0x10] sm:$0xf]
        %v177 = vld [vmem:[%s169 + $0x14] sm:$0xf]
        %v178 = vld [vmem:[%s169 + $0x18] sm:$0xf]
        %v179 = vld [vmem:[%s169 + $0x1c] sm:$0xf]
        %v180 = vld [vmem:[%s169 + $0x20] sm:$0xf]
        %v181 = vld [vmem:[%s169 + $0x24] sm:$0xf]
        %v182 = vld [vmem:[%s169 + $0x28] sm:$0xf]
        %v183 = vld [vmem:[%s169 + $0x2c] sm:$0xf]
        %v184 = vld [vmem:[%s169 + $0x30] sm:$0xf]
        %v185 = vld [vmem:[%s169 + $0x34] sm:$0xf]
        %v186 = vld [vmem:[%s169 + $0x38] sm:$0xf]
        %v187 = vld [vmem:[%s169 + $0x3c] sm:$0xf]
        %v188 = vld [vmem:[%s169 + $0x40] sm:$0xf]
        %v189 = vld [vmem:[%s169 + $0x44] sm:$0xf]
        %v190 = vld [vmem:[%s169 + $0x48] sm:$0xf]
        %v191 = vld [vmem:[%s169 + $0x4c] sm:$0xf]
        %v192 = vld [vmem:[%s169 + $0x50] sm:$0xf]
        %v193 = vld [vmem:[%s169 + $0x54] sm:$0xf]
        %v194 = vld [vmem:[%s169 + $0x58] sm:$0xf]
        %v195 = vld [vmem:[%s169 + $0x5c] sm:$0xf]
        %v196 = vld [vmem:[%s169 + $0x60] sm:$0xf]
        %v197 = vld [vmem:[%s169 + $0x64] sm:$0xf]
        %v198 = vld [vmem:[%s169 + $0x68] sm:$0xf]
        %v199 = vld [vmem:[%s169 + $0x6c] sm:$0xf]
        %v200 = vld [vmem:[%s169 + $0x70] sm:$0xf]
        %v201 = vld [vmem:[%s169 + $0x74] sm:$0xf]
        %v202 = vld [vmem:[%s169 + $0x78] sm:$0xf]
        %v203 = vld [vmem:[%s169 + $0x7c] sm:$0xf]
        %v204 = vld [vmem:[%s169 + $0x80] sm:$0xf]
        %v205 = vld [vmem:[%s169 + $0x84] sm:$0xf]
        %v206 = vld [vmem:[%s169 + $0x88] sm:$0xf]
        %v207 = vld [vmem:[%s169 + $0x8c] sm:$0xf]
        %v208 = vld [vmem:[%s169 + $0x90] sm:$0xf]
        %v209 = vld [vmem:[%s169 + $0x94] sm:$0xf]
        %v210 = vld [vmem:[%s169 + $0x98] sm:$0xf]
        %v211 = vld [vmem:[%s169 + $0x9c] sm:$0xf]
        %v212 = vld [vmem:[%s169 + $0xa0] sm:$0xf]
        %v213 = vld [vmem:[%s169 + $0xa4] sm:$0xf]
        %v214 = vld [vmem:[%s169 + $0xa8] sm:$0xf]
        %v215 = vld [vmem:[%s169 + $0xac] sm:$0xf]
        %v216 = vld [vmem:[%s169 + $0xb0] sm:$0xf]
        %v217 = vld [vmem:[%s169 + $0xb4] sm:$0xf]
        %v218 = vld [vmem:[%s169 + $0xb8] sm:$0xf]
        %v219 = vld [vmem:[%s169 + $0xbc] sm:$0xf]
        %v220 = vld [vmem:[%s169 + $0xc0] sm:$0xf]
        %v221 = vld [vmem:[%s169 + $0xc4] sm:$0xf]
        %v222 = vld [vmem:[%s169 + $0xc8] sm:$0xf]
        %v223 = vld [vmem:[%s169 + $0xcc] sm:$0xf]
        %v224 = vld [vmem:[%s169 + $0xd0] sm:$0xf]
        %v225 = vld [vmem:[%s169 + $0xd4] sm:$0xf]
        %v226 = vld [vmem:[%s169 + $0xd8] sm:$0xf]
        %v227 = vld [vmem:[%s169 + $0xdc] sm:$0xf]
        %v228 = vld [vmem:[%s169 + $0xe0] sm:$0xf]
        %v229 = vld [vmem:[%s169 + $0xe4] sm:$0xf]
        %v230 = vld [vmem:[%s169 + $0xe8] sm:$0xf]
        %v231 = vld [vmem:[%s169 + $0xec] sm:$0xf]
        %v232 = vld [vmem:[%s169 + $0xf0] sm:$0xf]
        %v233 = vld [vmem:[%s169 + $0xf4] sm:$0xf]
        %v234 = vld [vmem:[%s169 + $0xf8] sm:$0xf]
        %v235 = vld [vmem:[%s169 + $0xfc] sm:$0xf]
        %v236 = vld [vmem:[%s169 + $0x100] sm:$0xf]
        %v237 = vld [vmem:[%s169 + $0x104] sm:$0xf]
        %v238 = vld [vmem:[%s169 + $0x108] sm:$0xf]
        %v239 = vld [vmem:[%s169 + $0x10c] sm:$0xf]
        %v240 = vld [vmem:[%s169 + $0x110] sm:$0xf]
        %v241 = vld [vmem:[%s169 + $0x114] sm:$0xf]
        %v242 = vld [vmem:[%s169 + $0x118] sm:$0xf]
        %v243 = vld [vmem:[%s169 + $0x11c] sm:$0xf]
        %v244 = vld [vmem:[%s169 + $0x120] sm:$0xf]
        %v245 = vld [vmem:[%s169 + $0x124] sm:$0xf]
        %v246 = vld [vmem:[%s169 + $0x128] sm:$0xf]
        %v247 = vld [vmem:[%s169 + $0x12c] sm:$0xf]
        %v248 = vld [vmem:[%s169 + $0x130] sm:$0xf]
        %v249 = vld [vmem:[%s169 + $0x134] sm:$0xf]
        %v250 = vld [vmem:[%s169 + $0x138] sm:$0xf]
        %v251 = vld [vmem:[%s169 + $0x13c] sm:$0xf]
        %v252 = vld [vmem:[%s169 + $0x140] sm:$0xf]
        %v253 = vld [vmem:[%s169 + $0x144] sm:$0xf]
        %v254 = vld [vmem:[%s169 + $0x148] sm:$0xf]
        %v255 = vld [vmem:[%s169 + $0x14c] sm:$0xf]
        %v256 = vld [vmem:[%s169 + $0x150] sm:$0xf]
        %v257 = vld [vmem:[%s169 + $0x154] sm:$0xf]
        %v258 = vld [vmem:[%s169 + $0x158] sm:$0xf]
        %v259 = vld [vmem:[%s169 + $0x15c] sm:$0xf]
        %v260 = vld [vmem:[%s169 + $0x160] sm:$0xf]
        %v261 = vld [vmem:[%s169 + $0x164] sm:$0xf]
        %v262 = vld [vmem:[%s169 + $0x168] sm:$0xf]
        %v263 = vld [vmem:[%s169 + $0x16c] sm:$0xf]
        %v264 = vld [vmem:[%s169 + $0x170] sm:$0xf]
        %v265 = vld [vmem:[%s169 + $0x174] sm:$0xf]
        %v266 = vld [vmem:[%s169 + $0x178] sm:$0xf]
        %v267 = vld [vmem:[%s169 + $0x17c] sm:$0xf]
        %v268 = vld [vmem:[%s169 + $0x180] sm:$0xf]
        %v269 = vld [vmem:[%s169 + $0x184] sm:$0xf]
        %v270 = vld [vmem:[%s169 + $0x188] sm:$0xf]
        %v271 = vld [vmem:[%s169 + $0x18c] sm:$0xf]
        %v272 = vld [vmem:[%s169 + $0x190] sm:$0xf]
        %v273 = vld [vmem:[%s169 + $0x194] sm:$0xf]
        %v274 = vld [vmem:[%s169 + $0x198] sm:$0xf]
        %v275 = vld [vmem:[%s169 + $0x19c] sm:$0xf]
        %v276 = vld [vmem:[%s169 + $0x1a0] sm:$0xf]
        %v277 = vld [vmem:[%s169 + $0x1a4] sm:$0xf]
        %v278 = vld [vmem:[%s169 + $0x1a8] sm:$0xf]
        %v279 = vld [vmem:[%s169 + $0x1ac] sm:$0xf]
        %v280 = vld [vmem:[%s169 + $0x1b0] sm:$0xf]
        %v281 = vld [vmem:[%s169 + $0x1b4] sm:$0xf]
        %v282 = vld [vmem:[%s169 + $0x1b8] sm:$0xf]
        %v283 = vld [vmem:[%s169 + $0x1bc] sm:$0xf]
        %v284 = vld [vmem:[%s169 + $0x1c0] sm:$0xf]
        %v285 = vld [vmem:[%s169 + $0x1c4] sm:$0xf]
        %v286 = vld [vmem:[%s169 + $0x1c8] sm:$0xf]
        %v287 = vld [vmem:[%s169 + $0x1cc] sm:$0xf]
        %v288 = vld [vmem:[%s169 + $0x1d0] sm:$0xf]
        %v289 = vld [vmem:[%s169 + $0x1d4] sm:$0xf]
        %v290 = vld [vmem:[%s169 + $0x1d8] sm:$0xf]
        %v291 = vld [vmem:[%s169 + $0x1dc] sm:$0xf]
        %v292 = vld [vmem:[%s169 + $0x1e0] sm:$0xf]
        %v293 = vld [vmem:[%s169 + $0x1e4] sm:$0xf]
        %v294 = vld [vmem:[%s169 + $0x1e8] sm:$0xf]
        %v295 = vld [vmem:[%s169 + $0x1ec] sm:$0xf]
        %v296 = vld [vmem:[%s169 + $0x1f0] sm:$0xf]
        %v297 = vld [vmem:[%s169 + $0x1f4] sm:$0xf]
        %v298 = vld [vmem:[%s169 + $0x1f8] sm:$0xf]
        %v299 = vld [vmem:[%s169 + $0x1fc] sm:$0xf]
        %v300 = vunpack.c.l.bf16 %v172
        %v301 = vunpack.c.l.bf16 %v173
        %v302 = vunpack.c.l.bf16 %v174
        %v303 = vunpack.c.l.bf16 %v175
        %v304 = vunpack.c.l.bf16 %v176
        %v305 = vunpack.c.l.bf16 %v177
        %v306 = vunpack.c.l.bf16 %v178
        %v307 = vunpack.c.l.bf16 %v179
        %v308 = vunpack.c.l.bf16 %v180
        %v309 = vunpack.c.l.bf16 %v181
        %v310 = vunpack.c.l.bf16 %v182
        %v311 = vunpack.c.l.bf16 %v183
        %v312 = vunpack.c.l.bf16 %v184
        %v313 = vunpack.c.l.bf16 %v185
        %v314 = vunpack.c.l.bf16 %v186
        %v315 = vunpack.c.l.bf16 %v187
        %v316 = vunpack.c.l.bf16 %v188
        %v317 = vunpack.c.l.bf16 %v189
        %v318 = vunpack.c.l.bf16 %v190
        %v319 = vunpack.c.l.bf16 %v191
        %v320 = vunpack.c.l.bf16 %v192
        %v321 = vunpack.c.l.bf16 %v193
        %v322 = vunpack.c.l.bf16 %v194
        %v323 = vunpack.c.l.bf16 %v195
        %v324 = vunpack.c.l.bf16 %v196
        %v325 = vunpack.c.l.bf16 %v197
        %v326 = vunpack.c.l.bf16 %v198
        %v327 = vunpack.c.l.bf16 %v199
        %v328 = vunpack.c.l.bf16 %v200
        %v329 = vunpack.c.l.bf16 %v201
        %v330 = vunpack.c.l.bf16 %v202
        %v331 = vunpack.c.l.bf16 %v203
        %v332 = vunpack.c.l.bf16 %v204
        %v333 = vunpack.c.l.bf16 %v205
        %v334 = vunpack.c.l.bf16 %v206
        %v335 = vunpack.c.l.bf16 %v207
        %v336 = vunpack.c.l.bf16 %v208
        %v337 = vunpack.c.l.bf16 %v209
        %v338 = vunpack.c.l.bf16 %v210
        %v339 = vunpack.c.l.bf16 %v211
        %v340 = vunpack.c.l.bf16 %v212
        %v341 = vunpack.c.l.bf16 %v213
        %v342 = vunpack.c.l.bf16 %v214
        %v343 = vunpack.c.l.bf16 %v215
        %v344 = vunpack.c.l.bf16 %v216
        %v345 = vunpack.c.l.bf16 %v217
        %v346 = vunpack.c.l.bf16 %v218
        %v347 = vunpack.c.l.bf16 %v219
        %v348 = vunpack.c.l.bf16 %v220
        %v349 = vunpack.c.l.bf16 %v221
        %v350 = vunpack.c.l.bf16 %v222
        %v351 = vunpack.c.l.bf16 %v223
        %v352 = vunpack.c.l.bf16 %v224
        %v353 = vunpack.c.l.bf16 %v225
        %v354 = vunpack.c.l.bf16 %v226
        %v355 = vunpack.c.l.bf16 %v227
        %v356 = vunpack.c.l.bf16 %v228
        %v357 = vunpack.c.l.bf16 %v229
        %v358 = vunpack.c.l.bf16 %v230
        %v359 = vunpack.c.l.bf16 %v231
        %v360 = vunpack.c.l.bf16 %v232
        %v361 = vunpack.c.l.bf16 %v233
        %v362 = vunpack.c.l.bf16 %v234
        %v363 = vunpack.c.l.bf16 %v235
        %v364 = vunpack.c.l.bf16 %v236
        %v365 = vunpack.c.l.bf16 %v237
        %v366 = vunpack.c.l.bf16 %v238
        %v367 = vunpack.c.l.bf16 %v239
        %v368 = vunpack.c.l.bf16 %v240
        %v369 = vunpack.c.l.bf16 %v241
        %v370 = vunpack.c.l.bf16 %v242
        %v371 = vunpack.c.l.bf16 %v243
        %v372 = vunpack.c.l.bf16 %v244
        %v373 = vunpack.c.l.bf16 %v245
        %v374 = vunpack.c.l.bf16 %v246
        %v375 = vunpack.c.l.bf16 %v247
        %v376 = vunpack.c.l.bf16 %v248
        %v377 = vunpack.c.l.bf16 %v249
        %v378 = vunpack.c.l.bf16 %v250
        %v379 = vunpack.c.l.bf16 %v251
        %v380 = vunpack.c.l.bf16 %v252
        %v381 = vunpack.c.l.bf16 %v253
        %v382 = vunpack.c.l.bf16 %v254
        %v383 = vunpack.c.l.bf16 %v255
        %v384 = vunpack.c.l.bf16 %v256
        %v385 = vunpack.c.l.bf16 %v257
        %v386 = vunpack.c.l.bf16 %v258
        %v387 = vunpack.c.l.bf16 %v259
        %v388 = vunpack.c.l.bf16 %v260
        %v389 = vunpack.c.l.bf16 %v261
        %v390 = vunpack.c.l.bf16 %v262
        %v391 = vunpack.c.l.bf16 %v263
        %v392 = vunpack.c.l.bf16 %v264
        %v393 = vunpack.c.l.bf16 %v265
        %v394 = vunpack.c.l.bf16 %v266
        %v395 = vunpack.c.l.bf16 %v267
        %v396 = vunpack.c.l.bf16 %v268
        %v397 = vunpack.c.l.bf16 %v269
        %v398 = vunpack.c.l.bf16 %v270
        %v399 = vunpack.c.l.bf16 %v271
        %v400 = vunpack.c.l.bf16 %v272
        %v401 = vunpack.c.l.bf16 %v273
        %v402 = vunpack.c.l.bf16 %v274
        %v403 = vunpack.c.l.bf16 %v275
        %v404 = vunpack.c.l.bf16 %v276
        %v405 = vunpack.c.l.bf16 %v277
        %v406 = vunpack.c.l.bf16 %v278
        %v407 = vunpack.c.l.bf16 %v279
        %v408 = vunpack.c.l.bf16 %v280
        %v409 = vunpack.c.l.bf16 %v281
        %v410 = vunpack.c.l.bf16 %v282
        %v411 = vunpack.c.l.bf16 %v283
        %v412 = vunpack.c.l.bf16 %v284
        %v413 = vunpack.c.l.bf16 %v285
        %v414 = vunpack.c.l.bf16 %v286
        %v415 = vunpack.c.l.bf16 %v287
        %v416 = vunpack.c.l.bf16 %v288
        %v417 = vunpack.c.l.bf16 %v289
        %v418 = vunpack.c.l.bf16 %v290
        %v419 = vunpack.c.l.bf16 %v291
        %v420 = vunpack.c.l.bf16 %v292
        %v421 = vunpack.c.l.bf16 %v293
        %v422 = vunpack.c.l.bf16 %v294
        %v423 = vunpack.c.l.bf16 %v295
        %v424 = vunpack.c.l.bf16 %v296
        %v425 = vunpack.c.l.bf16 %v297
        %v426 = vunpack.c.l.bf16 %v298
        %v427 = vunpack.c.l.bf16 %v299
        %v428 = vld [vmem:[%s1] sm:$0x1]
        %v430 = vlaneseq
        %v431 = vshrl.u32 %v430, 7
        %v432 = vsub.s32 0, %v431
        %v433 = vrot.slane %v428, %v432
        %v435 = vmul.f32 %v300, %v433
        %v436 = vmul.f32 %v301, %v433
        %v437 = vmul.f32 %v302, %v433
        %v438 = vmul.f32 %v303, %v433
        %v439 = vmul.f32 %v304, %v433
        %v440 = vmul.f32 %v305, %v433
        %v441 = vmul.f32 %v306, %v433
        %v442 = vmul.f32 %v307, %v433
        %v443 = vmul.f32 %v308, %v433
        %v444 = vmul.f32 %v309, %v433
        %v445 = vmul.f32 %v310, %v433
        %v446 = vmul.f32 %v311, %v433
        %v447 = vmul.f32 %v312, %v433
        %v448 = vmul.f32 %v313, %v433
        %v449 = vmul.f32 %v314, %v433
        %v450 = vmul.f32 %v315, %v433
        %v451 = vmul.f32 %v316, %v433
        %v452 = vmul.f32 %v317, %v433
        %v453 = vmul.f32 %v318, %v433
        %v454 = vmul.f32 %v319, %v433
        %v455 = vmul.f32 %v320, %v433
        %v456 = vmul.f32 %v321, %v433
        %v457 = vmul.f32 %v322, %v433
        %v458 = vmul.f32 %v323, %v433
        %v459 = vmul.f32 %v324, %v433
        %v460 = vmul.f32 %v325, %v433
        %v461 = vmul.f32 %v326, %v433
        %v462 = vmul.f32 %v327, %v433
        %v463 = vmul.f32 %v328, %v433
        %v464 = vmul.f32 %v329, %v433
        %v465 = vmul.f32 %v330, %v433
        %v466 = vmul.f32 %v331, %v433
        %v467 = vmul.f32 %v332, %v433
        %v468 = vmul.f32 %v333, %v433
        %v469 = vmul.f32 %v334, %v433
        %v470 = vmul.f32 %v335, %v433
        %v471 = vmul.f32 %v336, %v433
        %v472 = vmul.f32 %v337, %v433
        %v473 = vmul.f32 %v338, %v433
        %v474 = vmul.f32 %v339, %v433
        %v475 = vmul.f32 %v340, %v433
        %v476 = vmul.f32 %v341, %v433
        %v477 = vmul.f32 %v342, %v433
        %v478 = vmul.f32 %v343, %v433
        %v479 = vmul.f32 %v344, %v433
        %v480 = vmul.f32 %v345, %v433
        %v481 = vmul.f32 %v346, %v433
        %v482 = vmul.f32 %v347, %v433
        %v483 = vmul.f32 %v348, %v433
        %v484 = vmul.f32 %v349, %v433
        %v485 = vmul.f32 %v350, %v433
        %v486 = vmul.f32 %v351, %v433
        %v487 = vmul.f32 %v352, %v433
        %v488 = vmul.f32 %v353, %v433
        %v489 = vmul.f32 %v354, %v433
        %v490 = vmul.f32 %v355, %v433
        %v491 = vmul.f32 %v356, %v433
        %v492 = vmul.f32 %v357, %v433
        %v493 = vmul.f32 %v358, %v433
        %v494 = vmul.f32 %v359, %v433
        %v495 = vmul.f32 %v360, %v433
        %v496 = vmul.f32 %v361, %v433
        %v497 = vmul.f32 %v362, %v433
        %v498 = vmul.f32 %v363, %v433
        %v499 = vmul.f32 %v364, %v433
        %v500 = vmul.f32 %v365, %v433
        %v501 = vmul.f32 %v366, %v433
        %v502 = vmul.f32 %v367, %v433
        %v503 = vmul.f32 %v368, %v433
        %v504 = vmul.f32 %v369, %v433
        %v505 = vmul.f32 %v370, %v433
        %v506 = vmul.f32 %v371, %v433
        %v507 = vmul.f32 %v372, %v433
        %v508 = vmul.f32 %v373, %v433
        %v509 = vmul.f32 %v374, %v433
        %v510 = vmul.f32 %v375, %v433
        %v511 = vmul.f32 %v376, %v433
        %v512 = vmul.f32 %v377, %v433
        %v513 = vmul.f32 %v378, %v433
        %v514 = vmul.f32 %v379, %v433
        %v515 = vmul.f32 %v380, %v433
        %v516 = vmul.f32 %v381, %v433
        %v517 = vmul.f32 %v382, %v433
        %v518 = vmul.f32 %v383, %v433
        %v519 = vmul.f32 %v384, %v433
        %v520 = vmul.f32 %v385, %v433
        %v521 = vmul.f32 %v386, %v433
        %v522 = vmul.f32 %v387, %v433
        %v523 = vmul.f32 %v388, %v433
        %v524 = vmul.f32 %v389, %v433
        %v525 = vmul.f32 %v390, %v433
        %v526 = vmul.f32 %v391, %v433
        %v527 = vmul.f32 %v392, %v433
        %v528 = vmul.f32 %v393, %v433
        %v529 = vmul.f32 %v394, %v433
        %v530 = vmul.f32 %v395, %v433
        %v531 = vmul.f32 %v396, %v433
        %v532 = vmul.f32 %v397, %v433
        %v533 = vmul.f32 %v398, %v433
        %v534 = vmul.f32 %v399, %v433
        %v535 = vmul.f32 %v400, %v433
        %v536 = vmul.f32 %v401, %v433
        %v537 = vmul.f32 %v402, %v433
        %v538 = vmul.f32 %v403, %v433
        %v539 = vmul.f32 %v404, %v433
        %v540 = vmul.f32 %v405, %v433
        %v541 = vmul.f32 %v406, %v433
        %v542 = vmul.f32 %v407, %v433
        %v543 = vmul.f32 %v408, %v433
        %v544 = vmul.f32 %v409, %v433
        %v545 = vmul.f32 %v410, %v433
        %v546 = vmul.f32 %v411, %v433
        %v547 = vmul.f32 %v412, %v433
        %v548 = vmul.f32 %v413, %v433
        %v549 = vmul.f32 %v414, %v433
        %v550 = vmul.f32 %v415, %v433
        %v551 = vmul.f32 %v416, %v433
        %v552 = vmul.f32 %v417, %v433
        %v553 = vmul.f32 %v418, %v433
        %v554 = vmul.f32 %v419, %v433
        %v555 = vmul.f32 %v420, %v433
        %v556 = vmul.f32 %v421, %v433
        %v557 = vmul.f32 %v422, %v433
        %v558 = vmul.f32 %v423, %v433
        %v559 = vmul.f32 %v424, %v433
        %v560 = vmul.f32 %v425, %v433
        %v561 = vmul.f32 %v426, %v433
        %v562 = vmul.f32 %v427, %v433
        %v563 = vld [vmem:[%s2] sm:$0x1]
        %v565 = vlaneseq
        %v566 = vshrl.u32 %v565, 7
        %v567 = vsub.s32 0, %v566
        %v568 = vrot.slane %v563, %v567
        %v570 = vadd.f32 %v435, %v568
        %v571 = vadd.f32 %v436, %v568
        %v572 = vadd.f32 %v437, %v568
        %v573 = vadd.f32 %v438, %v568
        %v574 = vadd.f32 %v439, %v568
        %v575 = vadd.f32 %v440, %v568
        %v576 = vadd.f32 %v441, %v568
        %v577 = vadd.f32 %v442, %v568
        %v578 = vadd.f32 %v443, %v568
        %v579 = vadd.f32 %v444, %v568
        %v580 = vadd.f32 %v445, %v568
        %v581 = vadd.f32 %v446, %v568
        %v582 = vadd.f32 %v447, %v568
        %v583 = vadd.f32 %v448, %v568
        %v584 = vadd.f32 %v449, %v568
        %v585 = vadd.f32 %v450, %v568
        %v586 = vadd.f32 %v451, %v568
        %v587 = vadd.f32 %v452, %v568
        %v588 = vadd.f32 %v453, %v568
        %v589 = vadd.f32 %v454, %v568
        %v590 = vadd.f32 %v455, %v568
        %v591 = vadd.f32 %v456, %v568
        %v592 = vadd.f32 %v457, %v568
        %v593 = vadd.f32 %v458, %v568
        %v594 = vadd.f32 %v459, %v568
        %v595 = vadd.f32 %v460, %v568
        %v596 = vadd.f32 %v461, %v568
        %v597 = vadd.f32 %v462, %v568
        %v598 = vadd.f32 %v463, %v568
        %v599 = vadd.f32 %v464, %v568
        %v600 = vadd.f32 %v465, %v568
        %v601 = vadd.f32 %v466, %v568
        %v602 = vadd.f32 %v467, %v568
        %v603 = vadd.f32 %v468, %v568
        %v604 = vadd.f32 %v469, %v568
        %v605 = vadd.f32 %v470, %v568
        %v606 = vadd.f32 %v471, %v568
        %v607 = vadd.f32 %v472, %v568
        %v608 = vadd.f32 %v473, %v568
        %v609 = vadd.f32 %v474, %v568
        %v610 = vadd.f32 %v475, %v568
        %v611 = vadd.f32 %v476, %v568
        %v612 = vadd.f32 %v477, %v568
        %v613 = vadd.f32 %v478, %v568
        %v614 = vadd.f32 %v479, %v568
        %v615 = vadd.f32 %v480, %v568
        %v616 = vadd.f32 %v481, %v568
        %v617 = vadd.f32 %v482, %v568
        %v618 = vadd.f32 %v483, %v568
        %v619 = vadd.f32 %v484, %v568
        %v620 = vadd.f32 %v485, %v568
        %v621 = vadd.f32 %v486, %v568
        %v622 = vadd.f32 %v487, %v568
        %v623 = vadd.f32 %v488, %v568
        %v624 = vadd.f32 %v489, %v568
        %v625 = vadd.f32 %v490, %v568
        %v626 = vadd.f32 %v491, %v568
        %v627 = vadd.f32 %v492, %v568
        %v628 = vadd.f32 %v493, %v568
        %v629 = vadd.f32 %v494, %v568
        %v630 = vadd.f32 %v495, %v568
        %v631 = vadd.f32 %v496, %v568
        %v632 = vadd.f32 %v497, %v568
        %v633 = vadd.f32 %v498, %v568
        %v634 = vadd.f32 %v499, %v568
        %v635 = vadd.f32 %v500, %v568
        %v636 = vadd.f32 %v501, %v568
        %v637 = vadd.f32 %v502, %v568
        %v638 = vadd.f32 %v503, %v568
        %v639 = vadd.f32 %v504, %v568
        %v640 = vadd.f32 %v505, %v568
        %v641 = vadd.f32 %v506, %v568
        %v642 = vadd.f32 %v507, %v568
        %v643 = vadd.f32 %v508, %v568
        %v644 = vadd.f32 %v509, %v568
        %v645 = vadd.f32 %v510, %v568
        %v646 = vadd.f32 %v511, %v568
        %v647 = vadd.f32 %v512, %v568
        %v648 = vadd.f32 %v513, %v568
        %v649 = vadd.f32 %v514, %v568
        %v650 = vadd.f32 %v515, %v568
        %v651 = vadd.f32 %v516, %v568
        %v652 = vadd.f32 %v517, %v568
        %v653 = vadd.f32 %v518, %v568
        %v654 = vadd.f32 %v519, %v568
        %v655 = vadd.f32 %v520, %v568
        %v656 = vadd.f32 %v521, %v568
        %v657 = vadd.f32 %v522, %v568
        %v658 = vadd.f32 %v523, %v568
        %v659 = vadd.f32 %v524, %v568
        %v660 = vadd.f32 %v525, %v568
        %v661 = vadd.f32 %v526, %v568
        %v662 = vadd.f32 %v527, %v568
        %v663 = vadd.f32 %v528, %v568
        %v664 = vadd.f32 %v529, %v568
        %v665 = vadd.f32 %v530, %v568
        %v666 = vadd.f32 %v531, %v568
        %v667 = vadd.f32 %v532, %v568
        %v668 = vadd.f32 %v533, %v568
        %v669 = vadd.f32 %v534, %v568
        %v670 = vadd.f32 %v535, %v568
        %v671 = vadd.f32 %v536, %v568
        %v672 = vadd.f32 %v537, %v568
        %v673 = vadd.f32 %v538, %v568
        %v674 = vadd.f32 %v539, %v568
        %v675 = vadd.f32 %v540, %v568
        %v676 = vadd.f32 %v541, %v568
        %v677 = vadd.f32 %v542, %v568
        %v678 = vadd.f32 %v543, %v568
        %v679 = vadd.f32 %v544, %v568
        %v680 = vadd.f32 %v545, %v568
        %v681 = vadd.f32 %v546, %v568
        %v682 = vadd.f32 %v547, %v568
        %v683 = vadd.f32 %v548, %v568
        %v684 = vadd.f32 %v549, %v568
        %v685 = vadd.f32 %v550, %v568
        %v686 = vadd.f32 %v551, %v568
        %v687 = vadd.f32 %v552, %v568
        %v688 = vadd.f32 %v553, %v568
        %v689 = vadd.f32 %v554, %v568
        %v690 = vadd.f32 %v555, %v568
        %v691 = vadd.f32 %v556, %v568
        %v692 = vadd.f32 %v557, %v568
        %v693 = vadd.f32 %v558, %v568
        %v694 = vadd.f32 %v559, %v568
        %v695 = vadd.f32 %v560, %v568
        %v696 = vadd.f32 %v561, %v568
        %v697 = vadd.f32 %v562, %v568
        %vm698 = vcmp.ge.f32.partialorder %v570, 0.0
        %vm699 = vcmp.ge.f32.partialorder %v571, 0.0
        %vm700 = vcmp.ge.f32.partialorder %v572, 0.0
        %vm701 = vcmp.ge.f32.partialorder %v573, 0.0
        %vm702 = vcmp.ge.f32.partialorder %v574, 0.0
        %vm703 = vcmp.ge.f32.partialorder %v575, 0.0
        %vm704 = vcmp.ge.f32.partialorder %v576, 0.0
        %vm705 = vcmp.ge.f32.partialorder %v577, 0.0
        %vm706 = vcmp.ge.f32.partialorder %v578, 0.0
        %vm707 = vcmp.ge.f32.partialorder %v579, 0.0
        %vm708 = vcmp.ge.f32.partialorder %v580, 0.0
        %vm709 = vcmp.ge.f32.partialorder %v581, 0.0
        %vm710 = vcmp.ge.f32.partialorder %v582, 0.0
        %vm711 = vcmp.ge.f32.partialorder %v583, 0.0
        %vm712 = vcmp.ge.f32.partialorder %v584, 0.0
        %vm713 = vcmp.ge.f32.partialorder %v585, 0.0
        %vm714 = vcmp.ge.f32.partialorder %v586, 0.0
        %vm715 = vcmp.ge.f32.partialorder %v587, 0.0
        %vm716 = vcmp.ge.f32.partialorder %v588, 0.0
        %vm717 = vcmp.ge.f32.partialorder %v589, 0.0
        %vm718 = vcmp.ge.f32.partialorder %v590, 0.0
        %vm719 = vcmp.ge.f32.partialorder %v591, 0.0
        %vm720 = vcmp.ge.f32.partialorder %v592, 0.0
        %vm721 = vcmp.ge.f32.partialorder %v593, 0.0
        %vm722 = vcmp.ge.f32.partialorder %v594, 0.0
        %vm723 = vcmp.ge.f32.partialorder %v595, 0.0
        %vm724 = vcmp.ge.f32.partialorder %v596, 0.0
        %vm725 = vcmp.ge.f32.partialorder %v597, 0.0
        %vm726 = vcmp.ge.f32.partialorder %v598, 0.0
        %vm727 = vcmp.ge.f32.partialorder %v599, 0.0
        %vm728 = vcmp.ge.f32.partialorder %v600, 0.0
        %vm729 = vcmp.ge.f32.partialorder %v601, 0.0
        %vm730 = vcmp.ge.f32.partialorder %v602, 0.0
        %vm731 = vcmp.ge.f32.partialorder %v603, 0.0
        %vm732 = vcmp.ge.f32.partialorder %v604, 0.0
        %vm733 = vcmp.ge.f32.partialorder %v605, 0.0
        %vm734 = vcmp.ge.f32.partialorder %v606, 0.0
        %vm735 = vcmp.ge.f32.partialorder %v607, 0.0
        %vm736 = vcmp.ge.f32.partialorder %v608, 0.0
        %vm737 = vcmp.ge.f32.partialorder %v609, 0.0
        %vm738 = vcmp.ge.f32.partialorder %v610, 0.0
        %vm739 = vcmp.ge.f32.partialorder %v611, 0.0
        %vm740 = vcmp.ge.f32.partialorder %v612, 0.0
        %vm741 = vcmp.ge.f32.partialorder %v613, 0.0
        %vm742 = vcmp.ge.f32.partialorder %v614, 0.0
        %vm743 = vcmp.ge.f32.partialorder %v615, 0.0
        %vm744 = vcmp.ge.f32.partialorder %v616, 0.0
        %vm745 = vcmp.ge.f32.partialorder %v617, 0.0
        %vm746 = vcmp.ge.f32.partialorder %v618, 0.0
        %vm747 = vcmp.ge.f32.partialorder %v619, 0.0
        %vm748 = vcmp.ge.f32.partialorder %v620, 0.0
        %vm749 = vcmp.ge.f32.partialorder %v621, 0.0
        %vm750 = vcmp.ge.f32.partialorder %v622, 0.0
        %vm751 = vcmp.ge.f32.partialorder %v623, 0.0
        %vm752 = vcmp.ge.f32.partialorder %v624, 0.0
        %vm753 = vcmp.ge.f32.partialorder %v625, 0.0
        %vm754 = vcmp.ge.f32.partialorder %v626, 0.0
        %vm755 = vcmp.ge.f32.partialorder %v627, 0.0
        %vm756 = vcmp.ge.f32.partialorder %v628, 0.0
        %vm757 = vcmp.ge.f32.partialorder %v629, 0.0
        %vm758 = vcmp.ge.f32.partialorder %v630, 0.0
        %vm759 = vcmp.ge.f32.partialorder %v631, 0.0
        %vm760 = vcmp.ge.f32.partialorder %v632, 0.0
        %vm761 = vcmp.ge.f32.partialorder %v633, 0.0
        %vm762 = vcmp.ge.f32.partialorder %v634, 0.0
        %vm763 = vcmp.ge.f32.partialorder %v635, 0.0
        %vm764 = vcmp.ge.f32.partialorder %v636, 0.0
        %vm765 = vcmp.ge.f32.partialorder %v637, 0.0
        %vm766 = vcmp.ge.f32.partialorder %v638, 0.0
        %vm767 = vcmp.ge.f32.partialorder %v639, 0.0
        %vm768 = vcmp.ge.f32.partialorder %v640, 0.0
        %vm769 = vcmp.ge.f32.partialorder %v641, 0.0
        %vm770 = vcmp.ge.f32.partialorder %v642, 0.0
        %vm771 = vcmp.ge.f32.partialorder %v643, 0.0
        %vm772 = vcmp.ge.f32.partialorder %v644, 0.0
        %vm773 = vcmp.ge.f32.partialorder %v645, 0.0
        %vm774 = vcmp.ge.f32.partialorder %v646, 0.0
        %vm775 = vcmp.ge.f32.partialorder %v647, 0.0
        %vm776 = vcmp.ge.f32.partialorder %v648, 0.0
        %vm777 = vcmp.ge.f32.partialorder %v649, 0.0
        %vm778 = vcmp.ge.f32.partialorder %v650, 0.0
        %vm779 = vcmp.ge.f32.partialorder %v651, 0.0
        %vm780 = vcmp.ge.f32.partialorder %v652, 0.0
        %vm781 = vcmp.ge.f32.partialorder %v653, 0.0
        %vm782 = vcmp.ge.f32.partialorder %v654, 0.0
        %vm783 = vcmp.ge.f32.partialorder %v655, 0.0
        %vm784 = vcmp.ge.f32.partialorder %v656, 0.0
        %vm785 = vcmp.ge.f32.partialorder %v657, 0.0
        %vm786 = vcmp.ge.f32.partialorder %v658, 0.0
        %vm787 = vcmp.ge.f32.partialorder %v659, 0.0
        %vm788 = vcmp.ge.f32.partialorder %v660, 0.0
        %vm789 = vcmp.ge.f32.partialorder %v661, 0.0
        %vm790 = vcmp.ge.f32.partialorder %v662, 0.0
        %vm791 = vcmp.ge.f32.partialorder %v663, 0.0
        %vm792 = vcmp.ge.f32.partialorder %v664, 0.0
        %vm793 = vcmp.ge.f32.partialorder %v665, 0.0
        %vm794 = vcmp.ge.f32.partialorder %v666, 0.0
        %vm795 = vcmp.ge.f32.partialorder %v667, 0.0
        %vm796 = vcmp.ge.f32.partialorder %v668, 0.0
        %vm797 = vcmp.ge.f32.partialorder %v669, 0.0
        %vm798 = vcmp.ge.f32.partialorder %v670, 0.0
        %vm799 = vcmp.ge.f32.partialorder %v671, 0.0
        %vm800 = vcmp.ge.f32.partialorder %v672, 0.0
        %vm801 = vcmp.ge.f32.partialorder %v673, 0.0
        %vm802 = vcmp.ge.f32.partialorder %v674, 0.0
        %vm803 = vcmp.ge.f32.partialorder %v675, 0.0
        %vm804 = vcmp.ge.f32.partialorder %v676, 0.0
        %vm805 = vcmp.ge.f32.partialorder %v677, 0.0
        %vm806 = vcmp.ge.f32.partialorder %v678, 0.0
        %vm807 = vcmp.ge.f32.partialorder %v679, 0.0
        %vm808 = vcmp.ge.f32.partialorder %v680, 0.0
        %vm809 = vcmp.ge.f32.partialorder %v681, 0.0
        %vm810 = vcmp.ge.f32.partialorder %v682, 0.0
        %vm811 = vcmp.ge.f32.partialorder %v683, 0.0
        %vm812 = vcmp.ge.f32.partialorder %v684, 0.0
        %vm813 = vcmp.ge.f32.partialorder %v685, 0.0
        %vm814 = vcmp.ge.f32.partialorder %v686, 0.0
        %vm815 = vcmp.ge.f32.partialorder %v687, 0.0
        %vm816 = vcmp.ge.f32.partialorder %v688, 0.0
        %vm817 = vcmp.ge.f32.partialorder %v689, 0.0
        %vm818 = vcmp.ge.f32.partialorder %v690, 0.0
        %vm819 = vcmp.ge.f32.partialorder %v691, 0.0
        %vm820 = vcmp.ge.f32.partialorder %v692, 0.0
        %vm821 = vcmp.ge.f32.partialorder %v693, 0.0
        %vm822 = vcmp.ge.f32.partialorder %v694, 0.0
        %vm823 = vcmp.ge.f32.partialorder %v695, 0.0
        %vm824 = vcmp.ge.f32.partialorder %v696, 0.0
        %vm825 = vcmp.ge.f32.partialorder %v697, 0.0
        %v826 = vmul.f32 %v570, 0.1
        %v827 = vmul.f32 %v571, 0.1
        %v828 = vmul.f32 %v572, 0.1
        %v829 = vmul.f32 %v573, 0.1
        %v830 = vmul.f32 %v574, 0.1
        %v831 = vmul.f32 %v575, 0.1
        %v832 = vmul.f32 %v576, 0.1
        %v833 = vmul.f32 %v577, 0.1
        %v834 = vmul.f32 %v578, 0.1
        %v835 = vmul.f32 %v579, 0.1
        %v836 = vmul.f32 %v580, 0.1
        %v837 = vmul.f32 %v581, 0.1
        %v838 = vmul.f32 %v582, 0.1
        %v839 = vmul.f32 %v583, 0.1
        %v840 = vmul.f32 %v584, 0.1
        %v841 = vmul.f32 %v585, 0.1
        %v842 = vmul.f32 %v586, 0.1
        %v843 = vmul.f32 %v587, 0.1
        %v844 = vmul.f32 %v588, 0.1
        %v845 = vmul.f32 %v589, 0.1
        %v846 = vmul.f32 %v590, 0.1
        %v847 = vmul.f32 %v591, 0.1
        %v848 = vmul.f32 %v592, 0.1
        %v849 = vmul.f32 %v593, 0.1
        %v850 = vmul.f32 %v594, 0.1
        %v851 = vmul.f32 %v595, 0.1
        %v852 = vmul.f32 %v596, 0.1
        %v853 = vmul.f32 %v597, 0.1
        %v854 = vmul.f32 %v598, 0.1
        %v855 = vmul.f32 %v599, 0.1
        %v856 = vmul.f32 %v600, 0.1
        %v857 = vmul.f32 %v601, 0.1
        %v858 = vmul.f32 %v602, 0.1
        %v859 = vmul.f32 %v603, 0.1
        %v860 = vmul.f32 %v604, 0.1
        %v861 = vmul.f32 %v605, 0.1
        %v862 = vmul.f32 %v606, 0.1
        %v863 = vmul.f32 %v607, 0.1
        %v864 = vmul.f32 %v608, 0.1
        %v865 = vmul.f32 %v609, 0.1
        %v866 = vmul.f32 %v610, 0.1
        %v867 = vmul.f32 %v611, 0.1
        %v868 = vmul.f32 %v612, 0.1
        %v869 = vmul.f32 %v613, 0.1
        %v870 = vmul.f32 %v614, 0.1
        %v871 = vmul.f32 %v615, 0.1
        %v872 = vmul.f32 %v616, 0.1
        %v873 = vmul.f32 %v617, 0.1
        %v874 = vmul.f32 %v618, 0.1
        %v875 = vmul.f32 %v619, 0.1
        %v876 = vmul.f32 %v620, 0.1
        %v877 = vmul.f32 %v621, 0.1
        %v878 = vmul.f32 %v622, 0.1
        %v879 = vmul.f32 %v623, 0.1
        %v880 = vmul.f32 %v624, 0.1
        %v881 = vmul.f32 %v625, 0.1
        %v882 = vmul.f32 %v626, 0.1
        %v883 = vmul.f32 %v627, 0.1
        %v884 = vmul.f32 %v628, 0.1
        %v885 = vmul.f32 %v629, 0.1
        %v886 = vmul.f32 %v630, 0.1
        %v887 = vmul.f32 %v631, 0.1
        %v888 = vmul.f32 %v632, 0.1
        %v889 = vmul.f32 %v633, 0.1
        %v890 = vmul.f32 %v634, 0.1
        %v891 = vmul.f32 %v635, 0.1
        %v892 = vmul.f32 %v636, 0.1
        %v893 = vmul.f32 %v637, 0.1
        %v894 = vmul.f32 %v638, 0.1
        %v895 = vmul.f32 %v639, 0.1
        %v896 = vmul.f32 %v640, 0.1
        %v897 = vmul.f32 %v641, 0.1
        %v898 = vmul.f32 %v642, 0.1
        %v899 = vmul.f32 %v643, 0.1
        %v900 = vmul.f32 %v644, 0.1
        %v901 = vmul.f32 %v645, 0.1
        %v902 = vmul.f32 %v646, 0.1
        %v903 = vmul.f32 %v647, 0.1
        %v904 = vmul.f32 %v648, 0.1
        %v905 = vmul.f32 %v649, 0.1
        %v906 = vmul.f32 %v650, 0.1
        %v907 = vmul.f32 %v651, 0.1
        %v908 = vmul.f32 %v652, 0.1
        %v909 = vmul.f32 %v653, 0.1
        %v910 = vmul.f32 %v654, 0.1
        %v911 = vmul.f32 %v655, 0.1
        %v912 = vmul.f32 %v656, 0.1
        %v913 = vmul.f32 %v657, 0.1
        %v914 = vmul.f32 %v658, 0.1
        %v915 = vmul.f32 %v659, 0.1
        %v916 = vmul.f32 %v660, 0.1
        %v917 = vmul.f32 %v661, 0.1
        %v918 = vmul.f32 %v662, 0.1
        %v919 = vmul.f32 %v663, 0.1
        %v920 = vmul.f32 %v664, 0.1
        %v921 = vmul.f32 %v665, 0.1
        %v922 = vmul.f32 %v666, 0.1
        %v923 = vmul.f32 %v667, 0.1
        %v924 = vmul.f32 %v668, 0.1
        %v925 = vmul.f32 %v669, 0.1
        %v926 = vmul.f32 %v670, 0.1
        %v927 = vmul.f32 %v671, 0.1
        %v928 = vmul.f32 %v672, 0.1
        %v929 = vmul.f32 %v673, 0.1
        %v930 = vmul.f32 %v674, 0.1
        %v931 = vmul.f32 %v675, 0.1
        %v932 = vmul.f32 %v676, 0.1
        %v933 = vmul.f32 %v677, 0.1
        %v934 = vmul.f32 %v678, 0.1
        %v935 = vmul.f32 %v679, 0.1
        %v936 = vmul.f32 %v680, 0.1
        %v937 = vmul.f32 %v681, 0.1
        %v938 = vmul.f32 %v682, 0.1
        %v939 = vmul.f32 %v683, 0.1
        %v940 = vmul.f32 %v684, 0.1
        %v941 = vmul.f32 %v685, 0.1
        %v942 = vmul.f32 %v686, 0.1
        %v943 = vmul.f32 %v687, 0.1
        %v944 = vmul.f32 %v688, 0.1
        %v945 = vmul.f32 %v689, 0.1
        %v946 = vmul.f32 %v690, 0.1
        %v947 = vmul.f32 %v691, 0.1
        %v948 = vmul.f32 %v692, 0.1
        %v949 = vmul.f32 %v693, 0.1
        %v950 = vmul.f32 %v694, 0.1
        %v951 = vmul.f32 %v695, 0.1
        %v952 = vmul.f32 %v696, 0.1
        %v953 = vmul.f32 %v697, 0.1
        %v954 = vsel %vm698, %v570, %v826
        %v955 = vsel %vm699, %v571, %v827
        %v956 = vsel %vm700, %v572, %v828
        %v957 = vsel %vm701, %v573, %v829
        %v958 = vsel %vm702, %v574, %v830
        %v959 = vsel %vm703, %v575, %v831
        %v960 = vsel %vm704, %v576, %v832
        %v961 = vsel %vm705, %v577, %v833
        %v962 = vsel %vm706, %v578, %v834
        %v963 = vsel %vm707, %v579, %v835
        %v964 = vsel %vm708, %v580, %v836
        %v965 = vsel %vm709, %v581, %v837
        %v966 = vsel %vm710, %v582, %v838
        %v967 = vsel %vm711, %v583, %v839
        %v968 = vsel %vm712, %v584, %v840
        %v969 = vsel %vm713, %v585, %v841
        %v970 = vsel %vm714, %v586, %v842
        %v971 = vsel %vm715, %v587, %v843
        %v972 = vsel %vm716, %v588, %v844
        %v973 = vsel %vm717, %v589, %v845
        %v974 = vsel %vm718, %v590, %v846
        %v975 = vsel %vm719, %v591, %v847
        %v976 = vsel %vm720, %v592, %v848
        %v977 = vsel %vm721, %v593, %v849
        %v978 = vsel %vm722, %v594, %v850
        %v979 = vsel %vm723, %v595, %v851
        %v980 = vsel %vm724, %v596, %v852
        %v981 = vsel %vm725, %v597, %v853
        %v982 = vsel %vm726, %v598, %v854
        %v983 = vsel %vm727, %v599, %v855
        %v984 = vsel %vm728, %v600, %v856
        %v985 = vsel %vm729, %v601, %v857
        %v986 = vsel %vm730, %v602, %v858
        %v987 = vsel %vm731, %v603, %v859
        %v988 = vsel %vm732, %v604, %v860
        %v989 = vsel %vm733, %v605, %v861
        %v990 = vsel %vm734, %v606, %v862
        %v991 = vsel %vm735, %v607, %v863
        %v992 = vsel %vm736, %v608, %v864
        %v993 = vsel %vm737, %v609, %v865
        %v994 = vsel %vm738, %v610, %v866
        %v995 = vsel %vm739, %v611, %v867
        %v996 = vsel %vm740, %v612, %v868
        %v997 = vsel %vm741, %v613, %v869
        %v998 = vsel %vm742, %v614, %v870
        %v999 = vsel %vm743, %v615, %v871
        %v1000 = vsel %vm744, %v616, %v872
        %v1001 = vsel %vm745, %v617, %v873
        %v1002 = vsel %vm746, %v618, %v874
        %v1003 = vsel %vm747, %v619, %v875
        %v1004 = vsel %vm748, %v620, %v876
        %v1005 = vsel %vm749, %v621, %v877
        %v1006 = vsel %vm750, %v622, %v878
        %v1007 = vsel %vm751, %v623, %v879
        %v1008 = vsel %vm752, %v624, %v880
        %v1009 = vsel %vm753, %v625, %v881
        %v1010 = vsel %vm754, %v626, %v882
        %v1011 = vsel %vm755, %v627, %v883
        %v1012 = vsel %vm756, %v628, %v884
        %v1013 = vsel %vm757, %v629, %v885
        %v1014 = vsel %vm758, %v630, %v886
        %v1015 = vsel %vm759, %v631, %v887
        %v1016 = vsel %vm760, %v632, %v888
        %v1017 = vsel %vm761, %v633, %v889
        %v1018 = vsel %vm762, %v634, %v890
        %v1019 = vsel %vm763, %v635, %v891
        %v1020 = vsel %vm764, %v636, %v892
        %v1021 = vsel %vm765, %v637, %v893
        %v1022 = vsel %vm766, %v638, %v894
        %v1023 = vsel %vm767, %v639, %v895
        %v1024 = vsel %vm768, %v640, %v896
        %v1025 = vsel %vm769, %v641, %v897
        %v1026 = vsel %vm770, %v642, %v898
        %v1027 = vsel %vm771, %v643, %v899
        %v1028 = vsel %vm772, %v644, %v900
        %v1029 = vsel %vm773, %v645, %v901
        %v1030 = vsel %vm774, %v646, %v902
        %v1031 = vsel %vm775, %v647, %v903
        %v1032 = vsel %vm776, %v648, %v904
        %v1033 = vsel %vm777, %v649, %v905
        %v1034 = vsel %vm778, %v650, %v906
        %v1035 = vsel %vm779, %v651, %v907
        %v1036 = vsel %vm780, %v652, %v908
        %v1037 = vsel %vm781, %v653, %v909
        %v1038 = vsel %vm782, %v654, %v910
        %v1039 = vsel %vm783, %v655, %v911
        %v1040 = vsel %vm784, %v656, %v912
        %v1041 = vsel %vm785, %v657, %v913
        %v1042 = vsel %vm786, %v658, %v914
        %v1043 = vsel %vm787, %v659, %v915
        %v1044 = vsel %vm788, %v660, %v916
        %v1045 = vsel %vm789, %v661, %v917
        %v1046 = vsel %vm790, %v662, %v918
        %v1047 = vsel %vm791, %v663, %v919
        %v1048 = vsel %vm792, %v664, %v920
        %v1049 = vsel %vm793, %v665, %v921
        %v1050 = vsel %vm794, %v666, %v922
        %v1051 = vsel %vm795, %v667, %v923
        %v1052 = vsel %vm796, %v668, %v924
        %v1053 = vsel %vm797, %v669, %v925
        %v1054 = vsel %vm798, %v670, %v926
        %v1055 = vsel %vm799, %v671, %v927
        %v1056 = vsel %vm800, %v672, %v928
        %v1057 = vsel %vm801, %v673, %v929
        %v1058 = vsel %vm802, %v674, %v930
        %v1059 = vsel %vm803, %v675, %v931
        %v1060 = vsel %vm804, %v676, %v932
        %v1061 = vsel %vm805, %v677, %v933
        %v1062 = vsel %vm806, %v678, %v934
        %v1063 = vsel %vm807, %v679, %v935
        %v1064 = vsel %vm808, %v680, %v936
        %v1065 = vsel %vm809, %v681, %v937
        %v1066 = vsel %vm810, %v682, %v938
        %v1067 = vsel %vm811, %v683, %v939
        %v1068 = vsel %vm812, %v684, %v940
        %v1069 = vsel %vm813, %v685, %v941
        %v1070 = vsel %vm814, %v686, %v942
        %v1071 = vsel %vm815, %v687, %v943
        %v1072 = vsel %vm816, %v688, %v944
        %v1073 = vsel %vm817, %v689, %v945
        %v1074 = vsel %vm818, %v690, %v946
        %v1075 = vsel %vm819, %v691, %v947
        %v1076 = vsel %vm820, %v692, %v948
        %v1077 = vsel %vm821, %v693, %v949
        %v1078 = vsel %vm822, %v694, %v950
        %v1079 = vsel %vm823, %v695, %v951
        %v1080 = vsel %vm824, %v696, %v952
        %v1081 = vsel %vm825, %v697, %v953
        %v1082 = vpack.c.bf16 %v955, %v954
        %v1083 = vpack.c.bf16 %v957, %v956
        %v1084 = vpack.c.bf16 %v959, %v958
        %v1085 = vpack.c.bf16 %v961, %v960
        %v1086 = vpack.c.bf16 %v963, %v962
        %v1087 = vpack.c.bf16 %v965, %v964
        %v1088 = vpack.c.bf16 %v967, %v966
        %v1089 = vpack.c.bf16 %v969, %v968
        %v1090 = vpack.c.bf16 %v971, %v970
        %v1091 = vpack.c.bf16 %v973, %v972
        %v1092 = vpack.c.bf16 %v975, %v974
        %v1093 = vpack.c.bf16 %v977, %v976
        %v1094 = vpack.c.bf16 %v979, %v978
        %v1095 = vpack.c.bf16 %v981, %v980
        %v1096 = vpack.c.bf16 %v983, %v982
        %v1097 = vpack.c.bf16 %v985, %v984
        %v1098 = vpack.c.bf16 %v987, %v986
        %v1099 = vpack.c.bf16 %v989, %v988
        %v1100 = vpack.c.bf16 %v991, %v990
        %v1101 = vpack.c.bf16 %v993, %v992
        %v1102 = vpack.c.bf16 %v995, %v994
        %v1103 = vpack.c.bf16 %v997, %v996
        %v1104 = vpack.c.bf16 %v999, %v998
        %v1105 = vpack.c.bf16 %v1001, %v1000
        %v1106 = vpack.c.bf16 %v1003, %v1002
        %v1107 = vpack.c.bf16 %v1005, %v1004
        %v1108 = vpack.c.bf16 %v1007, %v1006
        %v1109 = vpack.c.bf16 %v1009, %v1008
        %v1110 = vpack.c.bf16 %v1011, %v1010
        %v1111 = vpack.c.bf16 %v1013, %v1012
        %v1112 = vpack.c.bf16 %v1015, %v1014
        %v1113 = vpack.c.bf16 %v1017, %v1016
        %v1114 = vpack.c.bf16 %v1019, %v1018
        %v1115 = vpack.c.bf16 %v1021, %v1020
        %v1116 = vpack.c.bf16 %v1023, %v1022
        %v1117 = vpack.c.bf16 %v1025, %v1024
        %v1118 = vpack.c.bf16 %v1027, %v1026
        %v1119 = vpack.c.bf16 %v1029, %v1028
        %v1120 = vpack.c.bf16 %v1031, %v1030
        %v1121 = vpack.c.bf16 %v1033, %v1032
        %v1122 = vpack.c.bf16 %v1035, %v1034
        %v1123 = vpack.c.bf16 %v1037, %v1036
        %v1124 = vpack.c.bf16 %v1039, %v1038
        %v1125 = vpack.c.bf16 %v1041, %v1040
        %v1126 = vpack.c.bf16 %v1043, %v1042
        %v1127 = vpack.c.bf16 %v1045, %v1044
        %v1128 = vpack.c.bf16 %v1047, %v1046
        %v1129 = vpack.c.bf16 %v1049, %v1048
        %v1130 = vpack.c.bf16 %v1051, %v1050
        %v1131 = vpack.c.bf16 %v1053, %v1052
        %v1132 = vpack.c.bf16 %v1055, %v1054
        %v1133 = vpack.c.bf16 %v1057, %v1056
        %v1134 = vpack.c.bf16 %v1059, %v1058
        %v1135 = vpack.c.bf16 %v1061, %v1060
        %v1136 = vpack.c.bf16 %v1063, %v1062
        %v1137 = vpack.c.bf16 %v1065, %v1064
        %v1138 = vpack.c.bf16 %v1067, %v1066
        %v1139 = vpack.c.bf16 %v1069, %v1068
        %v1140 = vpack.c.bf16 %v1071, %v1070
        %v1141 = vpack.c.bf16 %v1073, %v1072
        %v1142 = vpack.c.bf16 %v1075, %v1074
        %v1143 = vpack.c.bf16 %v1077, %v1076
        %v1144 = vpack.c.bf16 %v1079, %v1078
        %v1145 = vpack.c.bf16 %v1081, %v1080
        %v1210 = vunpack.c.l.b16 %v1082
        %v1211 = vunpack.c.h.b16 %v1082
        %v1212 = vunpack.c.l.b16 %v1083
        %v1213 = vunpack.c.h.b16 %v1083
        %v1214 = vunpack.c.l.b16 %v1084
        %v1215 = vunpack.c.h.b16 %v1084
        %v1216 = vunpack.c.l.b16 %v1085
        %v1217 = vunpack.c.h.b16 %v1085
        %v1218 = vunpack.c.l.b16 %v1086
        %v1219 = vunpack.c.h.b16 %v1086
        %v1220 = vunpack.c.l.b16 %v1087
        %v1221 = vunpack.c.h.b16 %v1087
        %v1222 = vunpack.c.l.b16 %v1088
        %v1223 = vunpack.c.h.b16 %v1088
        %v1224 = vunpack.c.l.b16 %v1089
        %v1225 = vunpack.c.h.b16 %v1089
        %v1226 = vunpack.c.l.b16 %v1090
        %v1227 = vunpack.c.h.b16 %v1090
        %v1228 = vunpack.c.l.b16 %v1091
        %v1229 = vunpack.c.h.b16 %v1091
        %v1230 = vunpack.c.l.b16 %v1092
        %v1231 = vunpack.c.h.b16 %v1092
        %v1232 = vunpack.c.l.b16 %v1093
        %v1233 = vunpack.c.h.b16 %v1093
        %v1234 = vunpack.c.l.b16 %v1094
        %v1235 = vunpack.c.h.b16 %v1094
        %v1236 = vunpack.c.l.b16 %v1095
        %v1237 = vunpack.c.h.b16 %v1095
        %v1238 = vunpack.c.l.b16 %v1096
        %v1239 = vunpack.c.h.b16 %v1096
        %v1240 = vunpack.c.l.b16 %v1097
        %v1241 = vunpack.c.h.b16 %v1097
        %v1242 = vunpack.c.l.b16 %v1098
        %v1243 = vunpack.c.h.b16 %v1098
        %v1244 = vunpack.c.l.b16 %v1099
        %v1245 = vunpack.c.h.b16 %v1099
        %v1246 = vunpack.c.l.b16 %v1100
        %v1247 = vunpack.c.h.b16 %v1100
        %v1248 = vunpack.c.l.b16 %v1101
        %v1249 = vunpack.c.h.b16 %v1101
        %v1250 = vunpack.c.l.b16 %v1102
        %v1251 = vunpack.c.h.b16 %v1102
        %v1252 = vunpack.c.l.b16 %v1103
        %v1253 = vunpack.c.h.b16 %v1103
        %v1254 = vunpack.c.l.b16 %v1104
        %v1255 = vunpack.c.h.b16 %v1104
        %v1256 = vunpack.c.l.b16 %v1105
        %v1257 = vunpack.c.h.b16 %v1105
        %v1258 = vunpack.c.l.b16 %v1106
        %v1259 = vunpack.c.h.b16 %v1106
        %v1260 = vunpack.c.l.b16 %v1107
        %v1261 = vunpack.c.h.b16 %v1107
        %v1262 = vunpack.c.l.b16 %v1108
        %v1263 = vunpack.c.h.b16 %v1108
        %v1264 = vunpack.c.l.b16 %v1109
        %v1265 = vunpack.c.h.b16 %v1109
        %v1266 = vunpack.c.l.b16 %v1110
        %v1267 = vunpack.c.h.b16 %v1110
        %v1268 = vunpack.c.l.b16 %v1111
        %v1269 = vunpack.c.h.b16 %v1111
        %v1270 = vunpack.c.l.b16 %v1112
        %v1271 = vunpack.c.h.b16 %v1112
        %v1272 = vunpack.c.l.b16 %v1113
        %v1273 = vunpack.c.h.b16 %v1113
        %v1274 = vunpack.c.l.b16 %v1114
        %v1275 = vunpack.c.h.b16 %v1114
        %v1276 = vunpack.c.l.b16 %v1115
        %v1277 = vunpack.c.h.b16 %v1115
        %v1278 = vunpack.c.l.b16 %v1116
        %v1279 = vunpack.c.h.b16 %v1116
        %v1280 = vunpack.c.l.b16 %v1117
        %v1281 = vunpack.c.h.b16 %v1117
        %v1282 = vunpack.c.l.b16 %v1118
        %v1283 = vunpack.c.h.b16 %v1118
        %v1284 = vunpack.c.l.b16 %v1119
        %v1285 = vunpack.c.h.b16 %v1119
        %v1286 = vunpack.c.l.b16 %v1120
        %v1287 = vunpack.c.h.b16 %v1120
        %v1288 = vunpack.c.l.b16 %v1121
        %v1289 = vunpack.c.h.b16 %v1121
        %v1290 = vunpack.c.l.b16 %v1122
        %v1291 = vunpack.c.h.b16 %v1122
        %v1292 = vunpack.c.l.b16 %v1123
        %v1293 = vunpack.c.h.b16 %v1123
        %v1294 = vunpack.c.l.b16 %v1124
        %v1295 = vunpack.c.h.b16 %v1124
        %v1296 = vunpack.c.l.b16 %v1125
        %v1297 = vunpack.c.h.b16 %v1125
        %v1298 = vunpack.c.l.b16 %v1126
        %v1299 = vunpack.c.h.b16 %v1126
        %v1300 = vunpack.c.l.b16 %v1127
        %v1301 = vunpack.c.h.b16 %v1127
        %v1302 = vunpack.c.l.b16 %v1128
        %v1303 = vunpack.c.h.b16 %v1128
        %v1304 = vunpack.c.l.b16 %v1129
        %v1305 = vunpack.c.h.b16 %v1129
        %v1306 = vunpack.c.l.b16 %v1130
        %v1307 = vunpack.c.h.b16 %v1130
        %v1308 = vunpack.c.l.b16 %v1131
        %v1309 = vunpack.c.h.b16 %v1131
        %v1310 = vunpack.c.l.b16 %v1132
        %v1311 = vunpack.c.h.b16 %v1132
        %v1312 = vunpack.c.l.b16 %v1133
        %v1313 = vunpack.c.h.b16 %v1133
        %v1314 = vunpack.c.l.b16 %v1134
        %v1315 = vunpack.c.h.b16 %v1134
        %v1316 = vunpack.c.l.b16 %v1135
        %v1317 = vunpack.c.h.b16 %v1135
        %v1318 = vunpack.c.l.b16 %v1136
        %v1319 = vunpack.c.h.b16 %v1136
        %v1320 = vunpack.c.l.b16 %v1137
        %v1321 = vunpack.c.h.b16 %v1137
        %v1322 = vunpack.c.l.b16 %v1138
        %v1323 = vunpack.c.h.b16 %v1138
        %v1324 = vunpack.c.l.b16 %v1139
        %v1325 = vunpack.c.h.b16 %v1139
        %v1326 = vunpack.c.l.b16 %v1140
        %v1327 = vunpack.c.h.b16 %v1140
        %v1328 = vunpack.c.l.b16 %v1141
        %v1329 = vunpack.c.h.b16 %v1141
        %v1330 = vunpack.c.l.b16 %v1142
        %v1331 = vunpack.c.h.b16 %v1142
        %v1332 = vunpack.c.l.b16 %v1143
        %v1333 = vunpack.c.h.b16 %v1143
        %v1334 = vunpack.c.l.b16 %v1144
        %v1335 = vunpack.c.h.b16 %v1144
        %v1336 = vunpack.c.l.b16 %v1145
        %v1337 = vunpack.c.h.b16 %v1145
        %v1338 = vpack.c.b16 %v1210, %v1210
        %v1339 = vpack.c.b16 %v1211, %v1211
        %v1340 = vpack.c.b16 %v1212, %v1212
        %v1341 = vpack.c.b16 %v1213, %v1213
        %v1342 = vpack.c.b16 %v1214, %v1214
        %v1343 = vpack.c.b16 %v1215, %v1215
        %v1344 = vpack.c.b16 %v1216, %v1216
        %v1345 = vpack.c.b16 %v1217, %v1217
        %v1346 = vpack.c.b16 %v1218, %v1218
        %v1347 = vpack.c.b16 %v1219, %v1219
        %v1348 = vpack.c.b16 %v1220, %v1220
        %v1349 = vpack.c.b16 %v1221, %v1221
        %v1350 = vpack.c.b16 %v1222, %v1222
        %v1351 = vpack.c.b16 %v1223, %v1223
        %v1352 = vpack.c.b16 %v1224, %v1224
        %v1353 = vpack.c.b16 %v1225, %v1225
        %v1354 = vpack.c.b16 %v1226, %v1226
        %v1355 = vpack.c.b16 %v1227, %v1227
        %v1356 = vpack.c.b16 %v1228, %v1228
        %v1357 = vpack.c.b16 %v1229, %v1229
        %v1358 = vpack.c.b16 %v1230, %v1230
        %v1359 = vpack.c.b16 %v1231, %v1231
        %v1360 = vpack.c.b16 %v1232, %v1232
        %v1361 = vpack.c.b16 %v1233, %v1233
        %v1362 = vpack.c.b16 %v1234, %v1234
        %v1363 = vpack.c.b16 %v1235, %v1235
        %v1364 = vpack.c.b16 %v1236, %v1236
        %v1365 = vpack.c.b16 %v1237, %v1237
        %v1366 = vpack.c.b16 %v1238, %v1238
        %v1367 = vpack.c.b16 %v1239, %v1239
        %v1368 = vpack.c.b16 %v1240, %v1240
        %v1369 = vpack.c.b16 %v1241, %v1241
        %v1370 = vpack.c.b16 %v1242, %v1242
        %v1371 = vpack.c.b16 %v1243, %v1243
        %v1372 = vpack.c.b16 %v1244, %v1244
        %v1373 = vpack.c.b16 %v1245, %v1245
        %v1374 = vpack.c.b16 %v1246, %v1246
        %v1375 = vpack.c.b16 %v1247, %v1247
        %v1376 = vpack.c.b16 %v1248, %v1248
        %v1377 = vpack.c.b16 %v1249, %v1249
        %v1378 = vpack.c.b16 %v1250, %v1250
        %v1379 = vpack.c.b16 %v1251, %v1251
        %v1380 = vpack.c.b16 %v1252, %v1252
        %v1381 = vpack.c.b16 %v1253, %v1253
        %v1382 = vpack.c.b16 %v1254, %v1254
        %v1383 = vpack.c.b16 %v1255, %v1255
        %v1384 = vpack.c.b16 %v1256, %v1256
        %v1385 = vpack.c.b16 %v1257, %v1257
        %v1386 = vpack.c.b16 %v1258, %v1258
        %v1387 = vpack.c.b16 %v1259, %v1259
        %v1388 = vpack.c.b16 %v1260, %v1260
        %v1389 = vpack.c.b16 %v1261, %v1261
        %v1390 = vpack.c.b16 %v1262, %v1262
        %v1391 = vpack.c.b16 %v1263, %v1263
        %v1392 = vpack.c.b16 %v1264, %v1264
        %v1393 = vpack.c.b16 %v1265, %v1265
        %v1394 = vpack.c.b16 %v1266, %v1266
        %v1395 = vpack.c.b16 %v1267, %v1267
        %v1396 = vpack.c.b16 %v1268, %v1268
        %v1397 = vpack.c.b16 %v1269, %v1269
        %v1398 = vpack.c.b16 %v1270, %v1270
        %v1399 = vpack.c.b16 %v1271, %v1271
        %v1400 = vpack.c.b16 %v1272, %v1272
        %v1401 = vpack.c.b16 %v1273, %v1273
        %v1402 = vpack.c.b16 %v1274, %v1274
        %v1403 = vpack.c.b16 %v1275, %v1275
        %v1404 = vpack.c.b16 %v1276, %v1276
        %v1405 = vpack.c.b16 %v1277, %v1277
        %v1406 = vpack.c.b16 %v1278, %v1278
        %v1407 = vpack.c.b16 %v1279, %v1279
        %v1408 = vpack.c.b16 %v1280, %v1280
        %v1409 = vpack.c.b16 %v1281, %v1281
        %v1410 = vpack.c.b16 %v1282, %v1282
        %v1411 = vpack.c.b16 %v1283, %v1283
        %v1412 = vpack.c.b16 %v1284, %v1284
        %v1413 = vpack.c.b16 %v1285, %v1285
        %v1414 = vpack.c.b16 %v1286, %v1286
        %v1415 = vpack.c.b16 %v1287, %v1287
        %v1416 = vpack.c.b16 %v1288, %v1288
        %v1417 = vpack.c.b16 %v1289, %v1289
        %v1418 = vpack.c.b16 %v1290, %v1290
        %v1419 = vpack.c.b16 %v1291, %v1291
        %v1420 = vpack.c.b16 %v1292, %v1292
        %v1421 = vpack.c.b16 %v1293, %v1293
        %v1422 = vpack.c.b16 %v1294, %v1294
        %v1423 = vpack.c.b16 %v1295, %v1295
        %v1424 = vpack.c.b16 %v1296, %v1296
        %v1425 = vpack.c.b16 %v1297, %v1297
        %v1426 = vpack.c.b16 %v1298, %v1298
        %v1427 = vpack.c.b16 %v1299, %v1299
        %v1428 = vpack.c.b16 %v1300, %v1300
        %v1429 = vpack.c.b16 %v1301, %v1301
        %v1430 = vpack.c.b16 %v1302, %v1302
        %v1431 = vpack.c.b16 %v1303, %v1303
        %v1432 = vpack.c.b16 %v1304, %v1304
        %v1433 = vpack.c.b16 %v1305, %v1305
        %v1434 = vpack.c.b16 %v1306, %v1306
        %v1435 = vpack.c.b16 %v1307, %v1307
        %v1436 = vpack.c.b16 %v1308, %v1308
        %v1437 = vpack.c.b16 %v1309, %v1309
        %v1438 = vpack.c.b16 %v1310, %v1310
        %v1439 = vpack.c.b16 %v1311, %v1311
        %v1440 = vpack.c.b16 %v1312, %v1312
        %v1441 = vpack.c.b16 %v1313, %v1313
        %v1442 = vpack.c.b16 %v1314, %v1314
        %v1443 = vpack.c.b16 %v1315, %v1315
        %v1444 = vpack.c.b16 %v1316, %v1316
        %v1445 = vpack.c.b16 %v1317, %v1317
        %v1446 = vpack.c.b16 %v1318, %v1318
        %v1447 = vpack.c.b16 %v1319, %v1319
        %v1448 = vpack.c.b16 %v1320, %v1320
        %v1449 = vpack.c.b16 %v1321, %v1321
        %v1450 = vpack.c.b16 %v1322, %v1322
        %v1451 = vpack.c.b16 %v1323, %v1323
        %v1452 = vpack.c.b16 %v1324, %v1324
        %v1453 = vpack.c.b16 %v1325, %v1325
        %v1454 = vpack.c.b16 %v1326, %v1326
        %v1455 = vpack.c.b16 %v1327, %v1327
        %v1456 = vpack.c.b16 %v1328, %v1328
        %v1457 = vpack.c.b16 %v1329, %v1329
        %v1458 = vpack.c.b16 %v1330, %v1330
        %v1459 = vpack.c.b16 %v1331, %v1331
        %v1460 = vpack.c.b16 %v1332, %v1332
        %v1461 = vpack.c.b16 %v1333, %v1333
        %v1462 = vpack.c.b16 %v1334, %v1334
        %v1463 = vpack.c.b16 %v1335, %v1335
        %v1464 = vpack.c.b16 %v1336, %v1336
        %v1465 = vpack.c.b16 %v1337, %v1337
        %1594 = vst [vmem:[%s164] sm:$0xf] %v1338
        %1595 = vst [vmem:[%s164 + $0x4] sm:$0xf] %v1339
        %1596 = vst [vmem:[%s164 + $0x8] sm:$0xf] %v1340
        %1597 = vst [vmem:[%s164 + $0xc] sm:$0xf] %v1341
        %1598 = vst [vmem:[%s164 + $0x10] sm:$0xf] %v1342
        %1599 = vst [vmem:[%s164 + $0x14] sm:$0xf] %v1343
        %1600 = vst [vmem:[%s164 + $0x18] sm:$0xf] %v1344
        %1601 = vst [vmem:[%s164 + $0x1c] sm:$0xf] %v1345
        %1602 = vst [vmem:[%s164 + $0x20] sm:$0xf] %v1346
        %1603 = vst [vmem:[%s164 + $0x24] sm:$0xf] %v1347
        %1604 = vst [vmem:[%s164 + $0x28] sm:$0xf] %v1348
        %1605 = vst [vmem:[%s164 + $0x2c] sm:$0xf] %v1349
        %1606 = vst [vmem:[%s164 + $0x30] sm:$0xf] %v1350
        %1607 = vst [vmem:[%s164 + $0x34] sm:$0xf] %v1351
        %1608 = vst [vmem:[%s164 + $0x38] sm:$0xf] %v1352
        %1609 = vst [vmem:[%s164 + $0x3c] sm:$0xf] %v1353
        %1610 = vst [vmem:[%s164 + $0x40] sm:$0xf] %v1354
        %1611 = vst [vmem:[%s164 + $0x44] sm:$0xf] %v1355
        %1612 = vst [vmem:[%s164 + $0x48] sm:$0xf] %v1356
        %1613 = vst [vmem:[%s164 + $0x4c] sm:$0xf] %v1357
        %1614 = vst [vmem:[%s164 + $0x50] sm:$0xf] %v1358
        %1615 = vst [vmem:[%s164 + $0x54] sm:$0xf] %v1359
        %1616 = vst [vmem:[%s164 + $0x58] sm:$0xf] %v1360
        %1617 = vst [vmem:[%s164 + $0x5c] sm:$0xf] %v1361
        %1618 = vst [vmem:[%s164 + $0x60] sm:$0xf] %v1362
        %1619 = vst [vmem:[%s164 + $0x64] sm:$0xf] %v1363
        %1620 = vst [vmem:[%s164 + $0x68] sm:$0xf] %v1364
        %1621 = vst [vmem:[%s164 + $0x6c] sm:$0xf] %v1365
        %1622 = vst [vmem:[%s164 + $0x70] sm:$0xf] %v1366
        %1623 = vst [vmem:[%s164 + $0x74] sm:$0xf] %v1367
        %1624 = vst [vmem:[%s164 + $0x78] sm:$0xf] %v1368
        %1625 = vst [vmem:[%s164 + $0x7c] sm:$0xf] %v1369
        %1626 = vst [vmem:[%s164 + $0x80] sm:$0xf] %v1370
        %1627 = vst [vmem:[%s164 + $0x84] sm:$0xf] %v1371
        %1628 = vst [vmem:[%s164 + $0x88] sm:$0xf] %v1372
        %1629 = vst [vmem:[%s164 + $0x8c] sm:$0xf] %v1373
        %1630 = vst [vmem:[%s164 + $0x90] sm:$0xf] %v1374
        %1631 = vst [vmem:[%s164 + $0x94] sm:$0xf] %v1375
        %1632 = vst [vmem:[%s164 + $0x98] sm:$0xf] %v1376
        %1633 = vst [vmem:[%s164 + $0x9c] sm:$0xf] %v1377
        %1634 = vst [vmem:[%s164 + $0xa0] sm:$0xf] %v1378
        %1635 = vst [vmem:[%s164 + $0xa4] sm:$0xf] %v1379
        %1636 = vst [vmem:[%s164 + $0xa8] sm:$0xf] %v1380
        %1637 = vst [vmem:[%s164 + $0xac] sm:$0xf] %v1381
        %1638 = vst [vmem:[%s164 + $0xb0] sm:$0xf] %v1382
        %1639 = vst [vmem:[%s164 + $0xb4] sm:$0xf] %v1383
        %1640 = vst [vmem:[%s164 + $0xb8] sm:$0xf] %v1384
        %1641 = vst [vmem:[%s164 + $0xbc] sm:$0xf] %v1385
        %1642 = vst [vmem:[%s164 + $0xc0] sm:$0xf] %v1386
        %1643 = vst [vmem:[%s164 + $0xc4] sm:$0xf] %v1387
        %1644 = vst [vmem:[%s164 + $0xc8] sm:$0xf] %v1388
        %1645 = vst [vmem:[%s164 + $0xcc] sm:$0xf] %v1389
        %1646 = vst [vmem:[%s164 + $0xd0] sm:$0xf] %v1390
        %1647 = vst [vmem:[%s164 + $0xd4] sm:$0xf] %v1391
        %1648 = vst [vmem:[%s164 + $0xd8] sm:$0xf] %v1392
        %1649 = vst [vmem:[%s164 + $0xdc] sm:$0xf] %v1393
        %1650 = vst [vmem:[%s164 + $0xe0] sm:$0xf] %v1394
        %1651 = vst [vmem:[%s164 + $0xe4] sm:$0xf] %v1395
        %1652 = vst [vmem:[%s164 + $0xe8] sm:$0xf] %v1396
        %1653 = vst [vmem:[%s164 + $0xec] sm:$0xf] %v1397
        %1654 = vst [vmem:[%s164 + $0xf0] sm:$0xf] %v1398
        %1655 = vst [vmem:[%s164 + $0xf4] sm:$0xf] %v1399
        %1656 = vst [vmem:[%s164 + $0xf8] sm:$0xf] %v1400
        %1657 = vst [vmem:[%s164 + $0xfc] sm:$0xf] %v1401
        %1658 = vst [vmem:[%s164 + $0x100] sm:$0xf] %v1402
        %1659 = vst [vmem:[%s164 + $0x104] sm:$0xf] %v1403
        %1660 = vst [vmem:[%s164 + $0x108] sm:$0xf] %v1404
        %1661 = vst [vmem:[%s164 + $0x10c] sm:$0xf] %v1405
        %1662 = vst [vmem:[%s164 + $0x110] sm:$0xf] %v1406
        %1663 = vst [vmem:[%s164 + $0x114] sm:$0xf] %v1407
        %1664 = vst [vmem:[%s164 + $0x118] sm:$0xf] %v1408
        %1665 = vst [vmem:[%s164 + $0x11c] sm:$0xf] %v1409
        %1666 = vst [vmem:[%s164 + $0x120] sm:$0xf] %v1410
        %1667 = vst [vmem:[%s164 + $0x124] sm:$0xf] %v1411
        %1668 = vst [vmem:[%s164 + $0x128] sm:$0xf] %v1412
        %1669 = vst [vmem:[%s164 + $0x12c] sm:$0xf] %v1413
        %1670 = vst [vmem:[%s164 + $0x130] sm:$0xf] %v1414
        %1671 = vst [vmem:[%s164 + $0x134] sm:$0xf] %v1415
        %1672 = vst [vmem:[%s164 + $0x138] sm:$0xf] %v1416
        %1673 = vst [vmem:[%s164 + $0x13c] sm:$0xf] %v1417
        %1674 = vst [vmem:[%s164 + $0x140] sm:$0xf] %v1418
        %1675 = vst [vmem:[%s164 + $0x144] sm:$0xf] %v1419
        %1676 = vst [vmem:[%s164 + $0x148] sm:$0xf] %v1420
        %1677 = vst [vmem:[%s164 + $0x14c] sm:$0xf] %v1421
        %1678 = vst [vmem:[%s164 + $0x150] sm:$0xf] %v1422
        %1679 = vst [vmem:[%s164 + $0x154] sm:$0xf] %v1423
        %1680 = vst [vmem:[%s164 + $0x158] sm:$0xf] %v1424
        %1681 = vst [vmem:[%s164 + $0x15c] sm:$0xf] %v1425
        %1682 = vst [vmem:[%s164 + $0x160] sm:$0xf] %v1426
        %1683 = vst [vmem:[%s164 + $0x164] sm:$0xf] %v1427
        %1684 = vst [vmem:[%s164 + $0x168] sm:$0xf] %v1428
        %1685 = vst [vmem:[%s164 + $0x16c] sm:$0xf] %v1429
        %1686 = vst [vmem:[%s164 + $0x170] sm:$0xf] %v1430
        %1687 = vst [vmem:[%s164 + $0x174] sm:$0xf] %v1431
        %1688 = vst [vmem:[%s164 + $0x178] sm:$0xf] %v1432
        %1689 = vst [vmem:[%s164 + $0x17c] sm:$0xf] %v1433
        %1690 = vst [vmem:[%s164 + $0x180] sm:$0xf] %v1434
        %1691 = vst [vmem:[%s164 + $0x184] sm:$0xf] %v1435
        %1692 = vst [vmem:[%s164 + $0x188] sm:$0xf] %v1436
        %1693 = vst [vmem:[%s164 + $0x18c] sm:$0xf] %v1437
        %1694 = vst [vmem:[%s164 + $0x190] sm:$0xf] %v1438
        %1695 = vst [vmem:[%s164 + $0x194] sm:$0xf] %v1439
        %1696 = vst [vmem:[%s164 + $0x198] sm:$0xf] %v1440
        %1697 = vst [vmem:[%s164 + $0x19c] sm:$0xf] %v1441
        %1698 = vst [vmem:[%s164 + $0x1a0] sm:$0xf] %v1442
        %1699 = vst [vmem:[%s164 + $0x1a4] sm:$0xf] %v1443
        %1700 = vst [vmem:[%s164 + $0x1a8] sm:$0xf] %v1444
        %1701 = vst [vmem:[%s164 + $0x1ac] sm:$0xf] %v1445
        %1702 = vst [vmem:[%s164 + $0x1b0] sm:$0xf] %v1446
        %1703 = vst [vmem:[%s164 + $0x1b4] sm:$0xf] %v1447
        %1704 = vst [vmem:[%s164 + $0x1b8] sm:$0xf] %v1448
        %1705 = vst [vmem:[%s164 + $0x1bc] sm:$0xf] %v1449
        %1706 = vst [vmem:[%s164 + $0x1c0] sm:$0xf] %v1450
        %1707 = vst [vmem:[%s164 + $0x1c4] sm:$0xf] %v1451
        %1708 = vst [vmem:[%s164 + $0x1c8] sm:$0xf] %v1452
        %1709 = vst [vmem:[%s164 + $0x1cc] sm:$0xf] %v1453
        %1710 = vst [vmem:[%s164 + $0x1d0] sm:$0xf] %v1454
        %1711 = vst [vmem:[%s164 + $0x1d4] sm:$0xf] %v1455
        %1712 = vst [vmem:[%s164 + $0x1d8] sm:$0xf] %v1456
        %1713 = vst [vmem:[%s164 + $0x1dc] sm:$0xf] %v1457
        %1714 = vst [vmem:[%s164 + $0x1e0] sm:$0xf] %v1458
        %1715 = vst [vmem:[%s164 + $0x1e4] sm:$0xf] %v1459
        %1716 = vst [vmem:[%s164 + $0x1e8] sm:$0xf] %v1460
        %1717 = vst [vmem:[%s164 + $0x1ec] sm:$0xf] %v1461
        %1718 = vst [vmem:[%s164 + $0x1f0] sm:$0xf] %v1462
        %1719 = vst [vmem:[%s164 + $0x1f4] sm:$0xf] %v1463
        %1720 = vst [vmem:[%s164 + $0x1f8] sm:$0xf] %v1464
        %1721 = vst [vmem:[%s164 + $0x1fc] sm:$0xf] %v1465
        %s1722 = sand.u32 %s93, 1
        %s1723 = scalar_lea.sflag [#allocation3], %s1722
        %s1724 = sand.u32 %s93, 1
        %s1725 = smul.addr %s1724, 512
        %s1726 = scalar_lea.vmem [#allocation2], %s1725
        // Predicated region
        $region33: #{conv_bn_lrelu.3} parent=31 // pred_check
          %p1727 = pneg %p103
        $region34: #{conv_bn_lrelu.3} parent=31 // pred_check_branch
          %1729 = sbr.rel (%p1727) target = $region36
        $region35: #{conv_bn_lrelu.3} parent=31 // pred_region
          %s1730 = smul.u32 128, %s17
          %s1732 = ssub.s32 8192, 8192
          %1733 = vsyncadd %s1723, %s1732
          %s1734 = smul.addr %s1730, 64
          %s1735 = scalar_lea.hbm %s3, %s1734
          %s1736 = sshll.u32 %s1726, 4
          %s1737 = int_to_ptr.vmem [resolvable:$true] %s1736
          %1742 = dma.vmem_to_hbm [thread:$0]  %s1737, 8192, %s1735, %s1723, 64, 64, 4
        $region36: #{conv_bn_lrelu.3} parent=31 // pred_fallthru
          _
      $region32: #{conv_bn_lrelu.3} parent=5 // pred_fallthru
        _
      %p1743 = scmp.le.s32.totalorder 2, %s12
      // Predicated region
      $region37: #{conv_bn_lrelu.3} parent=5 // pred_check
        %p1744 = pneg %p1743
      $region38: #{conv_bn_lrelu.3} parent=5 // pred_check_branch
        %1746 = sbr.rel (%p1744) target = $region40
      $region39: #{conv_bn_lrelu.3} parent=5 // pred_region
        %s1747 = ssub.s32 %s12, 2
        // Predicated region
        $region41: #{conv_bn_lrelu.3} parent=39 // pred_check
          %p1748 = pneg %p109
        $region42: #{conv_bn_lrelu.3} parent=39 // pred_check_branch
          %1750 = sbr.rel (%p1748) target = $region44
        $region43: #{conv_bn_lrelu.3} parent=39 // pred_region
          %s1751 = sand.u32 %s94, 1
          %s1752 = scalar_lea.sflag [#allocation3], %s1751
          %s1753 = sand.u32 %s94, 1
          %s1754 = smul.addr %s1753, 512
          %s1755 = scalar_lea.vmem [#allocation2], %s1754
          %1756 = dma.done %s1752, 8192
        $region44: #{conv_bn_lrelu.3} parent=39 // pred_fallthru
          _
      $region40: #{conv_bn_lrelu.3} parent=5 // pred_fallthru
        _
    $region6: #{conv_bn_lrelu.3} parent=1 // loop_footer
      %s16 = sadd.s32 1, %s12
    $region7: #{conv_bn_lrelu.3} parent=1 // loop_footer_branch
      %11 = sbr.rel target = $region3
    $region8: #{conv_bn_lrelu.3} parent=1 // loop_exit
      _
    %1757 = vsyncpa [#allocation3], 1
    %s1758 = scalar_lea.sflag [#allocation3], 1
    %1759 = vsyncpa %s1758, 1

</llo_original>
